<compile_context>
chip_gen: v7x
topology: tpu7x:2x2x1
jax: 0.10.0
libtpu: 0.0.40
codegen_flags: <defaults>
</compile_context>

<pallas_src>
import math
import numpy as np
import jax
import jax.numpy as jnp
from jax.experimental import pallas as pl
from jax.experimental.pallas import tpu as pltpu

# ---- small, module-consistent synthetic configuration -----------------------
B = 2              # batch
S = 8              # sequence length
C = 256            # embedding dim (stands in for emb_dim=2560 of BioMedLM)
H = 2              # attention heads
D = C // H         # head dim = 128 (same as real BioMedLM -> lane aligned)
FF = 4 * C         # MLP hidden dim
VOCAB = 32
PAD_ID = 0
SEP_ID = 1
NEG_INF = -1e9

# rows of the packed parameter-vector tensor (VEC_ROWS, FF) f32
VEC_ROWS = 16
(R_LN1G, R_LN1B, R_LN2G, R_LN2B, R_LNFG, R_LNFB,
 R_BO, R_B2, R_BQKV, R_B1) = range(10)


# ---------------------------------------------------------------------------
# Pallas kernel: whole batch, one fused transformer block, single invocation
# ---------------------------------------------------------------------------
def transformer_block_kernel(emb_ref, mask_ref, vec_ref, w_attn_ref,
                             w1_ref, w2_ref, hid_ref, cls_ref):
  x = emb_ref[...]                                 # (B*S, C) f32
  vec = vec_ref[...]                               # (VEC_ROWS, FF) f32
  bf16 = jnp.bfloat16

  def row(r, width):                               # (1, width) parameter row
    return vec[r:r + 1, :width]

  def ln(v, g, b):
    mu = jnp.mean(v, axis=-1, keepdims=True)
    var = jnp.mean(jnp.square(v - mu), axis=-1, keepdims=True)
    return (v - mu) * jax.lax.rsqrt(var + 1e-5) * g + b

  # --- self-attention sub-block (fused QKV projection) ---
  h1 = ln(x, row(R_LN1G, C), row(R_LN1B, C))
  w_qkv = w_attn_ref[:, :3 * C]                    # (C, 3C) bf16
  qkv = jnp.dot(h1.astype(bf16), w_qkv,
                preferred_element_type=jnp.float32) + row(R_BQKV, 3 * C)

  neg_bias = (1.0 - mask_ref[...]) * NEG_INF       # (B, S) key-padding bias
  rq = jax.lax.broadcasted_iota(jnp.int32, (S, S), 0)
  rk = jax.lax.broadcasted_iota(jnp.int32, (S, S), 1)
  causal = rq >= rk
  scale = 1.0 / math.sqrt(D)

  attn_blocks = []                                 # per-batch (S, C) outputs
  cls_rows = []                                    # per-batch (1, S) cls rows
  for b in range(B):                               # static loop, B = 2
    rs = slice(b * S, (b + 1) * S)                 # sublane-aligned rows
    bias_b = neg_bias[b:b + 1, :]                  # (1, S)
    out_b = jnp.zeros((S, C), jnp.float32)
    cls_b = jnp.zeros((1, S), jnp.float32)
    for hh in range(H):                            # static loop, H = 2
      q = qkv[rs, hh * D:(hh + 1) * D]             # (S, D) lane-aligned
      k = qkv[rs, C + hh * D:C + (hh + 1) * D]
      v = qkv[rs, 2 * C + hh * D:2 * C + (hh + 1) * D]
      s = jnp.dot(q, k.T, preferred_element_type=jnp.float32) * scale
      s = s + bias_b
      s = jnp.where(causal, s, NEG_INF)
      s = s - jnp.max(s, axis=-1, keepdims=True)
      p = jnp.exp(s)
      p = p * pl.reciprocal(jnp.sum(p, axis=-1, keepdims=True), approx=True)
      cls_b = cls_b + p[0:1, :]                    # query-0 attention row
      ctx = jnp.dot(p, v, preferred_element_type=jnp.float32)   # (S, D)
      wo_h = w_attn_ref[hh * D:(hh + 1) * D, 3 * C:]            # (D, C) bf16
      out_b = out_b + jnp.dot(ctx.astype(bf16), wo_h,
                              preferred_element_type=jnp.float32)
    attn_blocks.append(out_b)
    cls_rows.append(cls_b * (1.0 / H))             # mean over heads

  cls_ref[...] = jnp.concatenate(cls_rows, axis=0)               # (B, S)
  x = x + jnp.concatenate(attn_blocks, axis=0) + row(R_BO, C)    # residual

  # --- MLP sub-block ---
  h2 = ln(x, row(R_LN2G, C), row(R_LN2B, C))
  ff = jnp.dot(h2.astype(bf16), w1_ref[...],
               preferred_element_type=jnp.float32) + row(R_B1, FF)
  ff = jax.nn.gelu(ff, approximate=True)
  ff = jnp.dot(ff.astype(bf16), w2_ref[...],
               preferred_element_type=jnp.float32) + row(R_B2, C)
  x = x + ff

  # final layernorm (GPT-2 ln_f) -> "logits" since lm_head = Identity
  hid_ref[...] = ln(x, row(R_LNFG, C), row(R_LNFB, C))


def llm_block_pallas(emb, attn_mask, p):
  """Run the fused transformer block via one grid-less pallas_call."""
  emb_slab = emb.reshape(B * S, C).astype(jnp.float32)
  vmem = pl.BlockSpec(memory_space=pltpu.MemorySpace.VMEM)
  hid, cls = pl.pallas_call(
      transformer_block_kernel,
      out_shape=(jax.ShapeDtypeStruct((B * S, C), jnp.float32),
                 jax.ShapeDtypeStruct((B, S), jnp.float32)),
      in_specs=[vmem] * 6,
      out_specs=(vmem, vmem),
  )(emb_slab, attn_mask.astype(jnp.float32),
    p["vecs"], p["w_attn"], p["w1"], p["w2"])
  return hid.reshape(B, S, C), cls


# ---------------------------------------------------------------------------
# Pure-JAX reference of the same block (same packed bf16 params)
# ---------------------------------------------------------------------------
def llm_block_reference(emb, attn_mask, p):
  vec = p["vecs"]
  ln1_g, ln1_b = vec[R_LN1G, :C], vec[R_LN1B, :C]
  ln2_g, ln2_b = vec[R_LN2G, :C], vec[R_LN2B, :C]
  lnf_g, lnf_b = vec[R_LNFG, :C], vec[R_LNFB, :C]
  bo, b2 = vec[R_BO, :C], vec[R_B2, :C]
  b_qkv, b1 = vec[R_BQKV, :3 * C], vec[R_B1, :FF]
  w_attn = p["w_attn"]
  wq, wk = w_attn[:, :C], w_attn[:, C:2 * C]
  wv, wo = w_attn[:, 2 * C:3 * C], w_attn[:, 3 * C:]
  bf16 = jnp.bfloat16

  def ln(v, g, b):
    mu = jnp.mean(v, axis=-1, keepdims=True)
    var = jnp.mean(jnp.square(v - mu), axis=-1, keepdims=True)
    return (v - mu) * jax.lax.rsqrt(var + 1e-5) * g + b

  x = emb.astype(jnp.float32)
  h = ln(x, ln1_g, ln1_b).astype(bf16)
  q = jnp.einsum("bsc,cd->bsd", h, wq, preferred_element_type=jnp.float32) + b_qkv[:C]
  k = jnp.einsum("bsc,cd->bsd", h, wk, preferred_element_type=jnp.float32) + b_qkv[C:2 * C]
  v = jnp.einsum("bsc,cd->bsd", h, wv, preferred_element_type=jnp.float32) + b_qkv[2 * C:]
  q = q.reshape(B, S, H, D).transpose(0, 2, 1, 3)
  k = k.reshape(B, S, H, D).transpose(0, 2, 1, 3)
  v = v.reshape(B, S, H, D).transpose(0, 2, 1, 3)
  scores = jnp.einsum("bhqd,bhkd->bhqk", q, k) / math.sqrt(D)
  scores = scores + ((1.0 - attn_mask) * NEG_INF)[:, None, None, :]
  causal = jnp.tril(jnp.ones((S, S), dtype=bool))
  scores = jnp.where(causal[None, None], scores, NEG_INF)
  scores = scores - jnp.max(scores, axis=-1, keepdims=True)
  pr = jnp.exp(scores)
  pr = pr / jnp.sum(pr, axis=-1, keepdims=True)                 # (B,H,S,S)
  ctx = jnp.einsum("bhqk,bhkd->bhqd", pr, v)
  ctx = ctx.transpose(0, 2, 1, 3).reshape(B, S, C).astype(bf16)
  attn_out = jnp.einsum("bsc,cd->bsd", ctx, wo,
                        preferred_element_type=jnp.float32) + bo
  x = x + attn_out
  h2 = ln(x, ln2_g, ln2_b).astype(bf16)
  ff = jnp.einsum("bsc,cf->bsf", h2, p["w1"],
                  preferred_element_type=jnp.float32) + b1
  ff = jax.nn.gelu(ff, approximate=True).astype(bf16)
  ff = jnp.einsum("bsf,fc->bsc", ff, p["w2"],
                  preferred_element_type=jnp.float32) + b2
  x = x + ff
  hidden = ln(x, lnf_g, lnf_b)
  cls = jnp.mean(pr[:, :, 0, :], axis=1)                        # (B, S)
  return hidden, cls


# ---------------------------------------------------------------------------
# CausalLMEncoder.forward equivalent
# ---------------------------------------------------------------------------
def causal_lm_encoder_forward(ids, attn_mask, params, block_fn=llm_block_pallas):
  Bz, Sl = ids.shape
  # embedding lookup (glue) -- stands in for the frozen LLM's wte/wpe
  emb = params["wte"][ids] + params["wpe"][jnp.arange(Sl)][None, :, :]

  hidden, cls_attn = block_fn(emb, attn_mask, params)

  target_dtype = jnp.float32                      # self.model.dtype for 'gpt'
  # outputs.logits.unsqueeze(1)  -> (B, 1, S, C)
  all_feat = hidden[:, None, :, :].astype(target_dtype)
  # outputs.attentions[-1][:, :, 0, 1:].mean(dim=1)  -> (B, S-1)
  last_atten_pt = cls_attn.astype(target_dtype)[:, 1:]

  # find_last_word_token: the PyTorch loop decrements once per pad token found
  # (no break), i.e. index = -num_pads (0 if no pads).
  n_pad = jnp.sum(ids == PAD_ID, axis=1)
  last_idx = (Sl - n_pad) % Sl
  report_feat = all_feat[jnp.arange(Bz), 0, last_idx]           # (B, C) after [:, 0]
  word_feat = all_feat[:, 0]                                    # (B, S, C)

  # find_all_sep_tokens: ragged, data-dependent gather returning a Python list
  # exactly like the PyTorch code (done host-side; forces a device sync).
  ids_np = np.asarray(ids)
  hid_np = np.asarray(word_feat)
  sents_feat = []
  for i in range(Bz):
    sep_idx = np.argwhere(ids_np[i] == SEP_ID).squeeze()
    sents_feat.append(jnp.asarray(hid_np[i][sep_idx])[None])    # (1, n_sep, C) or (1, C)

  return report_feat, word_feat, last_atten_pt, sents_feat


# ---------------------------------------------------------------------------
# Deterministic parameter init (packed layout)
# ---------------------------------------------------------------------------
def init_params(key):
  ks = jax.random.split(key, 20)
  sc = 0.05
  f32 = jnp.float32
  wq = jax.random.normal(ks[0], (C, C), f32) * sc
  wk = jax.random.normal(ks[1], (C, C), f32) * sc
  wv = jax.random.normal(ks[2], (C, C), f32) * sc
  wo = jax.random.normal(ks[3], (C, C), f32) * sc
  w1 = jax.random.normal(ks[4], (C, FF), f32) * sc
  w2 = jax.random.normal(ks[5], (FF, C), f32) * sc
  bq = jax.random.normal(ks[6], (C,), f32) * 0.02
  bk = jax.random.normal(ks[7], (C,), f32) * 0.02
  bv = jax.random.normal(ks[8], (C,), f32) * 0.02
  bo = jax.random.normal(ks[9], (C,), f32) * 0.02
  b1 = jax.random.normal(ks[10], (FF,), f32) * 0.02
  b2 = jax.random.normal(ks[11], (C,), f32) * 0.02
  ln1_g = 1.0 + 0.05 * jax.random.normal(ks[12], (C,), f32)
  ln1_b = 0.02 * jax.random.normal(ks[13], (C,), f32)
  ln2_g = 1.0 + 0.05 * jax.random.normal(ks[14], (C,), f32)
  ln2_b = 0.02 * jax.random.normal(ks[15], (C,), f32)
  lnf_g = 1.0 + 0.05 * jax.random.normal(ks[16], (C,), f32)
  lnf_b = 0.02 * jax.random.normal(ks[17], (C,), f32)

  # fused bf16 attention weights [wq | wk | wv | wo]  -> (C, 4C)
  w_attn = jnp.concatenate([wq, wk, wv, wo], axis=1).astype(jnp.bfloat16)

  # packed small parameter vectors -> one (VEC_ROWS, FF) f32 tensor
  vecs = jnp.zeros((VEC_ROWS, FF), f32)
  vecs = vecs.at[R_LN1G, :C].set(ln1_g)
  vecs = vecs.at[R_LN1B, :C].set(ln1_b)
  vecs = vecs.at[R_LN2G, :C].set(ln2_g)
  vecs = vecs.at[R_LN2B, :C].set(ln2_b)
  vecs = vecs.at[R_LNFG, :C].set(lnf_g)
  vecs = vecs.at[R_LNFB, :C].set(lnf_b)
  vecs = vecs.at[R_BO, :C].set(bo)
  vecs = vecs.at[R_B2, :C].set(b2)
  vecs = vecs.at[R_BQKV, :3 * C].set(jnp.concatenate([bq, bk, bv]))
  vecs = vecs.at[R_B1, :FF].set(b1)

  return {
      "wte": jax.random.normal(ks[18], (VOCAB, C), f32) * sc,
      "wpe": jax.random.normal(ks[19], (S, C), f32) * sc,
      "w_attn": w_attn,
      "w1": w1.astype(jnp.bfloat16),
      "w2": w2.astype(jnp.bfloat16),
      "vecs": vecs,
  }


if __name__ == "__main__":
  key = jax.random.PRNGKey(0)
  kp, kid = jax.random.split(key)
  params = init_params(kp)

  # deterministic ids: insert SEP tokens and trailing PAD tokens
  ids = jax.random.randint(kid, (B, S), 2, VOCAB, dtype=jnp.int32)
  ids = ids.at[0, 3].set(SEP_ID).at[0, 6].set(PAD_ID).at[0, 7].set(PAD_ID)
  ids = ids.at[1, 2].set(SEP_ID).at[1, 7].set(SEP_ID)
  attn_mask = (ids != PAD_ID).astype(jnp.float32)

  # Pallas-kernel forward
  report_feat, word_feat, last_atten_pt, sents_feat = causal_lm_encoder_forward(
      ids, attn_mask, params, block_fn=llm_block_pallas)

  # pure-JAX reference forward (same math, same bf16 params) for sanity check
  r_report, r_word, r_attn, _ = causal_lm_encoder_forward(
      ids, attn_mask, params, block_fn=llm_block_reference)

  jax.block_until_ready(report_feat)
  jax.block_until_ready(word_feat)
  jax.block_until_ready(last_atten_pt)
  for sf in sents_feat:
    jax.block_until_ready(sf)

  assert report_feat.shape == (B, C)
  assert word_feat.shape == (B, S, C)
  assert last_atten_pt.shape == (B, S - 1)

  np.testing.assert_allclose(np.asarray(report_feat), np.asarray(r_report),
                             rtol=2e-2, atol=2e-2)
  np.testing.assert_allclose(np.asarray(word_feat), np.asarray(r_word),
                             rtol=2e-2, atol=2e-2)
  np.testing.assert_allclose(np.asarray(last_atten_pt), np.asarray(r_attn),
                             rtol=2e-2, atol=2e-2)

  # TODO(synk): `sents` (id -> word decode) needs the HF tokenizer vocab; it is
  # computed but never returned by the PyTorch forward, so it is omitted.
  print("KERNEL_OK")
</pallas_src>

<mosaic_0001>
module attributes {stable_mosaic.version = 11 : i64} {
  func.func @transformer_block_kernel(%arg0: memref<16x256xf32, #tpu.memory_space<vmem>>, %arg1: memref<2x8xf32, #tpu.memory_space<vmem>>, %arg2: memref<16x1024xf32, #tpu.memory_space<vmem>>, %arg3: memref<256x1024xbf16, #tpu.memory_space<vmem>>, %arg4: memref<256x1024xbf16, #tpu.memory_space<vmem>>, %arg5: memref<1024x256xbf16, #tpu.memory_space<vmem>>, %arg6: memref<16x256xf32, #tpu.memory_space<vmem>>, %arg7: memref<2x8xf32, #tpu.memory_space<vmem>>) attributes {dimension_semantics = [], scalar_prefetch = 0 : i64, scratch_operands = 0 : i64, tpu.core_type = #tpu.core_type<tc>} {
    %c0 = arith.constant 0 : index
    %c0_0 = arith.constant 0 : index
    %0 = vector.load %arg0[%c0, %c0_0] : memref<16x256xf32, #tpu.memory_space<vmem>>, vector<16x256xf32>
    %c0_1 = arith.constant 0 : index
    %c0_2 = arith.constant 0 : index
    %1 = vector.load %arg2[%c0_1, %c0_2] : memref<16x1024xf32, #tpu.memory_space<vmem>>, vector<16x1024xf32>
    %2 = vector.extract_strided_slice %1 {offsets = [0, 0], sizes = [1, 256], strides = [1, 1]} : vector<16x1024xf32> to vector<1x256xf32>
    %3 = vector.extract_strided_slice %1 {offsets = [1, 0], sizes = [1, 256], strides = [1, 1]} : vector<16x1024xf32> to vector<1x256xf32>
    %cst = arith.constant dense<0.000000e+00> : vector<16xf32>
    %4 = vector.multi_reduction <add>, %0, %cst [1] : vector<16x256xf32> to vector<16xf32>
    %5 = vector.shape_cast %4 : vector<16xf32> to vector<16x1xf32>
    %cst_3 = arith.constant 2.560000e+02 : f32
    %6 = vector.broadcast %cst_3 : f32 to vector<16x1xf32>
    %7 = arith.divf %5, %6 : vector<16x1xf32>
    %8 = vector.broadcast %7 : vector<16x1xf32> to vector<16x256xf32>
    %9 = arith.subf %0, %8 : vector<16x256xf32>
    %10 = arith.mulf %9, %9 : vector<16x256xf32>
    %cst_4 = arith.constant dense<0.000000e+00> : vector<16xf32>
    %11 = vector.multi_reduction <add>, %10, %cst_4 [1] : vector<16x256xf32> to vector<16xf32>
    %12 = vector.shape_cast %11 : vector<16xf32> to vector<16x1xf32>
    %cst_5 = arith.constant 2.560000e+02 : f32
    %13 = vector.broadcast %cst_5 : f32 to vector<16x1xf32>
    %14 = arith.divf %12, %13 : vector<16x1xf32>
    %15 = vector.broadcast %7 : vector<16x1xf32> to vector<16x256xf32>
    %16 = arith.subf %0, %15 : vector<16x256xf32>
    %cst_6 = arith.constant 9.99999974E-6 : f32
    %17 = vector.broadcast %cst_6 : f32 to vector<16x1xf32>
    %18 = arith.addf %14, %17 : vector<16x1xf32>
    %19 = math.rsqrt %18 : vector<16x1xf32>
    %20 = vector.broadcast %19 : vector<16x1xf32> to vector<16x256xf32>
    %21 = arith.mulf %16, %20 : vector<16x256xf32>
    %22 = vector.broadcast %2 : vector<1x256xf32> to vector<16x256xf32>
    %23 = arith.mulf %21, %22 : vector<16x256xf32>
    %24 = vector.broadcast %3 : vector<1x256xf32> to vector<16x256xf32>
    %25 = arith.addf %23, %24 : vector<16x256xf32>
    %c0_7 = arith.constant 0 : index
    %c0_8 = arith.constant 0 : index
    %26 = vector.load %arg3[%c0_7, %c0_8] : memref<256x1024xbf16, #tpu.memory_space<vmem>>, vector<256x768xbf16>
    %27 = arith.truncf %25 : vector<16x256xf32> to vector<16x256xbf16>
    %cst_9 = arith.constant dense<0.000000e+00> : vector<16x768xf32>
    %28 = tpu.matmul %27, %26, %cst_9 {dimension_numbers = #tpu.dot_dimension_numbers<[1], [0], [0], [1], [0, 0, 1, 1], [], []>} : vector<16x256xbf16>, vector<256x768xbf16>, vector<16x768xf32> -> vector<16x768xf32>
    %29 = vector.extract_strided_slice %1 {offsets = [8, 0], sizes = [1, 768], strides = [1, 1]} : vector<16x1024xf32> to vector<1x768xf32>
    %30 = vector.broadcast %29 : vector<1x768xf32> to vector<16x768xf32>
    %31 = arith.addf %28, %30 : vector<16x768xf32>
    %c0_10 = arith.constant 0 : index
    %c0_11 = arith.constant 0 : index
    %32 = vector.load %arg1[%c0_10, %c0_11] : memref<2x8xf32, #tpu.memory_space<vmem>>, vector<2x8xf32>
    %cst_12 = arith.constant 1.000000e+00 : f32
    %33 = vector.broadcast %cst_12 : f32 to vector<2x8xf32>
    %34 = arith.subf %33, %32 : vector<2x8xf32>
    %cst_13 = arith.constant -1.000000e+09 : f32
    %35 = vector.broadcast %cst_13 : f32 to vector<2x8xf32>
    %36 = arith.mulf %34, %35 : vector<2x8xf32>
    %37 = tpu.iota {dimensions = array<i32: 0>} : vector<8x8xi32>
    %38 = tpu.iota {dimensions = array<i32: 1>} : vector<8x8xi32>
    %39 = arith.cmpi sge, %37, %38 : vector<8x8xi32>
    %40 = vector.extract_strided_slice %36 {offsets = [0, 0], sizes = [1, 8], strides = [1, 1]} : vector<2x8xf32> to vector<1x8xf32>
    %cst_14 = arith.constant 0.000000e+00 : f32
    %41 = vector.broadcast %cst_14 : f32 to vector<8x256xf32>
    %cst_15 = arith.constant 0.000000e+00 : f32
    %42 = vector.broadcast %cst_15 : f32 to vector<1x8xf32>
    %43 = vector.extract_strided_slice %31 {offsets = [0, 0], sizes = [8, 128], strides = [1, 1]} : vector<16x768xf32> to vector<8x128xf32>
    %44 = vector.extract_strided_slice %31 {offsets = [0, 256], sizes = [8, 128], strides = [1, 1]} : vector<16x768xf32> to vector<8x128xf32>
    %45 = vector.extract_strided_slice %31 {offsets = [0, 512], sizes = [8, 128], strides = [1, 1]} : vector<16x768xf32> to vector<8x128xf32>
    %46 = tpu.transpose %44, [1, 0] : vector<8x128xf32> -> vector<128x8xf32>
    %cst_16 = arith.constant dense<0.000000e+00> : vector<8x8xf32>
    %47 = tpu.matmul %43, %46, %cst_16 {dimension_numbers = #tpu.dot_dimension_numbers<[1], [0], [0], [1], [0, 0, 1, 1], [], []>} : vector<8x128xf32>, vector<128x8xf32>, vector<8x8xf32> -> vector<8x8xf32>
    %cst_17 = arith.constant 0.0883883461 : f32
    %48 = vector.broadcast %cst_17 : f32 to vector<8x8xf32>
    %49 = arith.mulf %47, %48 : vector<8x8xf32>
    %50 = vector.broadcast %40 : vector<1x8xf32> to vector<8x8xf32>
    %51 = arith.addf %49, %50 : vector<8x8xf32>
    %cst_18 = arith.constant -1.000000e+09 : f32
    %52 = vector.broadcast %cst_18 : f32 to vector<8x8xf32>
    %53 = arith.select %39, %51, %52 : vector<8x8xi1>, vector<8x8xf32>
    %cst_19 = arith.constant dense<0xFF800000> : vector<8xf32>
    %54 = vector.multi_reduction <maximumf>, %53, %cst_19 [1] : vector<8x8xf32> to vector<8xf32>
    %55 = vector.shape_cast %54 : vector<8xf32> to vector<8x1xf32>
    %56 = vector.broadcast %55 : vector<8x1xf32> to vector<8x8xf32>
    %57 = arith.subf %53, %56 : vector<8x8xf32>
    %58 = math.exp %57 : vector<8x8xf32>
    %cst_20 = arith.constant dense<0.000000e+00> : vector<8xf32>
    %59 = vector.multi_reduction <add>, %58, %cst_20 [1] : vector<8x8xf32> to vector<8xf32>
    %60 = vector.shape_cast %59 : vector<8xf32> to vector<8x1xf32>
    %61 = tpu.reciprocal %60 {approx = true} : vector<8x1xf32> -> vector<8x1xf32>
    %62 = vector.broadcast %61 : vector<8x1xf32> to vector<8x8xf32>
    %63 = arith.mulf %58, %62 : vector<8x8xf32>
    %64 = vector.extract_strided_slice %63 {offsets = [0, 0], sizes = [1, 8], strides = [1, 1]} : vector<8x8xf32> to vector<1x8xf32>
    %65 = arith.addf %42, %64 : vector<1x8xf32>
    %cst_21 = arith.constant dense<0.000000e+00> : vector<8x128xf32>
    %66 = tpu.matmul %63, %45, %cst_21 {dimension_numbers = #tpu.dot_dimension_numbers<[1], [0], [0], [1], [0, 0, 1, 1], [], []>} : vector<8x8xf32>, vector<8x128xf32>, vector<8x128xf32> -> vector<8x128xf32>
    %c0_22 = arith.constant 0 : index
    %c768 = arith.constant 768 : index
    %67 = vector.load %arg3[%c0_22, %c768] : memref<256x1024xbf16, #tpu.memory_space<vmem>>, vector<128x256xbf16>
    %68 = arith.truncf %66 : vector<8x128xf32> to vector<8x128xbf16>
    %cst_23 = arith.constant dense<0.000000e+00> : vector<8x256xf32>
    %69 = tpu.matmul %68, %67, %cst_23 {dimension_numbers = #tpu.dot_dimension_numbers<[1], [0], [0], [1], [0, 0, 1, 1], [], []>} : vector<8x128xbf16>, vector<128x256xbf16>, vector<8x256xf32> -> vector<8x256xf32>
    %70 = arith.addf %41, %69 : vector<8x256xf32>
    %71 = vector.extract_strided_slice %31 {offsets = [0, 128], sizes = [8, 128], strides = [1, 1]} : vector<16x768xf32> to vector<8x128xf32>
    %72 = vector.extract_strided_slice %31 {offsets = [0, 384], sizes = [8, 128], strides = [1, 1]} : vector<16x768xf32> to vector<8x128xf32>
    %73 = vector.extract_strided_slice %31 {offsets = [0, 640], sizes = [8, 128], strides = [1, 1]} : vector<16x768xf32> to vector<8x128xf32>
    %74 = tpu.transpose %72, [1, 0] : vector<8x128xf32> -> vector<128x8xf32>
    %cst_24 = arith.constant dense<0.000000e+00> : vector<8x8xf32>
    %75 = tpu.matmul %71, %74, %cst_24 {dimension_numbers = #tpu.dot_dimension_numbers<[1], [0], [0], [1], [0, 0, 1, 1], [], []>} : vector<8x128xf32>, vector<128x8xf32>, vector<8x8xf32> -> vector<8x8xf32>
    %cst_25 = arith.constant 0.0883883461 : f32
    %76 = vector.broadcast %cst_25 : f32 to vector<8x8xf32>
    %77 = arith.mulf %75, %76 : vector<8x8xf32>
    %78 = vector.broadcast %40 : vector<1x8xf32> to vector<8x8xf32>
    %79 = arith.addf %77, %78 : vector<8x8xf32>
    %cst_26 = arith.constant -1.000000e+09 : f32
    %80 = vector.broadcast %cst_26 : f32 to vector<8x8xf32>
    %81 = arith.select %39, %79, %80 : vector<8x8xi1>, vector<8x8xf32>
    %cst_27 = arith.constant dense<0xFF800000> : vector<8xf32>
    %82 = vector.multi_reduction <maximumf>, %81, %cst_27 [1] : vector<8x8xf32> to vector<8xf32>
    %83 = vector.shape_cast %82 : vector<8xf32> to vector<8x1xf32>
    %84 = vector.broadcast %83 : vector<8x1xf32> to vector<8x8xf32>
    %85 = arith.subf %81, %84 : vector<8x8xf32>
    %86 = math.exp %85 : vector<8x8xf32>
    %cst_28 = arith.constant dense<0.000000e+00> : vector<8xf32>
    %87 = vector.multi_reduction <add>, %86, %cst_28 [1] : vector<8x8xf32> to vector<8xf32>
    %88 = vector.shape_cast %87 : vector<8xf32> to vector<8x1xf32>
    %89 = tpu.reciprocal %88 {approx = true} : vector<8x1xf32> -> vector<8x1xf32>
    %90 = vector.broadcast %89 : vector<8x1xf32> to vector<8x8xf32>
    %91 = arith.mulf %86, %90 : vector<8x8xf32>
    %92 = vector.extract_strided_slice %91 {offsets = [0, 0], sizes = [1, 8], strides = [1, 1]} : vector<8x8xf32> to vector<1x8xf32>
    %93 = arith.addf %65, %92 : vector<1x8xf32>
    %cst_29 = arith.constant dense<0.000000e+00> : vector<8x128xf32>
    %94 = tpu.matmul %91, %73, %cst_29 {dimension_numbers = #tpu.dot_dimension_numbers<[1], [0], [0], [1], [0, 0, 1, 1], [], []>} : vector<8x8xf32>, vector<8x128xf32>, vector<8x128xf32> -> vector<8x128xf32>
    %c128 = arith.constant 128 : index
    %c768_30 = arith.constant 768 : index
    %95 = vector.load %arg3[%c128, %c768_30] : memref<256x1024xbf16, #tpu.memory_space<vmem>>, vector<128x256xbf16>
    %96 = arith.truncf %94 : vector<8x128xf32> to vector<8x128xbf16>
    %cst_31 = arith.constant dense<0.000000e+00> : vector<8x256xf32>
    %97 = tpu.matmul %96, %95, %cst_31 {dimension_numbers = #tpu.dot_dimension_numbers<[1], [0], [0], [1], [0, 0, 1, 1], [], []>} : vector<8x128xbf16>, vector<128x256xbf16>, vector<8x256xf32> -> vector<8x256xf32>
    %98 = arith.addf %70, %97 : vector<8x256xf32>
    %cst_32 = arith.constant 5.000000e-01 : f32
    %99 = vector.broadcast %cst_32 : f32 to vector<1x8xf32>
    %100 = arith.mulf %93, %99 : vector<1x8xf32>
    %101 = vector.extract_strided_slice %36 {offsets = [1, 0], sizes = [1, 8], strides = [1, 1]} : vector<2x8xf32> to vector<1x8xf32>
    %cst_33 = arith.constant 0.000000e+00 : f32
    %102 = vector.broadcast %cst_33 : f32 to vector<8x256xf32>
    %cst_34 = arith.constant 0.000000e+00 : f32
    %103 = vector.broadcast %cst_34 : f32 to vector<1x8xf32>
    %104 = vector.extract_strided_slice %31 {offsets = [8, 0], sizes = [8, 128], strides = [1, 1]} : vector<16x768xf32> to vector<8x128xf32>
    %105 = vector.extract_strided_slice %31 {offsets = [8, 256], sizes = [8, 128], strides = [1, 1]} : vector<16x768xf32> to vector<8x128xf32>
    %106 = vector.extract_strided_slice %31 {offsets = [8, 512], sizes = [8, 128], strides = [1, 1]} : vector<16x768xf32> to vector<8x128xf32>
    %107 = tpu.transpose %105, [1, 0] : vector<8x128xf32> -> vector<128x8xf32>
    %cst_35 = arith.constant dense<0.000000e+00> : vector<8x8xf32>
    %108 = tpu.matmul %104, %107, %cst_35 {dimension_numbers = #tpu.dot_dimension_numbers<[1], [0], [0], [1], [0, 0, 1, 1], [], []>} : vector<8x128xf32>, vector<128x8xf32>, vector<8x8xf32> -> vector<8x8xf32>
    %cst_36 = arith.constant 0.0883883461 : f32
    %109 = vector.broadcast %cst_36 : f32 to vector<8x8xf32>
    %110 = arith.mulf %108, %109 : vector<8x8xf32>
    %111 = vector.broadcast %101 : vector<1x8xf32> to vector<8x8xf32>
    %112 = arith.addf %110, %111 : vector<8x8xf32>
    %cst_37 = arith.constant -1.000000e+09 : f32
    %113 = vector.broadcast %cst_37 : f32 to vector<8x8xf32>
    %114 = arith.select %39, %112, %113 : vector<8x8xi1>, vector<8x8xf32>
    %cst_38 = arith.constant dense<0xFF800000> : vector<8xf32>
    %115 = vector.multi_reduction <maximumf>, %114, %cst_38 [1] : vector<8x8xf32> to vector<8xf32>
    %116 = vector.shape_cast %115 : vector<8xf32> to vector<8x1xf32>
    %117 = vector.broadcast %116 : vector<8x1xf32> to vector<8x8xf32>
    %118 = arith.subf %114, %117 : vector<8x8xf32>
    %119 = math.exp %118 : vector<8x8xf32>
    %cst_39 = arith.constant dense<0.000000e+00> : vector<8xf32>
    %120 = vector.multi_reduction <add>, %119, %cst_39 [1] : vector<8x8xf32> to vector<8xf32>
    %121 = vector.shape_cast %120 : vector<8xf32> to vector<8x1xf32>
    %122 = tpu.reciprocal %121 {approx = true} : vector<8x1xf32> -> vector<8x1xf32>
    %123 = vector.broadcast %122 : vector<8x1xf32> to vector<8x8xf32>
    %124 = arith.mulf %119, %123 : vector<8x8xf32>
    %125 = vector.extract_strided_slice %124 {offsets = [0, 0], sizes = [1, 8], strides = [1, 1]} : vector<8x8xf32> to vector<1x8xf32>
    %126 = arith.addf %103, %125 : vector<1x8xf32>
    %cst_40 = arith.constant dense<0.000000e+00> : vector<8x128xf32>
    %127 = tpu.matmul %124, %106, %cst_40 {dimension_numbers = #tpu.dot_dimension_numbers<[1], [0], [0], [1], [0, 0, 1, 1], [], []>} : vector<8x8xf32>, vector<8x128xf32>, vector<8x128xf32> -> vector<8x128xf32>
    %c0_41 = arith.constant 0 : index
    %c768_42 = arith.constant 768 : index
    %128 = vector.load %arg3[%c0_41, %c768_42] : memref<256x1024xbf16, #tpu.memory_space<vmem>>, vector<128x256xbf16>
    %129 = arith.truncf %127 : vector<8x128xf32> to vector<8x128xbf16>
    %cst_43 = arith.constant dense<0.000000e+00> : vector<8x256xf32>
    %130 = tpu.matmul %129, %128, %cst_43 {dimension_numbers = #tpu.dot_dimension_numbers<[1], [0], [0], [1], [0, 0, 1, 1], [], []>} : vector<8x128xbf16>, vector<128x256xbf16>, vector<8x256xf32> -> vector<8x256xf32>
    %131 = arith.addf %102, %130 : vector<8x256xf32>
    %132 = vector.extract_strided_slice %31 {offsets = [8, 128], sizes = [8, 128], strides = [1, 1]} : vector<16x768xf32> to vector<8x128xf32>
    %133 = vector.extract_strided_slice %31 {offsets = [8, 384], sizes = [8, 128], strides = [1, 1]} : vector<16x768xf32> to vector<8x128xf32>
    %134 = vector.extract_strided_slice %31 {offsets = [8, 640], sizes = [8, 128], strides = [1, 1]} : vector<16x768xf32> to vector<8x128xf32>
    %135 = tpu.transpose %133, [1, 0] : vector<8x128xf32> -> vector<128x8xf32>
    %cst_44 = arith.constant dense<0.000000e+00> : vector<8x8xf32>
    %136 = tpu.matmul %132, %135, %cst_44 {dimension_numbers = #tpu.dot_dimension_numbers<[1], [0], [0], [1], [0, 0, 1, 1], [], []>} : vector<8x128xf32>, vector<128x8xf32>, vector<8x8xf32> -> vector<8x8xf32>
    %cst_45 = arith.constant 0.0883883461 : f32
    %137 = vector.broadcast %cst_45 : f32 to vector<8x8xf32>
    %138 = arith.mulf %136, %137 : vector<8x8xf32>
    %139 = vector.broadcast %101 : vector<1x8xf32> to vector<8x8xf32>
    %140 = arith.addf %138, %139 : vector<8x8xf32>
    %cst_46 = arith.constant -1.000000e+09 : f32
    %141 = vector.broadcast %cst_46 : f32 to vector<8x8xf32>
    %142 = arith.select %39, %140, %141 : vector<8x8xi1>, vector<8x8xf32>
    %cst_47 = arith.constant dense<0xFF800000> : vector<8xf32>
    %143 = vector.multi_reduction <maximumf>, %142, %cst_47 [1] : vector<8x8xf32> to vector<8xf32>
    %144 = vector.shape_cast %143 : vector<8xf32> to vector<8x1xf32>
    %145 = vector.broadcast %144 : vector<8x1xf32> to vector<8x8xf32>
    %146 = arith.subf %142, %145 : vector<8x8xf32>
    %147 = math.exp %146 : vector<8x8xf32>
    %cst_48 = arith.constant dense<0.000000e+00> : vector<8xf32>
    %148 = vector.multi_reduction <add>, %147, %cst_48 [1] : vector<8x8xf32> to vector<8xf32>
    %149 = vector.shape_cast %148 : vector<8xf32> to vector<8x1xf32>
    %150 = tpu.reciprocal %149 {approx = true} : vector<8x1xf32> -> vector<8x1xf32>
    %151 = vector.broadcast %150 : vector<8x1xf32> to vector<8x8xf32>
    %152 = arith.mulf %147, %151 : vector<8x8xf32>
    %153 = vector.extract_strided_slice %152 {offsets = [0, 0], sizes = [1, 8], strides = [1, 1]} : vector<8x8xf32> to vector<1x8xf32>
    %154 = arith.addf %126, %153 : vector<1x8xf32>
    %cst_49 = arith.constant dense<0.000000e+00> : vector<8x128xf32>
    %155 = tpu.matmul %152, %134, %cst_49 {dimension_numbers = #tpu.dot_dimension_numbers<[1], [0], [0], [1], [0, 0, 1, 1], [], []>} : vector<8x8xf32>, vector<8x128xf32>, vector<8x128xf32> -> vector<8x128xf32>
    %c128_50 = arith.constant 128 : index
    %c768_51 = arith.constant 768 : index
    %156 = vector.load %arg3[%c128_50, %c768_51] : memref<256x1024xbf16, #tpu.memory_space<vmem>>, vector<128x256xbf16>
    %157 = arith.truncf %155 : vector<8x128xf32> to vector<8x128xbf16>
    %cst_52 = arith.constant dense<0.000000e+00> : vector<8x256xf32>
    %158 = tpu.matmul %157, %156, %cst_52 {dimension_numbers = #tpu.dot_dimension_numbers<[1], [0], [0], [1], [0, 0, 1, 1], [], []>} : vector<8x128xbf16>, vector<128x256xbf16>, vector<8x256xf32> -> vector<8x256xf32>
    %159 = arith.addf %131, %158 : vector<8x256xf32>
    %cst_53 = arith.constant 5.000000e-01 : f32
    %160 = vector.broadcast %cst_53 : f32 to vector<1x8xf32>
    %161 = arith.mulf %154, %160 : vector<1x8xf32>
    %162 = tpu.concatenate %100, %161 in 0 : vector<1x8xf32>, vector<1x8xf32> -> vector<2x8xf32>
    %c0_54 = arith.constant 0 : index
    %c0_55 = arith.constant 0 : index
    %163 = vector.load %arg7[%c0_54, %c0_55] : memref<2x8xf32, #tpu.memory_space<vmem>>, vector<2x8xf32>
    tpu.vector_store %arg7[%c0_54, %c0_55], %162 {strides = array<i32>} : memref<2x8xf32, #tpu.memory_space<vmem>>, vector<2x8xf32>,
    %164 = tpu.concatenate %98, %159 in 0 : vector<8x256xf32>, vector<8x256xf32> -> vector<16x256xf32>
    %165 = arith.addf %0, %164 : vector<16x256xf32>
    %166 = vector.extract_strided_slice %1 {offsets = [6, 0], sizes = [1, 256], strides = [1, 1]} : vector<16x1024xf32> to vector<1x256xf32>
    %167 = vector.broadcast %166 : vector<1x256xf32> to vector<16x256xf32>
    %168 = arith.addf %165, %167 : vector<16x256xf32>
    %169 = vector.extract_strided_slice %1 {offsets = [2, 0], sizes = [1, 256], strides = [1, 1]} : vector<16x1024xf32> to vector<1x256xf32>
    %170 = vector.extract_strided_slice %1 {offsets = [3, 0], sizes = [1, 256], strides = [1, 1]} : vector<16x1024xf32> to vector<1x256xf32>
    %cst_56 = arith.constant dense<0.000000e+00> : vector<16xf32>
    %171 = vector.multi_reduction <add>, %168, %cst_56 [1] : vector<16x256xf32> to vector<16xf32>
    %172 = vector.shape_cast %171 : vector<16xf32> to vector<16x1xf32>
    %cst_57 = arith.constant 2.560000e+02 : f32
    %173 = vector.broadcast %cst_57 : f32 to vector<16x1xf32>
    %174 = arith.divf %172, %173 : vector<16x1xf32>
    %175 = vector.broadcast %174 : vector<16x1xf32> to vector<16x256xf32>
    %176 = arith.subf %168, %175 : vector<16x256xf32>
    %177 = arith.mulf %176, %176 : vector<16x256xf32>
    %cst_58 = arith.constant dense<0.000000e+00> : vector<16xf32>
    %178 = vector.multi_reduction <add>, %177, %cst_58 [1] : vector<16x256xf32> to vector<16xf32>
    %179 = vector.shape_cast %178 : vector<16xf32> to vector<16x1xf32>
    %cst_59 = arith.constant 2.560000e+02 : f32
    %180 = vector.broadcast %cst_59 : f32 to vector<16x1xf32>
    %181 = arith.divf %179, %180 : vector<16x1xf32>
    %182 = vector.broadcast %174 : vector<16x1xf32> to vector<16x256xf32>
    %183 = arith.subf %168, %182 : vector<16x256xf32>
    %cst_60 = arith.constant 9.99999974E-6 : f32
    %184 = vector.broadcast %cst_60 : f32 to vector<16x1xf32>
    %185 = arith.addf %181, %184 : vector<16x1xf32>
    %186 = math.rsqrt %185 : vector<16x1xf32>
    %187 = vector.broadcast %186 : vector<16x1xf32> to vector<16x256xf32>
    %188 = arith.mulf %183, %187 : vector<16x256xf32>
    %189 = vector.broadcast %169 : vector<1x256xf32> to vector<16x256xf32>
    %190 = arith.mulf %188, %189 : vector<16x256xf32>
    %191 = vector.broadcast %170 : vector<1x256xf32> to vector<16x256xf32>
    %192 = arith.addf %190, %191 : vector<16x256xf32>
    %193 = arith.truncf %192 : vector<16x256xf32> to vector<16x256xbf16>
    %c0_61 = arith.constant 0 : index
    %c0_62 = arith.constant 0 : index
    %194 = vector.load %arg4[%c0_61, %c0_62] : memref<256x1024xbf16, #tpu.memory_space<vmem>>, vector<256x1024xbf16>
    %cst_63 = arith.constant dense<0.000000e+00> : vector<16x1024xf32>
    %195 = tpu.matmul %193, %194, %cst_63 {dimension_numbers = #tpu.dot_dimension_numbers<[1], [0], [0], [1], [0, 0, 1, 1], [], []>} : vector<16x256xbf16>, vector<256x1024xbf16>, vector<16x1024xf32> -> vector<16x1024xf32>
    %196 = vector.extract_strided_slice %1 {offsets = [9, 0], sizes = [1, 1024], strides = [1, 1]} : vector<16x1024xf32> to vector<1x1024xf32>
    %197 = vector.broadcast %196 : vector<1x1024xf32> to vector<16x1024xf32>
    %198 = arith.addf %195, %197 : vector<16x1024xf32>
    %199 = arith.mulf %198, %198 : vector<16x1024xf32>
    %200 = arith.mulf %198, %199 : vector<16x1024xf32>
    %cst_64 = arith.constant 4.471500e-02 : f32
    %201 = vector.broadcast %cst_64 : f32 to vector<16x1024xf32>
    %202 = arith.mulf %201, %200 : vector<16x1024xf32>
    %203 = arith.addf %198, %202 : vector<16x1024xf32>
    %cst_65 = arith.constant 0.797884583 : f32
    %204 = vector.broadcast %cst_65 : f32 to vector<16x1024xf32>
    %205 = arith.mulf %204, %203 : vector<16x1024xf32>
    %206 = math.tanh %205 : vector<16x1024xf32>
    %cst_66 = arith.constant 1.000000e+00 : f32
    %207 = vector.broadcast %cst_66 : f32 to vector<16x1024xf32>
    %208 = arith.addf %207, %206 : vector<16x1024xf32>
    %cst_67 = arith.constant 5.000000e-01 : f32
    %209 = vector.broadcast %cst_67 : f32 to vector<16x1024xf32>
    %210 = arith.mulf %209, %208 : vector<16x1024xf32>
    %211 = arith.mulf %198, %210 : vector<16x1024xf32>
    %212 = arith.truncf %211 : vector<16x1024xf32> to vector<16x1024xbf16>
    %c0_68 = arith.constant 0 : index
    %c0_69 = arith.constant 0 : index
    %213 = vector.load %arg5[%c0_68, %c0_69] : memref<1024x256xbf16, #tpu.memory_space<vmem>>, vector<1024x256xbf16>
    %cst_70 = arith.constant dense<0.000000e+00> : vector<16x256xf32>
    %214 = tpu.matmul %212, %213, %cst_70 {dimension_numbers = #tpu.dot_dimension_numbers<[1], [0], [0], [1], [0, 0, 1, 1], [], []>} : vector<16x1024xbf16>, vector<1024x256xbf16>, vector<16x256xf32> -> vector<16x256xf32>
    %215 = vector.extract_strided_slice %1 {offsets = [7, 0], sizes = [1, 256], strides = [1, 1]} : vector<16x1024xf32> to vector<1x256xf32>
    %216 = vector.broadcast %215 : vector<1x256xf32> to vector<16x256xf32>
    %217 = arith.addf %214, %216 : vector<16x256xf32>
    %218 = arith.addf %168, %217 : vector<16x256xf32>
    %219 = vector.extract_strided_slice %1 {offsets = [4, 0], sizes = [1, 256], strides = [1, 1]} : vector<16x1024xf32> to vector<1x256xf32>
    %220 = vector.extract_strided_slice %1 {offsets = [5, 0], sizes = [1, 256], strides = [1, 1]} : vector<16x1024xf32> to vector<1x256xf32>
    %cst_71 = arith.constant dense<0.000000e+00> : vector<16xf32>
    %221 = vector.multi_reduction <add>, %218, %cst_71 [1] : vector<16x256xf32> to vector<16xf32>
    %222 = vector.shape_cast %221 : vector<16xf32> to vector<16x1xf32>
    %cst_72 = arith.constant 2.560000e+02 : f32
    %223 = vector.broadcast %cst_72 : f32 to vector<16x1xf32>
    %224 = arith.divf %222, %223 : vector<16x1xf32>
    %225 = vector.broadcast %224 : vector<16x1xf32> to vector<16x256xf32>
    %226 = arith.subf %218, %225 : vector<16x256xf32>
    %227 = arith.mulf %226, %226 : vector<16x256xf32>
    %cst_73 = arith.constant dense<0.000000e+00> : vector<16xf32>
    %228 = vector.multi_reduction <add>, %227, %cst_73 [1] : vector<16x256xf32> to vector<16xf32>
    %229 = vector.shape_cast %228 : vector<16xf32> to vector<16x1xf32>
    %cst_74 = arith.constant 2.560000e+02 : f32
    %230 = vector.broadcast %cst_74 : f32 to vector<16x1xf32>
    %231 = arith.divf %229, %230 : vector<16x1xf32>
    %232 = vector.broadcast %224 : vector<16x1xf32> to vector<16x256xf32>
    %233 = arith.subf %218, %232 : vector<16x256xf32>
    %cst_75 = arith.constant 9.99999974E-6 : f32
    %234 = vector.broadcast %cst_75 : f32 to vector<16x1xf32>
    %235 = arith.addf %231, %234 : vector<16x1xf32>
    %236 = math.rsqrt %235 : vector<16x1xf32>
    %237 = vector.broadcast %236 : vector<16x1xf32> to vector<16x256xf32>
    %238 = arith.mulf %233, %237 : vector<16x256xf32>
    %239 = vector.broadcast %219 : vector<1x256xf32> to vector<16x256xf32>
    %240 = arith.mulf %238, %239 : vector<16x256xf32>
    %241 = vector.broadcast %220 : vector<1x256xf32> to vector<16x256xf32>
    %242 = arith.addf %240, %241 : vector<16x256xf32>
    %c0_76 = arith.constant 0 : index
    %c0_77 = arith.constant 0 : index
    %243 = vector.load %arg6[%c0_76, %c0_77] : memref<16x256xf32, #tpu.memory_space<vmem>>, vector<16x256xf32>
    tpu.vector_store %arg6[%c0_76, %c0_77], %242 {strides = array<i32>} : memref<16x256xf32, #tpu.memory_space<vmem>>, vector<16x256xf32>,
    return
  }
}

</mosaic_0001>

<llo_original>
// kernel: tpu_custom_call.1
$region0: #{tpu_custom_call.1}
  #allocation0 [shape = 'u32[]', space=smem, size = 0x4, offset = 0x4, fixed_abs, tag = 'smem constant byte address 0x4 - core index']
  #allocation1 [shape = 'u32[144,128]{1,0:T(1,128)}', space=vmem, size = 0x12000, scoped, tag = 'internal scratch']
  %s0 = inlined_call_operand.hbm [shape: f32[16,256], index: 0, kind: input, shape index: {}]
  %s1 = inlined_call_operand.vmem [shape: f32[2,8], index: 1, kind: input, shape index: {}]
  %s2 = inlined_call_operand.hbm [shape: f32[16,1024], index: 2, kind: input, shape index: {}]
  %s3 = inlined_call_operand.hbm [shape: bf16[256,1024], index: 3, kind: input, shape index: {}]
  %s4 = inlined_call_operand.hbm [shape: bf16[256,1024], index: 4, kind: input, shape index: {}]
  %s5 = inlined_call_operand.hbm [shape: bf16[1024,256], index: 5, kind: input, shape index: {}]
  %s6 = inlined_call_operand.hbm [shape: f32[16,256], index: 6, kind: output, shape index: {0}]
  %s7 = inlined_call_operand.hbm [shape: f32[2,8], index: 7, kind: output, shape index: {1}]
  %8 = xla_tuple %s6, %s7
  %s9 = sld [smem:[#allocation0]]
  $region62: #{tpu_custom_call.1} parent=0
    _
  %s11 = ssub.s32 1, %s9
  %s12 = scalar_select 0, %s11, %s9
  $region1: #{tpu_custom_call.1} parent=0
    #allocation2 [shape = 'u8[16384]{0}', space=vmem, size = 0x4000, scoped, tag = 'input window, operand 0, single buffered']
    #allocation3 [shape = 's32[1]{0}', space=sflag, size = 0x4, scoped, tag = 'scoped memory for tpu_custom_call.1']
    #allocation4 [shape = 's32[1]{0}', space=sflag, size = 0x4, scoped, tag = 'scoped memory for tpu_custom_call.1']
    #allocation5 [shape = 'u8[65536]{0}', space=vmem, size = 0x10000, scoped, tag = 'input window, operand 2, single buffered']
    #allocation6 [shape = 's32[1]{0}', space=sflag, size = 0x4, scoped, tag = 'scoped memory for tpu_custom_call.1']
    #allocation7 [shape = 'u8[524288]{0}', space=vmem, size = 0x80000, scoped, tag = 'input window, operand 3, single buffered']
    #allocation8 [shape = 'u8[524288]{0}', space=vmem, size = 0x80000, scoped, tag = 'input window, operand 4, single buffered']
    #allocation9 [shape = 's32[1]{0}', space=sflag, size = 0x4, scoped, tag = 'scoped memory for tpu_custom_call.1']
    #allocation10 [shape = 'u8[524288]{0}', space=vmem, size = 0x80000, scoped, tag = 'input window, operand 5, single buffered']
    #allocation11 [shape = 'u8[16384]{0}', space=vmem, size = 0x4000, scoped, tag = 'output window, operand 0, single buffered']
    #allocation12 [shape = 'u8[1024]{0}', space=vmem, size = 0x400, scoped, tag = 'output window, operand 1, single buffered']
    #allocation13 [shape = 's32[1]{0}', space=sflag, size = 0x4, scoped, tag = 'scoped memory for tpu_custom_call.1']
    %13 = vsyncpa [#allocation3], 0
    %14 = vsyncpa [#allocation6], 0
    %15 = vsyncpa [#allocation9], 0
    %16 = vsyncpa [#allocation4], 0
    %17 = vsyncpa [#allocation13], 0
    // Predicated region
    $region2: #{tpu_custom_call.1} parent=1 // pred_check
      _
    $region3: #{tpu_custom_call.1} parent=1 // pred_check_branch
      %19 = sbr.rel (0) target = $region5
    $region4: #{tpu_custom_call.1} parent=1 // pred_region
      %s21 = ssub.s32 512, 512
      %22 = vsyncadd [#allocation3], %s21
      %s23 = sshll.u32 [#allocation2], 4
      %s24 = int_to_ptr.vmem [resolvable:$true] %s23
      %29 = dma.hbm_to_vmem [thread:$0]  %s0, 512, %s24, [#allocation3], 256, 256, 16
    $region5: #{tpu_custom_call.1} parent=1 // pred_fallthru
      _
    // Predicated region
    $region6: #{tpu_custom_call.1} parent=1 // pred_check
      _
    $region7: #{tpu_custom_call.1} parent=1 // pred_check_branch
      %31 = sbr.rel (0) target = $region9
    $region8: #{tpu_custom_call.1} parent=1 // pred_region
      _
    $region9: #{tpu_custom_call.1} parent=1 // pred_fallthru
      _
    // Predicated region
    $region10: #{tpu_custom_call.1} parent=1 // pred_check
      _
    $region11: #{tpu_custom_call.1} parent=1 // pred_check_branch
      %33 = sbr.rel (0) target = $region13
    $region12: #{tpu_custom_call.1} parent=1 // pred_region
      %s35 = ssub.s32 2048, 2048
      %36 = vsyncadd [#allocation6], %s35
      %s37 = sshll.u32 [#allocation5], 4
      %s38 = int_to_ptr.vmem [resolvable:$true] %s37
      %43 = dma.hbm_to_vmem [thread:$0]  %s2, 2048, %s38, [#allocation6], 1024, 1024, 64
    $region13: #{tpu_custom_call.1} parent=1 // pred_fallthru
      _
    // Predicated region
    $region14: #{tpu_custom_call.1} parent=1 // pred_check
      _
    $region15: #{tpu_custom_call.1} parent=1 // pred_check_branch
      %45 = sbr.rel (0) target = $region17
    $region16: #{tpu_custom_call.1} parent=1 // pred_region
      %s47 = ssub.s32 16384, 16384
      %48 = vsyncadd [#allocation6], %s47
      %s49 = sshll.u32 [#allocation7], 4
      %s50 = int_to_ptr.vmem [resolvable:$true] %s49
      %55 = dma.hbm_to_vmem [thread:$0]  %s3, 16384, %s50, [#allocation6], 512, 512, 32
    $region17: #{tpu_custom_call.1} parent=1 // pred_fallthru
      _
    // Predicated region
    $region18: #{tpu_custom_call.1} parent=1 // pred_check
      _
    $region19: #{tpu_custom_call.1} parent=1 // pred_check_branch
      %57 = sbr.rel (0) target = $region21
    $region20: #{tpu_custom_call.1} parent=1 // pred_region
      %s59 = ssub.s32 16384, 16384
      %60 = vsyncadd [#allocation9], %s59
      %s61 = sshll.u32 [#allocation8], 4
      %s62 = int_to_ptr.vmem [resolvable:$true] %s61
      %67 = dma.hbm_to_vmem [thread:$0]  %s4, 16384, %s62, [#allocation9], 512, 512, 32
    $region21: #{tpu_custom_call.1} parent=1 // pred_fallthru
      _
    // Predicated region
    $region22: #{tpu_custom_call.1} parent=1 // pred_check
      _
    $region23: #{tpu_custom_call.1} parent=1 // pred_check_branch
      %69 = sbr.rel (0) target = $region25
    $region24: #{tpu_custom_call.1} parent=1 // pred_region
      %s71 = ssub.s32 16384, 16384
      %72 = vsyncadd [#allocation9], %s71
      %s73 = sshll.u32 [#allocation10], 4
      %s74 = int_to_ptr.vmem [resolvable:$true] %s73
      %79 = dma.hbm_to_vmem [thread:$0]  %s5, 16384, %s74, [#allocation9], 128, 128, 8
    $region25: #{tpu_custom_call.1} parent=1 // pred_fallthru
      _
    // Predicated region
    $region26: #{tpu_custom_call.1} parent=1 // pred_check
      _
    $region27: #{tpu_custom_call.1} parent=1 // pred_check_branch
      %81 = sbr.rel (0) target = $region29
    $region28: #{tpu_custom_call.1} parent=1 // pred_region
      %82 = dma.done [#allocation3], 512
    $region29: #{tpu_custom_call.1} parent=1 // pred_fallthru
      _
    // Predicated region
    $region30: #{tpu_custom_call.1} parent=1 // pred_check
      _
    $region31: #{tpu_custom_call.1} parent=1 // pred_check_branch
      %84 = sbr.rel (0) target = $region33
    $region32: #{tpu_custom_call.1} parent=1 // pred_region
      %85 = dma.done [#allocation6], 2048
    $region33: #{tpu_custom_call.1} parent=1 // pred_fallthru
      _
    // Predicated region
    $region34: #{tpu_custom_call.1} parent=1 // pred_check
      _
    $region35: #{tpu_custom_call.1} parent=1 // pred_check_branch
      %87 = sbr.rel (0) target = $region37
    $region36: #{tpu_custom_call.1} parent=1 // pred_region
      %88 = dma.done [#allocation6], 16384
    $region37: #{tpu_custom_call.1} parent=1 // pred_fallthru
      _
    // Predicated region
    $region38: #{tpu_custom_call.1} parent=1 // pred_check
      _
    $region39: #{tpu_custom_call.1} parent=1 // pred_check_branch
      %90 = sbr.rel (0) target = $region41
    $region40: #{tpu_custom_call.1} parent=1 // pred_region
      %91 = dma.done [#allocation9], 16384
    $region41: #{tpu_custom_call.1} parent=1 // pred_fallthru
      _
    // Predicated region
    $region42: #{tpu_custom_call.1} parent=1 // pred_check
      _
    $region43: #{tpu_custom_call.1} parent=1 // pred_check_branch
      %93 = sbr.rel (0) target = $region45
    $region44: #{tpu_custom_call.1} parent=1 // pred_region
      %94 = dma.done [#allocation9], 16384
    $region45: #{tpu_custom_call.1} parent=1 // pred_fallthru
      _
    %v96 = vld [vmem:[#allocation2] sm:$0xff]
    %v97 = vld [vmem:[#allocation2 + $0x8] sm:$0xff]
    %v98 = vld [vmem:[#allocation2 + $0x10] sm:$0xff]
    %v99 = vld [vmem:[#allocation2 + $0x18] sm:$0xff]
    %v100 = vld [vmem:[#allocation5] sm:$0xff]
    %v101 = vld [vmem:[#allocation5 + $0x8] sm:$0xff]
    %v102 = vld [vmem:[#allocation5 + $0x40] sm:$0xff]
    %v103 = vld [vmem:[#allocation5 + $0x48] sm:$0xff]
    %v104 = vld [vmem:[#allocation5 + $0x50] sm:$0xff]
    %v105 = vld [vmem:[#allocation5 + $0x58] sm:$0xff]
    %v106 = vld [vmem:[#allocation5 + $0x60] sm:$0xff]
    %v107 = vld [vmem:[#allocation5 + $0x68] sm:$0xff]
    %v108 = vld [vmem:[#allocation5 + $0x70] sm:$0xff]
    %v109 = vld [vmem:[#allocation5 + $0x78] sm:$0xff]
    %v110 = vadd.f32 %v96, %v97
    %111 = vadd.xlane.f32.xlu0 %v110
    %v112 = vpop.xlane.xlu0 %111
    %v113 = vadd.f32 %v98, %v99
    %114 = vadd.xlane.f32.xlu0 %v113
    %v115 = vpop.xlane.xlu0 %114
    %v116 = vrcp.pop 256.0
    %v117 = vmul.f32 %v112, %v116
    %v118 = vmul.f32 %v115, %v116
    %v119 = vsub.f32 %v96, %v117
    %v120 = vsub.f32 %v97, %v117
    %v121 = vsub.f32 %v98, %v118
    %v122 = vsub.f32 %v99, %v118
    %v123 = vmul.f32 %v119, %v119
    %v124 = vmul.f32 %v120, %v120
    %v125 = vmul.f32 %v121, %v121
    %v126 = vmul.f32 %v122, %v122
    %v127 = vadd.f32 %v123, %v124
    %128 = vadd.xlane.f32.xlu0 %v127
    %v129 = vpop.xlane.xlu0 %128
    %v130 = vadd.f32 %v125, %v126
    %131 = vadd.xlane.f32.xlu0 %v130
    %v132 = vpop.xlane.xlu0 %131
    %v133 = vmul.f32 %v129, %v116
    %v134 = vmul.f32 %v132, %v116
    %v135 = vadd.f32 %v133, 1e-05
    %v136 = vadd.f32 %v134, 1e-05
    %v137 = vrsqrt.pop %v135
    %v138 = vrsqrt.pop %v136
    %v139 = vmul.f32 %v119, %v137
    %v140 = vmul.f32 %v120, %v137
    %v141 = vmul.f32 %v121, %v138
    %v142 = vmul.f32 %v122, %v138
    %v143 = vlaneseq
    %v144 = vshrl.u32 %v143, 7
    %v145 = vsub.s32 0, %v144
    %v146 = vrot.slane %v100, %v145
    %v147 = vlaneseq
    %v148 = vshrl.u32 %v147, 7
    %v149 = vsub.s32 0, %v148
    %v150 = vrot.slane %v101, %v149
    %v151 = vmul.f32 %v139, %v146
    %v152 = vmul.f32 %v140, %v150
    %v153 = vmul.f32 %v141, %v146
    %v154 = vmul.f32 %v142, %v150
    %v155 = vlaneseq
    %v156 = vshrl.u32 %v155, 7
    %v157 = vsub.s32 1, %v156
    %v158 = vrot.slane %v100, %v157
    %v159 = vlaneseq
    %v160 = vshrl.u32 %v159, 7
    %v161 = vsub.s32 1, %v160
    %v162 = vrot.slane %v101, %v161
    %v163 = vadd.f32 %v151, %v158
    %v164 = vadd.f32 %v152, %v162
    %v165 = vadd.f32 %v153, %v158
    %v166 = vadd.f32 %v154, %v162
    %v167 = vld [vmem:[#allocation7] sm:$0xff]
    %v168 = vld [vmem:[#allocation7 + $0x8] sm:$0xff]
    %v169 = vld [vmem:[#allocation7 + $0x10] sm:$0xff]
    %v170 = vld [vmem:[#allocation7 + $0x20] sm:$0xff]
    %v171 = vld [vmem:[#allocation7 + $0x28] sm:$0xff]
    %v172 = vld [vmem:[#allocation7 + $0x30] sm:$0xff]
    %v173 = vld [vmem:[#allocation7 + $0x40] sm:$0xff]
    %v174 = vld [vmem:[#allocation7 + $0x48] sm:$0xff]
    %v175 = vld [vmem:[#allocation7 + $0x50] sm:$0xff]
    %v176 = vld [vmem:[#allocation7 + $0x60] sm:$0xff]
    %v177 = vld [vmem:[#allocation7 + $0x68] sm:$0xff]
    %v178 = vld [vmem:[#allocation7 + $0x70] sm:$0xff]
    %v179 = vld [vmem:[#allocation7 + $0x80] sm:$0xff]
    %v180 = vld [vmem:[#allocation7 + $0x88] sm:$0xff]
    %v181 = vld [vmem:[#allocation7 + $0x90] sm:$0xff]
    %v182 = vld [vmem:[#allocation7 + $0xa0] sm:$0xff]
    %v183 = vld [vmem:[#allocation7 + $0xa8] sm:$0xff]
    %v184 = vld [vmem:[#allocation7 + $0xb0] sm:$0xff]
    %v185 = vld [vmem:[#allocation7 + $0xc0] sm:$0xff]
    %v186 = vld [vmem:[#allocation7 + $0xc8] sm:$0xff]
    %v187 = vld [vmem:[#allocation7 + $0xd0] sm:$0xff]
    %v188 = vld [vmem:[#allocation7 + $0xe0] sm:$0xff]
    %v189 = vld [vmem:[#allocation7 + $0xe8] sm:$0xff]
    %v190 = vld [vmem:[#allocation7 + $0xf0] sm:$0xff]
    %v191 = vld [vmem:[#allocation7 + $0x100] sm:$0xff]
    %v192 = vld [vmem:[#allocation7 + $0x108] sm:$0xff]
    %v193 = vld [vmem:[#allocation7 + $0x110] sm:$0xff]
    %v194 = vld [vmem:[#allocation7 + $0x120] sm:$0xff]
    %v195 = vld [vmem:[#allocation7 + $0x128] sm:$0xff]
    %v196 = vld [vmem:[#allocation7 + $0x130] sm:$0xff]
    %v197 = vld [vmem:[#allocation7 + $0x140] sm:$0xff]
    %v198 = vld [vmem:[#allocation7 + $0x148] sm:$0xff]
    %v199 = vld [vmem:[#allocation7 + $0x150] sm:$0xff]
    %v200 = vld [vmem:[#allocation7 + $0x160] sm:$0xff]
    %v201 = vld [vmem:[#allocation7 + $0x168] sm:$0xff]
    %v202 = vld [vmem:[#allocation7 + $0x170] sm:$0xff]
    %v203 = vld [vmem:[#allocation7 + $0x180] sm:$0xff]
    %v204 = vld [vmem:[#allocation7 + $0x188] sm:$0xff]
    %v205 = vld [vmem:[#allocation7 + $0x190] sm:$0xff]
    %v206 = vld [vmem:[#allocation7 + $0x1a0] sm:$0xff]
    %v207 = vld [vmem:[#allocation7 + $0x1a8] sm:$0xff]
    %v208 = vld [vmem:[#allocation7 + $0x1b0] sm:$0xff]
    %v209 = vld [vmem:[#allocation7 + $0x1c0] sm:$0xff]
    %v210 = vld [vmem:[#allocation7 + $0x1c8] sm:$0xff]
    %v211 = vld [vmem:[#allocation7 + $0x1d0] sm:$0xff]
    %v212 = vld [vmem:[#allocation7 + $0x1e0] sm:$0xff]
    %v213 = vld [vmem:[#allocation7 + $0x1e8] sm:$0xff]
    %v214 = vld [vmem:[#allocation7 + $0x1f0] sm:$0xff]
    %v215 = vld [vmem:[#allocation7 + $0x200] sm:$0xff]
    %v216 = vld [vmem:[#allocation7 + $0x208] sm:$0xff]
    %v217 = vld [vmem:[#allocation7 + $0x210] sm:$0xff]
    %v218 = vld [vmem:[#allocation7 + $0x220] sm:$0xff]
    %v219 = vld [vmem:[#allocation7 + $0x228] sm:$0xff]
    %v220 = vld [vmem:[#allocation7 + $0x230] sm:$0xff]
    %v221 = vld [vmem:[#allocation7 + $0x240] sm:$0xff]
    %v222 = vld [vmem:[#allocation7 + $0x248] sm:$0xff]
    %v223 = vld [vmem:[#allocation7 + $0x250] sm:$0xff]
    %v224 = vld [vmem:[#allocation7 + $0x260] sm:$0xff]
    %v225 = vld [vmem:[#allocation7 + $0x268] sm:$0xff]
    %v226 = vld [vmem:[#allocation7 + $0x270] sm:$0xff]
    %v227 = vld [vmem:[#allocation7 + $0x280] sm:$0xff]
    %v228 = vld [vmem:[#allocation7 + $0x288] sm:$0xff]
    %v229 = vld [vmem:[#allocation7 + $0x290] sm:$0xff]
    %v230 = vld [vmem:[#allocation7 + $0x2a0] sm:$0xff]
    %v231 = vld [vmem:[#allocation7 + $0x2a8] sm:$0xff]
    %v232 = vld [vmem:[#allocation7 + $0x2b0] sm:$0xff]
    %v233 = vld [vmem:[#allocation7 + $0x2c0] sm:$0xff]
    %v234 = vld [vmem:[#allocation7 + $0x2c8] sm:$0xff]
    %v235 = vld [vmem:[#allocation7 + $0x2d0] sm:$0xff]
    %v236 = vld [vmem:[#allocation7 + $0x2e0] sm:$0xff]
    %v237 = vld [vmem:[#allocation7 + $0x2e8] sm:$0xff]
    %v238 = vld [vmem:[#allocation7 + $0x2f0] sm:$0xff]
    %v239 = vld [vmem:[#allocation7 + $0x300] sm:$0xff]
    %v240 = vld [vmem:[#allocation7 + $0x308] sm:$0xff]
    %v241 = vld [vmem:[#allocation7 + $0x310] sm:$0xff]
    %v242 = vld [vmem:[#allocation7 + $0x320] sm:$0xff]
    %v243 = vld [vmem:[#allocation7 + $0x328] sm:$0xff]
    %v244 = vld [vmem:[#allocation7 + $0x330] sm:$0xff]
    %v245 = vld [vmem:[#allocation7 + $0x340] sm:$0xff]
    %v246 = vld [vmem:[#allocation7 + $0x348] sm:$0xff]
    %v247 = vld [vmem:[#allocation7 + $0x350] sm:$0xff]
    %v248 = vld [vmem:[#allocation7 + $0x360] sm:$0xff]
    %v249 = vld [vmem:[#allocation7 + $0x368] sm:$0xff]
    %v250 = vld [vmem:[#allocation7 + $0x370] sm:$0xff]
    %v251 = vld [vmem:[#allocation7 + $0x380] sm:$0xff]
    %v252 = vld [vmem:[#allocation7 + $0x388] sm:$0xff]
    %v253 = vld [vmem:[#allocation7 + $0x390] sm:$0xff]
    %v254 = vld [vmem:[#allocation7 + $0x3a0] sm:$0xff]
    %v255 = vld [vmem:[#allocation7 + $0x3a8] sm:$0xff]
    %v256 = vld [vmem:[#allocation7 + $0x3b0] sm:$0xff]
    %v257 = vld [vmem:[#allocation7 + $0x3c0] sm:$0xff]
    %v258 = vld [vmem:[#allocation7 + $0x3c8] sm:$0xff]
    %v259 = vld [vmem:[#allocation7 + $0x3d0] sm:$0xff]
    %v260 = vld [vmem:[#allocation7 + $0x3e0] sm:$0xff]
    %v261 = vld [vmem:[#allocation7 + $0x3e8] sm:$0xff]
    %v262 = vld [vmem:[#allocation7 + $0x3f0] sm:$0xff]
    %v263 = vpack.c.bf16 %v165, %v163
    %v264 = vpack.c.bf16 %v166, %v164
    %v265 = vlaneseq
    %v266 = vshrl.u32 %v265, 7
    %v267 = vsub.s32 0, %v266
    %v268 = vrot.slane %v102, %v267
    %v269 = vlaneseq
    %v270 = vshrl.u32 %v269, 7
    %v271 = vsub.s32 0, %v270
    %v272 = vrot.slane %v103, %v271
    %v273 = vlaneseq
    %v274 = vshrl.u32 %v273, 7
    %v275 = vsub.s32 0, %v274
    %v276 = vrot.slane %v104, %v275
    %v277 = vlaneseq
    %v278 = vshrl.u32 %v277, 7
    %v279 = vsub.s32 0, %v278
    %v280 = vrot.slane %v105, %v279
    %v281 = vlaneseq
    %v282 = vshrl.u32 %v281, 7
    %v283 = vsub.s32 0, %v282
    %v284 = vrot.slane %v106, %v283
    %v285 = vlaneseq
    %v286 = vshrl.u32 %v285, 7
    %v287 = vsub.s32 0, %v286
    %v288 = vrot.slane %v107, %v287
    %v385 = vunpack.c.l.b16 %v167
    %v386 = vunpack.c.h.b16 %v167
    %v387 = vunpack.c.l.b16 %v168
    %v388 = vunpack.c.h.b16 %v168
    %v389 = vunpack.c.l.b16 %v169
    %v390 = vunpack.c.h.b16 %v169
    %v391 = vunpack.c.l.b16 %v170
    %v392 = vunpack.c.h.b16 %v170
    %v393 = vunpack.c.l.b16 %v171
    %v394 = vunpack.c.h.b16 %v171
    %v395 = vunpack.c.l.b16 %v172
    %v396 = vunpack.c.h.b16 %v172
    %v397 = vunpack.c.l.b16 %v173
    %v398 = vunpack.c.h.b16 %v173
    %v399 = vunpack.c.l.b16 %v174
    %v400 = vunpack.c.h.b16 %v174
    %v401 = vunpack.c.l.b16 %v175
    %v402 = vunpack.c.h.b16 %v175
    %v403 = vunpack.c.l.b16 %v176
    %v404 = vunpack.c.h.b16 %v176
    %v405 = vunpack.c.l.b16 %v177
    %v406 = vunpack.c.h.b16 %v177
    %v407 = vunpack.c.l.b16 %v178
    %v408 = vunpack.c.h.b16 %v178
    %v409 = vunpack.c.l.b16 %v179
    %v410 = vunpack.c.h.b16 %v179
    %v411 = vunpack.c.l.b16 %v180
    %v412 = vunpack.c.h.b16 %v180
    %v413 = vunpack.c.l.b16 %v181
    %v414 = vunpack.c.h.b16 %v181
    %v415 = vunpack.c.l.b16 %v182
    %v416 = vunpack.c.h.b16 %v182
    %v417 = vunpack.c.l.b16 %v183
    %v418 = vunpack.c.h.b16 %v183
    %v419 = vunpack.c.l.b16 %v184
    %v420 = vunpack.c.h.b16 %v184
    %v421 = vunpack.c.l.b16 %v185
    %v422 = vunpack.c.h.b16 %v185
    %v423 = vunpack.c.l.b16 %v186
    %v424 = vunpack.c.h.b16 %v186
    %v425 = vunpack.c.l.b16 %v187
    %v426 = vunpack.c.h.b16 %v187
    %v427 = vunpack.c.l.b16 %v188
    %v428 = vunpack.c.h.b16 %v188
    %v429 = vunpack.c.l.b16 %v189
    %v430 = vunpack.c.h.b16 %v189
    %v431 = vunpack.c.l.b16 %v190
    %v432 = vunpack.c.h.b16 %v190
    %v433 = vunpack.c.l.b16 %v191
    %v434 = vunpack.c.h.b16 %v191
    %v435 = vunpack.c.l.b16 %v192
    %v436 = vunpack.c.h.b16 %v192
    %v437 = vunpack.c.l.b16 %v193
    %v438 = vunpack.c.h.b16 %v193
    %v439 = vunpack.c.l.b16 %v194
    %v440 = vunpack.c.h.b16 %v194
    %v441 = vunpack.c.l.b16 %v195
    %v442 = vunpack.c.h.b16 %v195
    %v443 = vunpack.c.l.b16 %v196
    %v444 = vunpack.c.h.b16 %v196
    %v445 = vunpack.c.l.b16 %v197
    %v446 = vunpack.c.h.b16 %v197
    %v447 = vunpack.c.l.b16 %v198
    %v448 = vunpack.c.h.b16 %v198
    %v449 = vunpack.c.l.b16 %v199
    %v450 = vunpack.c.h.b16 %v199
    %v451 = vunpack.c.l.b16 %v200
    %v452 = vunpack.c.h.b16 %v200
    %v453 = vunpack.c.l.b16 %v201
    %v454 = vunpack.c.h.b16 %v201
    %v455 = vunpack.c.l.b16 %v202
    %v456 = vunpack.c.h.b16 %v202
    %v457 = vunpack.c.l.b16 %v203
    %v458 = vunpack.c.h.b16 %v203
    %v459 = vunpack.c.l.b16 %v204
    %v460 = vunpack.c.h.b16 %v204
    %v461 = vunpack.c.l.b16 %v205
    %v462 = vunpack.c.h.b16 %v205
    %v463 = vunpack.c.l.b16 %v206
    %v464 = vunpack.c.h.b16 %v206
    %v465 = vunpack.c.l.b16 %v207
    %v466 = vunpack.c.h.b16 %v207
    %v467 = vunpack.c.l.b16 %v208
    %v468 = vunpack.c.h.b16 %v208
    %v469 = vunpack.c.l.b16 %v209
    %v470 = vunpack.c.h.b16 %v209
    %v471 = vunpack.c.l.b16 %v210
    %v472 = vunpack.c.h.b16 %v210
    %v473 = vunpack.c.l.b16 %v211
    %v474 = vunpack.c.h.b16 %v211
    %v475 = vunpack.c.l.b16 %v212
    %v476 = vunpack.c.h.b16 %v212
    %v477 = vunpack.c.l.b16 %v213
    %v478 = vunpack.c.h.b16 %v213
    %v479 = vunpack.c.l.b16 %v214
    %v480 = vunpack.c.h.b16 %v214
    %v481 = vunpack.c.l.b16 %v215
    %v482 = vunpack.c.h.b16 %v215
    %v483 = vunpack.c.l.b16 %v216
    %v484 = vunpack.c.h.b16 %v216
    %v485 = vunpack.c.l.b16 %v217
    %v486 = vunpack.c.h.b16 %v217
    %v487 = vunpack.c.l.b16 %v218
    %v488 = vunpack.c.h.b16 %v218
    %v489 = vunpack.c.l.b16 %v219
    %v490 = vunpack.c.h.b16 %v219
    %v491 = vunpack.c.l.b16 %v220
    %v492 = vunpack.c.h.b16 %v220
    %v493 = vunpack.c.l.b16 %v221
    %v494 = vunpack.c.h.b16 %v221
    %v495 = vunpack.c.l.b16 %v222
    %v496 = vunpack.c.h.b16 %v222
    %v497 = vunpack.c.l.b16 %v223
    %v498 = vunpack.c.h.b16 %v223
    %v499 = vunpack.c.l.b16 %v224
    %v500 = vunpack.c.h.b16 %v224
    %v501 = vunpack.c.l.b16 %v225
    %v502 = vunpack.c.h.b16 %v225
    %v503 = vunpack.c.l.b16 %v226
    %v504 = vunpack.c.h.b16 %v226
    %v505 = vunpack.c.l.b16 %v227
    %v506 = vunpack.c.h.b16 %v227
    %v507 = vunpack.c.l.b16 %v228
    %v508 = vunpack.c.h.b16 %v228
    %v509 = vunpack.c.l.b16 %v229
    %v510 = vunpack.c.h.b16 %v229
    %v511 = vunpack.c.l.b16 %v230
    %v512 = vunpack.c.h.b16 %v230
    %v513 = vunpack.c.l.b16 %v231
    %v514 = vunpack.c.h.b16 %v231
    %v515 = vunpack.c.l.b16 %v232
    %v516 = vunpack.c.h.b16 %v232
    %v517 = vunpack.c.l.b16 %v233
    %v518 = vunpack.c.h.b16 %v233
    %v519 = vunpack.c.l.b16 %v234
    %v520 = vunpack.c.h.b16 %v234
    %v521 = vunpack.c.l.b16 %v235
    %v522 = vunpack.c.h.b16 %v235
    %v523 = vunpack.c.l.b16 %v236
    %v524 = vunpack.c.h.b16 %v236
    %v525 = vunpack.c.l.b16 %v237
    %v526 = vunpack.c.h.b16 %v237
    %v527 = vunpack.c.l.b16 %v238
    %v528 = vunpack.c.h.b16 %v238
    %v529 = vunpack.c.l.b16 %v239
    %v530 = vunpack.c.h.b16 %v239
    %v531 = vunpack.c.l.b16 %v240
    %v532 = vunpack.c.h.b16 %v240
    %v533 = vunpack.c.l.b16 %v241
    %v534 = vunpack.c.h.b16 %v241
    %v535 = vunpack.c.l.b16 %v242
    %v536 = vunpack.c.h.b16 %v242
    %v537 = vunpack.c.l.b16 %v243
    %v538 = vunpack.c.h.b16 %v243
    %v539 = vunpack.c.l.b16 %v244
    %v540 = vunpack.c.h.b16 %v244
    %v541 = vunpack.c.l.b16 %v245
    %v542 = vunpack.c.h.b16 %v245
    %v543 = vunpack.c.l.b16 %v246
    %v544 = vunpack.c.h.b16 %v246
    %v545 = vunpack.c.l.b16 %v247
    %v546 = vunpack.c.h.b16 %v247
    %v547 = vunpack.c.l.b16 %v248
    %v548 = vunpack.c.h.b16 %v248
    %v549 = vunpack.c.l.b16 %v249
    %v550 = vunpack.c.h.b16 %v249
    %v551 = vunpack.c.l.b16 %v250
    %v552 = vunpack.c.h.b16 %v250
    %v553 = vunpack.c.l.b16 %v251
    %v554 = vunpack.c.h.b16 %v251
    %v555 = vunpack.c.l.b16 %v252
    %v556 = vunpack.c.h.b16 %v252
    %v557 = vunpack.c.l.b16 %v253
    %v558 = vunpack.c.h.b16 %v253
    %v559 = vunpack.c.l.b16 %v254
    %v560 = vunpack.c.h.b16 %v254
    %v561 = vunpack.c.l.b16 %v255
    %v562 = vunpack.c.h.b16 %v255
    %v563 = vunpack.c.l.b16 %v256
    %v564 = vunpack.c.h.b16 %v256
    %v565 = vunpack.c.l.b16 %v257
    %v566 = vunpack.c.h.b16 %v257
    %v567 = vunpack.c.l.b16 %v258
    %v568 = vunpack.c.h.b16 %v258
    %v569 = vunpack.c.l.b16 %v259
    %v570 = vunpack.c.h.b16 %v259
    %v571 = vunpack.c.l.b16 %v260
    %v572 = vunpack.c.h.b16 %v260
    %v573 = vunpack.c.l.b16 %v261
    %v574 = vunpack.c.h.b16 %v261
    %v575 = vunpack.c.l.b16 %v262
    %v576 = vunpack.c.h.b16 %v262
    %v577 = vpack.c.b16 %v391, %v385
    %v578 = vpack.c.b16 %v392, %v386
    %v579 = vpack.c.b16 %v393, %v387
    %v580 = vpack.c.b16 %v394, %v388
    %v581 = vpack.c.b16 %v395, %v389
    %v582 = vpack.c.b16 %v396, %v390
    %v583 = vpack.c.b16 %v403, %v397
    %v584 = vpack.c.b16 %v404, %v398
    %v585 = vpack.c.b16 %v405, %v399
    %v586 = vpack.c.b16 %v406, %v400
    %v587 = vpack.c.b16 %v407, %v401
    %v588 = vpack.c.b16 %v408, %v402
    %v589 = vpack.c.b16 %v415, %v409
    %v590 = vpack.c.b16 %v416, %v410
    %v591 = vpack.c.b16 %v417, %v411
    %v592 = vpack.c.b16 %v418, %v412
    %v593 = vpack.c.b16 %v419, %v413
    %v594 = vpack.c.b16 %v420, %v414
    %v595 = vpack.c.b16 %v427, %v421
    %v596 = vpack.c.b16 %v428, %v422
    %v597 = vpack.c.b16 %v429, %v423
    %v598 = vpack.c.b16 %v430, %v424
    %v599 = vpack.c.b16 %v431, %v425
    %v600 = vpack.c.b16 %v432, %v426
    %v601 = vpack.c.b16 %v439, %v433
    %v602 = vpack.c.b16 %v440, %v434
    %v603 = vpack.c.b16 %v441, %v435
    %v604 = vpack.c.b16 %v442, %v436
    %v605 = vpack.c.b16 %v443, %v437
    %v606 = vpack.c.b16 %v444, %v438
    %v607 = vpack.c.b16 %v451, %v445
    %v608 = vpack.c.b16 %v452, %v446
    %v609 = vpack.c.b16 %v453, %v447
    %v610 = vpack.c.b16 %v454, %v448
    %v611 = vpack.c.b16 %v455, %v449
    %v612 = vpack.c.b16 %v456, %v450
    %v613 = vpack.c.b16 %v463, %v457
    %v614 = vpack.c.b16 %v464, %v458
    %v615 = vpack.c.b16 %v465, %v459
    %v616 = vpack.c.b16 %v466, %v460
    %v617 = vpack.c.b16 %v467, %v461
    %v618 = vpack.c.b16 %v468, %v462
    %v619 = vpack.c.b16 %v475, %v469
    %v620 = vpack.c.b16 %v476, %v470
    %v621 = vpack.c.b16 %v477, %v471
    %v622 = vpack.c.b16 %v478, %v472
    %v623 = vpack.c.b16 %v479, %v473
    %v624 = vpack.c.b16 %v480, %v474
    %v625 = vpack.c.b16 %v487, %v481
    %v626 = vpack.c.b16 %v488, %v482
    %v627 = vpack.c.b16 %v489, %v483
    %v628 = vpack.c.b16 %v490, %v484
    %v629 = vpack.c.b16 %v491, %v485
    %v630 = vpack.c.b16 %v492, %v486
    %v631 = vpack.c.b16 %v499, %v493
    %v632 = vpack.c.b16 %v500, %v494
    %v633 = vpack.c.b16 %v501, %v495
    %v634 = vpack.c.b16 %v502, %v496
    %v635 = vpack.c.b16 %v503, %v497
    %v636 = vpack.c.b16 %v504, %v498
    %v637 = vpack.c.b16 %v511, %v505
    %v638 = vpack.c.b16 %v512, %v506
    %v639 = vpack.c.b16 %v513, %v507
    %v640 = vpack.c.b16 %v514, %v508
    %v641 = vpack.c.b16 %v515, %v509
    %v642 = vpack.c.b16 %v516, %v510
    %v643 = vpack.c.b16 %v523, %v517
    %v644 = vpack.c.b16 %v524, %v518
    %v645 = vpack.c.b16 %v525, %v519
    %v646 = vpack.c.b16 %v526, %v520
    %v647 = vpack.c.b16 %v527, %v521
    %v648 = vpack.c.b16 %v528, %v522
    %v649 = vpack.c.b16 %v535, %v529
    %v650 = vpack.c.b16 %v536, %v530
    %v651 = vpack.c.b16 %v537, %v531
    %v652 = vpack.c.b16 %v538, %v532
    %v653 = vpack.c.b16 %v539, %v533
    %v654 = vpack.c.b16 %v540, %v534
    %v655 = vpack.c.b16 %v547, %v541
    %v656 = vpack.c.b16 %v548, %v542
    %v657 = vpack.c.b16 %v549, %v543
    %v658 = vpack.c.b16 %v550, %v544
    %v659 = vpack.c.b16 %v551, %v545
    %v660 = vpack.c.b16 %v552, %v546
    %v661 = vpack.c.b16 %v559, %v553
    %v662 = vpack.c.b16 %v560, %v554
    %v663 = vpack.c.b16 %v561, %v555
    %v664 = vpack.c.b16 %v562, %v556
    %v665 = vpack.c.b16 %v563, %v557
    %v666 = vpack.c.b16 %v564, %v558
    %v667 = vpack.c.b16 %v571, %v565
    %v668 = vpack.c.b16 %v572, %v566
    %v669 = vpack.c.b16 %v573, %v567
    %v670 = vpack.c.b16 %v574, %v568
    %v671 = vpack.c.b16 %v575, %v569
    %v672 = vpack.c.b16 %v576, %v570
    %769 = vmatprep.subr.bf16.mxu0 %v578
    %770 = vmatpush1.bf16.msra.mxu0 %v577
    %771 = vmatprep.subr.bf16.mxu0 %v584
    %772 = vmatpush1.bf16.msra.mxu0 %v583
    %773 = vmatprep.subr.bf16.mxu0 %v590
    %774 = vmatpush1.bf16.msra.mxu0 %v589
    %775 = vmatprep.subr.bf16.mxu0 %v596
    %776 = vmatpush1.bf16.msra.mxu0 %v595
    %777 = vmatprep.subr.bf16.mxu0 %v602
    %778 = vmatpush1.bf16.msra.mxu0 %v601
    %779 = vmatprep.subr.bf16.mxu0 %v608
    %780 = vmatpush1.bf16.msra.mxu0 %v607
    %781 = vmatprep.subr.bf16.mxu0 %v614
    %782 = vmatpush1.bf16.msra.mxu0 %v613
    %783 = vmatprep.subr.bf16.mxu0 %v620
    %784 = vmatpush1.bf16.msra.mxu0 %v619
    %785 = vmatprep.subr.bf16.mxu0 %v626
    %786 = vmatpush1.bf16.msra.mxu0 %v625
    %787 = vmatprep.subr.bf16.mxu0 %v632
    %788 = vmatpush1.bf16.msra.mxu0 %v631
    %789 = vmatprep.subr.bf16.mxu0 %v638
    %790 = vmatpush1.bf16.msra.mxu0 %v637
    %791 = vmatprep.subr.bf16.mxu0 %v644
    %792 = vmatpush1.bf16.msra.mxu0 %v643
    %793 = vmatprep.subr.bf16.mxu0 %v650
    %794 = vmatpush1.bf16.msra.mxu0 %v649
    %795 = vmatprep.subr.bf16.mxu0 %v656
    %796 = vmatpush1.bf16.msra.mxu0 %v655
    %797 = vmatprep.subr.bf16.mxu0 %v662
    %798 = vmatpush1.bf16.msra.mxu0 %v661
    %799 = vmatprep.subr.bf16.mxu0 %v668
    %800 = vmatpush1.bf16.msra.mxu0 %v667
    %801 = vmatprep.mubr.bf16.mxu0 %v264
    %802 = vmatmul.mubr.bf16.gmra.mrb[0].mxu0 %v263
    %v803 = vpop.f32.mrb[0].mxu0
    %v804 = vadd.f32 %v268, %v803
    %v805 = vpop.f32.mrb[0].mxu0
    %v806 = vadd.f32 %v272, %v805
    %v807 = vpop.f32.mrb[0].mxu0
    %v808 = vadd.f32 %v268, %v807
    %v809 = vpop.f32.mrb[0].mxu0
    %v810 = vadd.f32 %v272, %v809
    %811 = vdwg.mxu0
    %812 = vmatprep.subr.bf16.mxu0 %v580
    %813 = vmatpush1.bf16.msra.mxu0 %v579
    %814 = vmatprep.subr.bf16.mxu0 %v586
    %815 = vmatpush1.bf16.msra.mxu0 %v585
    %816 = vmatprep.subr.bf16.mxu0 %v592
    %817 = vmatpush1.bf16.msra.mxu0 %v591
    %818 = vmatprep.subr.bf16.mxu0 %v598
    %819 = vmatpush1.bf16.msra.mxu0 %v597
    %820 = vmatprep.subr.bf16.mxu0 %v604
    %821 = vmatpush1.bf16.msra.mxu0 %v603
    %822 = vmatprep.subr.bf16.mxu0 %v610
    %823 = vmatpush1.bf16.msra.mxu0 %v609
    %824 = vmatprep.subr.bf16.mxu0 %v616
    %825 = vmatpush1.bf16.msra.mxu0 %v615
    %826 = vmatprep.subr.bf16.mxu0 %v622
    %827 = vmatpush1.bf16.msra.mxu0 %v621
    %828 = vmatprep.subr.bf16.mxu0 %v628
    %829 = vmatpush1.bf16.msra.mxu0 %v627
    %830 = vmatprep.subr.bf16.mxu0 %v634
    %831 = vmatpush1.bf16.msra.mxu0 %v633
    %832 = vmatprep.subr.bf16.mxu0 %v640
    %833 = vmatpush1.bf16.msra.mxu0 %v639
    %834 = vmatprep.subr.bf16.mxu0 %v646
    %835 = vmatpush1.bf16.msra.mxu0 %v645
    %836 = vmatprep.subr.bf16.mxu0 %v652
    %837 = vmatpush1.bf16.msra.mxu0 %v651
    %838 = vmatprep.subr.bf16.mxu0 %v658
    %839 = vmatpush1.bf16.msra.mxu0 %v657
    %840 = vmatprep.subr.bf16.mxu0 %v664
    %841 = vmatpush1.bf16.msra.mxu0 %v663
    %842 = vmatprep.subr.bf16.mxu0 %v670
    %843 = vmatpush1.bf16.msra.mxu0 %v669
    %844 = vmatprep.mubr.bf16.mxu0 %v264
    %845 = vmatmul.mubr.bf16.gmra.mrb[0].mxu0 %v263
    %v846 = vpop.f32.mrb[0].mxu0
    %v847 = vadd.f32 %v276, %v846
    %v848 = vpop.f32.mrb[0].mxu0
    %v849 = vadd.f32 %v280, %v848
    %v850 = vpop.f32.mrb[0].mxu0
    %v851 = vadd.f32 %v276, %v850
    %v852 = vpop.f32.mrb[0].mxu0
    %v853 = vadd.f32 %v280, %v852
    %854 = vdwg.mxu0
    %855 = vmatprep.subr.bf16.mxu0 %v582
    %856 = vmatpush1.bf16.msra.mxu0 %v581
    %857 = vmatprep.subr.bf16.mxu0 %v588
    %858 = vmatpush1.bf16.msra.mxu0 %v587
    %859 = vmatprep.subr.bf16.mxu0 %v594
    %860 = vmatpush1.bf16.msra.mxu0 %v593
    %861 = vmatprep.subr.bf16.mxu0 %v600
    %862 = vmatpush1.bf16.msra.mxu0 %v599
    %863 = vmatprep.subr.bf16.mxu0 %v606
    %864 = vmatpush1.bf16.msra.mxu0 %v605
    %865 = vmatprep.subr.bf16.mxu0 %v612
    %866 = vmatpush1.bf16.msra.mxu0 %v611
    %867 = vmatprep.subr.bf16.mxu0 %v618
    %868 = vmatpush1.bf16.msra.mxu0 %v617
    %869 = vmatprep.subr.bf16.mxu0 %v624
    %870 = vmatpush1.bf16.msra.mxu0 %v623
    %871 = vmatprep.subr.bf16.mxu0 %v630
    %872 = vmatpush1.bf16.msra.mxu0 %v629
    %873 = vmatprep.subr.bf16.mxu0 %v636
    %874 = vmatpush1.bf16.msra.mxu0 %v635
    %875 = vmatprep.subr.bf16.mxu0 %v642
    %876 = vmatpush1.bf16.msra.mxu0 %v641
    %877 = vmatprep.subr.bf16.mxu0 %v648
    %878 = vmatpush1.bf16.msra.mxu0 %v647
    %879 = vmatprep.subr.bf16.mxu0 %v654
    %880 = vmatpush1.bf16.msra.mxu0 %v653
    %881 = vmatprep.subr.bf16.mxu0 %v660
    %882 = vmatpush1.bf16.msra.mxu0 %v659
    %883 = vmatprep.subr.bf16.mxu0 %v666
    %884 = vmatpush1.bf16.msra.mxu0 %v665
    %885 = vmatprep.subr.bf16.mxu0 %v672
    %886 = vmatpush1.bf16.msra.mxu0 %v671
    %887 = vmatprep.mubr.bf16.mxu0 %v264
    %888 = vmatmul.mubr.bf16.gmra.mrb[0].mxu0 %v263
    %v889 = vpop.f32.mrb[0].mxu0
    %v890 = vadd.f32 %v284, %v889
    %v891 = vpop.f32.mrb[0].mxu0
    %v892 = vadd.f32 %v288, %v891
    %v893 = vpop.f32.mrb[0].mxu0
    %v894 = vadd.f32 %v284, %v893
    %v895 = vpop.f32.mrb[0].mxu0
    %v896 = vadd.f32 %v288, %v895
    %897 = vdwg.mxu0
    %v898 = vld [vmem:[%s1] sm:$0x3]
    %v899 = vsub.f32 1.0, %v898
    %v900 = vmul.f32 %v899, -1e+09
    %v901 = vlaneseq
    %v902 = vshrl.u32 %v901, 7
    %v903 = vlaneseq
    %v904 = vand.u32 %v903, 127
    %vm905 = vcmp.ge.s32.totalorder %v902, %v904
    %906 = vmatprep.subr.mxu0 0.0
    %907 = vmatpush1.xpose.msra.mxu0 %v847
    %908 = vmatprep.subr.mxu0 0.0
    %909 = vmatpush1.xpose.msra.mxu0 0.0
    %910 = vmatprep.subr.mxu0 0.0
    %911 = vmatpush1.xpose.msra.mxu0 0.0
    %912 = vmatprep.subr.mxu0 0.0
    %913 = vmatpush1.xpose.msra.mxu0 0.0
    %914 = vmatprep.subr.mxu0 0.0
    %915 = vmatpush1.xpose.msra.mxu0 0.0
    %916 = vmatprep.subr.mxu0 0.0
    %917 = vmatpush1.xpose.msra.mxu0 0.0
    %918 = vmatprep.subr.mxu0 0.0
    %919 = vmatpush1.xpose.msra.mxu0 0.0
    %920 = vmatprep.subr.mxu0 0.0
    %921 = vmatpush1.xpose.msra.mxu0 0.0
    %922 = vmatprep.subr.mxu0 0.0
    %923 = vmatpush1.xpose.msra.mxu0 0.0
    %924 = vmatprep.subr.mxu0 0.0
    %925 = vmatpush1.xpose.msra.mxu0 0.0
    %926 = vmatprep.subr.mxu0 0.0
    %927 = vmatpush1.xpose.msra.mxu0 0.0
    %928 = vmatprep.subr.mxu0 0.0
    %929 = vmatpush1.xpose.msra.mxu0 0.0
    %930 = vmatprep.subr.mxu0 0.0
    %931 = vmatpush1.xpose.msra.mxu0 0.0
    %932 = vmatprep.subr.mxu0 0.0
    %933 = vmatpush1.xpose.msra.mxu0 0.0
    %934 = vmatprep.subr.mxu0 0.0
    %935 = vmatpush1.xpose.msra.mxu0 0.0
    %936 = vmatprep.subr.mxu0 0.0
    %937 = vmatpush1.xpose.msra.mxu0 0.0
    %938 = vmatprep.subr.mxu0 0.0
    %939 = vmatpush1.xpose.msra.mxu0 0.0
    %940 = vmatprep.subr.mxu0 0.0
    %941 = vmatpush1.xpose.msra.mxu0 0.0
    %942 = vmatprep.subr.mxu0 0.0
    %943 = vmatpush1.xpose.msra.mxu0 0.0
    %944 = vmatprep.subr.mxu0 0.0
    %945 = vmatpush1.xpose.msra.mxu0 0.0
    %946 = vmatprep.subr.mxu0 0.0
    %947 = vmatpush1.xpose.msra.mxu0 0.0
    %948 = vmatprep.subr.mxu0 0.0
    %949 = vmatpush1.xpose.msra.mxu0 0.0
    %950 = vmatprep.subr.mxu0 0.0
    %951 = vmatpush1.xpose.msra.mxu0 0.0
    %952 = vmatprep.subr.mxu0 0.0
    %953 = vmatpush1.xpose.msra.mxu0 0.0
    %954 = vmatprep.subr.mxu0 0.0
    %955 = vmatpush1.xpose.msra.mxu0 0.0
    %956 = vmatprep.subr.mxu0 0.0
    %957 = vmatpush1.xpose.msra.mxu0 0.0
    %958 = vmatprep.subr.mxu0 0.0
    %959 = vmatpush1.xpose.msra.mxu0 0.0
    %960 = vmatprep.subr.mxu0 0.0
    %961 = vmatpush1.xpose.msra.mxu0 0.0
    %962 = vmatprep.subr.mxu0 0.0
    %963 = vmatpush1.xpose.msra.mxu0 0.0
    %964 = vmatprep.subr.mxu0 0.0
    %965 = vmatpush1.xpose.msra.mxu0 0.0
    %966 = vmatprep.subr.mxu0 0.0
    %967 = vmatpush1.xpose.msra.mxu0 0.0
    %968 = vmatprep.subr.mxu0 0.0
    %969 = vmatpush1.xpose.msra.mxu0 0.0
    %970 = vmatprep.mubr.f32.mxu0 0.0
    %971 = vmatmul.mubr.f32.gmra.mrb[0].mxu0 %v804
    %v972 = vpop.f32.mrb[0].mxu0
    %v973 = vadd.f32 0.0, %v972
    %v974 = vpop.f32.mrb[0].mxu0
    %975 = vdwg.mxu0
    %v976 = vmul.f32 %v973, 0.088388346
    %v977 = vlaneseq
    %v978 = vshrl.u32 %v977, 7
    %v979 = vsub.s32 0, %v978
    %v980 = vrot.slane %v900, %v979
    %v981 = vadd.f32 %v976, %v980
    %v982 = vsel %vm905, %v981, -1e+09
    %vm983 = vcmask 64512
    %v984 = vsel %vm983, %v982, -inf
    %985 = vmax.xlane.f32.xlu0 %v984
    %v986 = vpop.xlane.xlu0 %985
    %v987 = vsub.f32 %v982, %v986
    %v988 = vmul.f32 %v987, 1.442695
    %v989 = vpow.pop %v988
    %v990 = vsel %vm983, %v989, 0.0
    %991 = vadd.xlane.f32.xlu0 %v990
    %v992 = vpop.xlane.xlu0 %991
    %v993 = vrcp.pop %v992
    %v994 = vmul.f32 %v989, %v993
    %v995 = vadd.f32 %v994, 0.0
    %v997 = vsel %vm983, %v994, 0
    %999 = vmatprep.subr.mxu0 0.0
    %1000 = vmatpush1.msra.mxu0 %v890
    %1001 = vmatprep.subr.mxu0 0.0
    %1002 = vmatpush1.msra.mxu0 0.0
    %1003 = vmatprep.subr.mxu0 0.0
    %1004 = vmatpush1.msra.mxu0 0.0
    %1005 = vmatprep.subr.mxu0 0.0
    %1006 = vmatpush1.msra.mxu0 0.0
    %1007 = vmatprep.subr.mxu0 0.0
    %1008 = vmatpush1.msra.mxu0 0.0
    %1009 = vmatprep.subr.mxu0 0.0
    %1010 = vmatpush1.msra.mxu0 0.0
    %1011 = vmatprep.subr.mxu0 0.0
    %1012 = vmatpush1.msra.mxu0 0.0
    %1013 = vmatprep.subr.mxu0 0.0
    %1014 = vmatpush1.msra.mxu0 0.0
    %1015 = vmatprep.subr.mxu0 0.0
    %1016 = vmatpush1.msra.mxu0 0.0
    %1017 = vmatprep.subr.mxu0 0.0
    %1018 = vmatpush1.msra.mxu0 0.0
    %1019 = vmatprep.subr.mxu0 0.0
    %1020 = vmatpush1.msra.mxu0 0.0
    %1021 = vmatprep.subr.mxu0 0.0
    %1022 = vmatpush1.msra.mxu0 0.0
    %1023 = vmatprep.subr.mxu0 0.0
    %1024 = vmatpush1.msra.mxu0 0.0
    %1025 = vmatprep.subr.mxu0 0.0
    %1026 = vmatpush1.msra.mxu0 0.0
    %1027 = vmatprep.subr.mxu0 0.0
    %1028 = vmatpush1.msra.mxu0 0.0
    %1029 = vmatprep.subr.mxu0 0.0
    %1030 = vmatpush1.msra.mxu0 0.0
    %1031 = vmatprep.subr.mxu0 0.0
    %1032 = vmatpush1.msra.mxu0 0.0
    %1033 = vmatprep.subr.mxu0 0.0
    %1034 = vmatpush1.msra.mxu0 0.0
    %1035 = vmatprep.subr.mxu0 0.0
    %1036 = vmatpush1.msra.mxu0 0.0
    %1037 = vmatprep.subr.mxu0 0.0
    %1038 = vmatpush1.msra.mxu0 0.0
    %1039 = vmatprep.subr.mxu0 0.0
    %1040 = vmatpush1.msra.mxu0 0.0
    %1041 = vmatprep.subr.mxu0 0.0
    %1042 = vmatpush1.msra.mxu0 0.0
    %1043 = vmatprep.subr.mxu0 0.0
    %1044 = vmatpush1.msra.mxu0 0.0
    %1045 = vmatprep.subr.mxu0 0.0
    %1046 = vmatpush1.msra.mxu0 0.0
    %1047 = vmatprep.subr.mxu0 0.0
    %1048 = vmatpush1.msra.mxu0 0.0
    %1049 = vmatprep.subr.mxu0 0.0
    %1050 = vmatpush1.msra.mxu0 0.0
    %1051 = vmatprep.subr.mxu0 0.0
    %1052 = vmatpush1.msra.mxu0 0.0
    %1053 = vmatprep.subr.mxu0 0.0
    %1054 = vmatpush1.msra.mxu0 0.0
    %1055 = vmatprep.subr.mxu0 0.0
    %1056 = vmatpush1.msra.mxu0 0.0
    %1057 = vmatprep.subr.mxu0 0.0
    %1058 = vmatpush1.msra.mxu0 0.0
    %1059 = vmatprep.subr.mxu0 0.0
    %1060 = vmatpush1.msra.mxu0 0.0
    %1061 = vmatprep.subr.mxu0 0.0
    %1062 = vmatpush1.msra.mxu0 0.0
    %1063 = vmatprep.mubr.f32.mxu0 0.0
    %1064 = vmatmul.mubr.f32.gmra.mrb[0].mxu0 %v997
    %v1065 = vpop.f32.mrb[0].mxu0
    %v1066 = vadd.f32 0.0, %v1065
    %v1067 = vpop.f32.mrb[0].mxu0
    %1068 = vdwg.mxu0
    %v1069 = vld [vmem:[#allocation7 + $0x18] sm:$0xff]
    %v1070 = vld [vmem:[#allocation7 + $0x38] sm:$0xff]
    %v1071 = vld [vmem:[#allocation7 + $0x58] sm:$0xff]
    %v1072 = vld [vmem:[#allocation7 + $0x78] sm:$0xff]
    %v1073 = vld [vmem:[#allocation7 + $0x98] sm:$0xff]
    %v1074 = vld [vmem:[#allocation7 + $0xb8] sm:$0xff]
    %v1075 = vld [vmem:[#allocation7 + $0xd8] sm:$0xff]
    %v1076 = vld [vmem:[#allocation7 + $0xf8] sm:$0xff]
    %v1077 = vld [vmem:[#allocation7 + $0x118] sm:$0xff]
    %v1078 = vld [vmem:[#allocation7 + $0x138] sm:$0xff]
    %v1079 = vld [vmem:[#allocation7 + $0x158] sm:$0xff]
    %v1080 = vld [vmem:[#allocation7 + $0x178] sm:$0xff]
    %v1081 = vld [vmem:[#allocation7 + $0x198] sm:$0xff]
    %v1082 = vld [vmem:[#allocation7 + $0x1b8] sm:$0xff]
    %v1083 = vld [vmem:[#allocation7 + $0x1d8] sm:$0xff]
    %v1084 = vld [vmem:[#allocation7 + $0x1f8] sm:$0xff]
    %v1085 = vpack.c.bf16 %v1066, %v1066
    %1086 = vmatprep.subr.mxu0 0.0
    %1087 = vmatpush1.xpose.msra.mxu0 %v849
    %1088 = vmatprep.subr.mxu0 0.0
    %1089 = vmatpush1.xpose.msra.mxu0 0.0
    %1090 = vmatprep.subr.mxu0 0.0
    %1091 = vmatpush1.xpose.msra.mxu0 0.0
    %1092 = vmatprep.subr.mxu0 0.0
    %1093 = vmatpush1.xpose.msra.mxu0 0.0
    %1094 = vmatprep.subr.mxu0 0.0
    %1095 = vmatpush1.xpose.msra.mxu0 0.0
    %1096 = vmatprep.subr.mxu0 0.0
    %1097 = vmatpush1.xpose.msra.mxu0 0.0
    %1098 = vmatprep.subr.mxu0 0.0
    %1099 = vmatpush1.xpose.msra.mxu0 0.0
    %1100 = vmatprep.subr.mxu0 0.0
    %1101 = vmatpush1.xpose.msra.mxu0 0.0
    %1102 = vmatprep.subr.mxu0 0.0
    %1103 = vmatpush1.xpose.msra.mxu0 0.0
    %1104 = vmatprep.subr.mxu0 0.0
    %1105 = vmatpush1.xpose.msra.mxu0 0.0
    %1106 = vmatprep.subr.mxu0 0.0
    %1107 = vmatpush1.xpose.msra.mxu0 0.0
    %1108 = vmatprep.subr.mxu0 0.0
    %1109 = vmatpush1.xpose.msra.mxu0 0.0
    %1110 = vmatprep.subr.mxu0 0.0
    %1111 = vmatpush1.xpose.msra.mxu0 0.0
    %1112 = vmatprep.subr.mxu0 0.0
    %1113 = vmatpush1.xpose.msra.mxu0 0.0
    %1114 = vmatprep.subr.mxu0 0.0
    %1115 = vmatpush1.xpose.msra.mxu0 0.0
    %1116 = vmatprep.subr.mxu0 0.0
    %1117 = vmatpush1.xpose.msra.mxu0 0.0
    %1118 = vmatprep.subr.mxu0 0.0
    %1119 = vmatpush1.xpose.msra.mxu0 0.0
    %1120 = vmatprep.subr.mxu0 0.0
    %1121 = vmatpush1.xpose.msra.mxu0 0.0
    %1122 = vmatprep.subr.mxu0 0.0
    %1123 = vmatpush1.xpose.msra.mxu0 0.0
    %1124 = vmatprep.subr.mxu0 0.0
    %1125 = vmatpush1.xpose.msra.mxu0 0.0
    %1126 = vmatprep.subr.mxu0 0.0
    %1127 = vmatpush1.xpose.msra.mxu0 0.0
    %1128 = vmatprep.subr.mxu0 0.0
    %1129 = vmatpush1.xpose.msra.mxu0 0.0
    %1130 = vmatprep.subr.mxu0 0.0
    %1131 = vmatpush1.xpose.msra.mxu0 0.0
    %1132 = vmatprep.subr.mxu0 0.0
    %1133 = vmatpush1.xpose.msra.mxu0 0.0
    %1134 = vmatprep.subr.mxu0 0.0
    %1135 = vmatpush1.xpose.msra.mxu0 0.0
    %1136 = vmatprep.subr.mxu0 0.0
    %1137 = vmatpush1.xpose.msra.mxu0 0.0
    %1138 = vmatprep.subr.mxu0 0.0
    %1139 = vmatpush1.xpose.msra.mxu0 0.0
    %1140 = vmatprep.subr.mxu0 0.0
    %1141 = vmatpush1.xpose.msra.mxu0 0.0
    %1142 = vmatprep.subr.mxu0 0.0
    %1143 = vmatpush1.xpose.msra.mxu0 0.0
    %1144 = vmatprep.subr.mxu0 0.0
    %1145 = vmatpush1.xpose.msra.mxu0 0.0
    %1146 = vmatprep.subr.mxu0 0.0
    %1147 = vmatpush1.xpose.msra.mxu0 0.0
    %1148 = vmatprep.subr.mxu0 0.0
    %1149 = vmatpush1.xpose.msra.mxu0 0.0
    %1150 = vmatprep.mubr.f32.mxu0 0.0
    %1151 = vmatmul.mubr.f32.gmra.mrb[0].mxu0 %v806
    %v1152 = vpop.f32.mrb[0].mxu0
    %v1153 = vadd.f32 0.0, %v1152
    %v1154 = vpop.f32.mrb[0].mxu0
    %1155 = vdwg.mxu0
    %v1156 = vmul.f32 %v1153, 0.088388346
    %v1157 = vadd.f32 %v1156, %v980
    %v1158 = vsel %vm905, %v1157, -1e+09
    %v1159 = vsel %vm983, %v1158, -inf
    %1160 = vmax.xlane.f32.xlu0 %v1159
    %v1161 = vpop.xlane.xlu0 %1160
    %v1162 = vsub.f32 %v1158, %v1161
    %v1163 = vmul.f32 %v1162, 1.442695
    %v1164 = vpow.pop %v1163
    %v1165 = vsel %vm983, %v1164, 0.0
    %1166 = vadd.xlane.f32.xlu0 %v1165
    %v1167 = vpop.xlane.xlu0 %1166
    %v1168 = vrcp.pop %v1167
    %v1169 = vmul.f32 %v1164, %v1168
    %v1170 = vadd.f32 %v995, %v1169
    %v1172 = vsel %vm983, %v1169, 0
    %1174 = vmatprep.subr.mxu0 0.0
    %1175 = vmatpush1.msra.mxu0 %v892
    %1176 = vmatprep.subr.mxu0 0.0
    %1177 = vmatpush1.msra.mxu0 0.0
    %1178 = vmatprep.subr.mxu0 0.0
    %1179 = vmatpush1.msra.mxu0 0.0
    %1180 = vmatprep.subr.mxu0 0.0
    %1181 = vmatpush1.msra.mxu0 0.0
    %1182 = vmatprep.subr.mxu0 0.0
    %1183 = vmatpush1.msra.mxu0 0.0
    %1184 = vmatprep.subr.mxu0 0.0
    %1185 = vmatpush1.msra.mxu0 0.0
    %1186 = vmatprep.subr.mxu0 0.0
    %1187 = vmatpush1.msra.mxu0 0.0
    %1188 = vmatprep.subr.mxu0 0.0
    %1189 = vmatpush1.msra.mxu0 0.0
    %1190 = vmatprep.subr.mxu0 0.0
    %1191 = vmatpush1.msra.mxu0 0.0
    %1192 = vmatprep.subr.mxu0 0.0
    %1193 = vmatpush1.msra.mxu0 0.0
    %1194 = vmatprep.subr.mxu0 0.0
    %1195 = vmatpush1.msra.mxu0 0.0
    %1196 = vmatprep.subr.mxu0 0.0
    %1197 = vmatpush1.msra.mxu0 0.0
    %1198 = vmatprep.subr.mxu0 0.0
    %1199 = vmatpush1.msra.mxu0 0.0
    %1200 = vmatprep.subr.mxu0 0.0
    %1201 = vmatpush1.msra.mxu0 0.0
    %1202 = vmatprep.subr.mxu0 0.0
    %1203 = vmatpush1.msra.mxu0 0.0
    %1204 = vmatprep.subr.mxu0 0.0
    %1205 = vmatpush1.msra.mxu0 0.0
    %1206 = vmatprep.subr.mxu0 0.0
    %1207 = vmatpush1.msra.mxu0 0.0
    %1208 = vmatprep.subr.mxu0 0.0
    %1209 = vmatpush1.msra.mxu0 0.0
    %1210 = vmatprep.subr.mxu0 0.0
    %1211 = vmatpush1.msra.mxu0 0.0
    %1212 = vmatprep.subr.mxu0 0.0
    %1213 = vmatpush1.msra.mxu0 0.0
    %1214 = vmatprep.subr.mxu0 0.0
    %1215 = vmatpush1.msra.mxu0 0.0
    %1216 = vmatprep.subr.mxu0 0.0
    %1217 = vmatpush1.msra.mxu0 0.0
    %1218 = vmatprep.subr.mxu0 0.0
    %1219 = vmatpush1.msra.mxu0 0.0
    %1220 = vmatprep.subr.mxu0 0.0
    %1221 = vmatpush1.msra.mxu0 0.0
    %1222 = vmatprep.subr.mxu0 0.0
    %1223 = vmatpush1.msra.mxu0 0.0
    %1224 = vmatprep.subr.mxu0 0.0
    %1225 = vmatpush1.msra.mxu0 0.0
    %1226 = vmatprep.subr.mxu0 0.0
    %1227 = vmatpush1.msra.mxu0 0.0
    %1228 = vmatprep.subr.mxu0 0.0
    %1229 = vmatpush1.msra.mxu0 0.0
    %1230 = vmatprep.subr.mxu0 0.0
    %1231 = vmatpush1.msra.mxu0 0.0
    %1232 = vmatprep.subr.mxu0 0.0
    %1233 = vmatpush1.msra.mxu0 0.0
    %1234 = vmatprep.subr.mxu0 0.0
    %1235 = vmatpush1.msra.mxu0 0.0
    %1236 = vmatprep.subr.mxu0 0.0
    %1237 = vmatpush1.msra.mxu0 0.0
    %1238 = vmatprep.mubr.f32.mxu0 0.0
    %1239 = vmatmul.mubr.f32.gmra.mrb[0].mxu0 %v1172
    %v1240 = vpop.f32.mrb[0].mxu0
    %v1241 = vadd.f32 0.0, %v1240
    %v1242 = vpop.f32.mrb[0].mxu0
    %1243 = vdwg.mxu0
    %v1244 = vld [vmem:[#allocation7 + $0x218] sm:$0xff]
    %v1245 = vld [vmem:[#allocation7 + $0x238] sm:$0xff]
    %v1246 = vld [vmem:[#allocation7 + $0x258] sm:$0xff]
    %v1247 = vld [vmem:[#allocation7 + $0x278] sm:$0xff]
    %v1248 = vld [vmem:[#allocation7 + $0x298] sm:$0xff]
    %v1249 = vld [vmem:[#allocation7 + $0x2b8] sm:$0xff]
    %v1250 = vld [vmem:[#allocation7 + $0x2d8] sm:$0xff]
    %v1251 = vld [vmem:[#allocation7 + $0x2f8] sm:$0xff]
    %v1252 = vld [vmem:[#allocation7 + $0x318] sm:$0xff]
    %v1253 = vld [vmem:[#allocation7 + $0x338] sm:$0xff]
    %v1254 = vld [vmem:[#allocation7 + $0x358] sm:$0xff]
    %v1255 = vld [vmem:[#allocation7 + $0x378] sm:$0xff]
    %v1256 = vld [vmem:[#allocation7 + $0x398] sm:$0xff]
    %v1257 = vld [vmem:[#allocation7 + $0x3b8] sm:$0xff]
    %v1258 = vld [vmem:[#allocation7 + $0x3d8] sm:$0xff]
    %v1259 = vld [vmem:[#allocation7 + $0x3f8] sm:$0xff]
    %v1260 = vpack.c.bf16 %v1241, %v1241
    %v1277 = vunpack.c.l.b16 %v1244
    %v1278 = vunpack.c.h.b16 %v1244
    %v1279 = vunpack.c.l.b16 %v1245
    %v1280 = vunpack.c.h.b16 %v1245
    %v1281 = vunpack.c.l.b16 %v1246
    %v1282 = vunpack.c.h.b16 %v1246
    %v1283 = vunpack.c.l.b16 %v1247
    %v1284 = vunpack.c.h.b16 %v1247
    %v1285 = vunpack.c.l.b16 %v1248
    %v1286 = vunpack.c.h.b16 %v1248
    %v1287 = vunpack.c.l.b16 %v1249
    %v1288 = vunpack.c.h.b16 %v1249
    %v1289 = vunpack.c.l.b16 %v1250
    %v1290 = vunpack.c.h.b16 %v1250
    %v1291 = vunpack.c.l.b16 %v1251
    %v1292 = vunpack.c.h.b16 %v1251
    %v1293 = vunpack.c.l.b16 %v1252
    %v1294 = vunpack.c.h.b16 %v1252
    %v1295 = vunpack.c.l.b16 %v1253
    %v1296 = vunpack.c.h.b16 %v1253
    %v1297 = vunpack.c.l.b16 %v1254
    %v1298 = vunpack.c.h.b16 %v1254
    %v1299 = vunpack.c.l.b16 %v1255
    %v1300 = vunpack.c.h.b16 %v1255
    %v1301 = vunpack.c.l.b16 %v1256
    %v1302 = vunpack.c.h.b16 %v1256
    %v1303 = vunpack.c.l.b16 %v1257
    %v1304 = vunpack.c.h.b16 %v1257
    %v1305 = vunpack.c.l.b16 %v1258
    %v1306 = vunpack.c.h.b16 %v1258
    %v1307 = vunpack.c.l.b16 %v1259
    %v1308 = vunpack.c.h.b16 %v1259
    %v1309 = vpack.c.b16 %v1279, %v1277
    %v1310 = vpack.c.b16 %v1280, %v1278
    %v1311 = vpack.c.b16 %v1283, %v1281
    %v1312 = vpack.c.b16 %v1284, %v1282
    %v1313 = vpack.c.b16 %v1287, %v1285
    %v1314 = vpack.c.b16 %v1288, %v1286
    %v1315 = vpack.c.b16 %v1291, %v1289
    %v1316 = vpack.c.b16 %v1292, %v1290
    %v1317 = vpack.c.b16 %v1295, %v1293
    %v1318 = vpack.c.b16 %v1296, %v1294
    %v1319 = vpack.c.b16 %v1299, %v1297
    %v1320 = vpack.c.b16 %v1300, %v1298
    %v1321 = vpack.c.b16 %v1303, %v1301
    %v1322 = vpack.c.b16 %v1304, %v1302
    %v1323 = vpack.c.b16 %v1307, %v1305
    %v1324 = vpack.c.b16 %v1308, %v1306
    %1341 = vmatprep.subr.bf16.mxu0 %v1310
    %1342 = vmatpush1.bf16.msra.mxu0 %v1309
    %1343 = vmatprep.subr.bf16.mxu0 %v1312
    %1344 = vmatpush1.bf16.msra.mxu0 %v1311
    %1345 = vmatprep.subr.bf16.mxu0 %v1314
    %1346 = vmatpush1.bf16.msra.mxu0 %v1313
    %1347 = vmatprep.subr.bf16.mxu0 %v1316
    %1348 = vmatpush1.bf16.msra.mxu0 %v1315
    %1349 = vmatprep.subr.bf16.mxu0 %v1318
    %1350 = vmatpush1.bf16.msra.mxu0 %v1317
    %1351 = vmatprep.subr.bf16.mxu0 %v1320
    %1352 = vmatpush1.bf16.msra.mxu0 %v1319
    %1353 = vmatprep.subr.bf16.mxu0 %v1322
    %1354 = vmatpush1.bf16.msra.mxu0 %v1321
    %1355 = vmatprep.subr.bf16.mxu0 %v1324
    %1356 = vmatpush1.bf16.msra.mxu0 %v1323
    %1357 = vmatprep.subr.bf16.mxu0 0
    %1358 = vmatpush1.bf16.msra.mxu0 0
    %1359 = vmatprep.subr.bf16.mxu0 0
    %1360 = vmatpush1.bf16.msra.mxu0 0
    %1361 = vmatprep.subr.bf16.mxu0 0
    %1362 = vmatpush1.bf16.msra.mxu0 0
    %1363 = vmatprep.subr.bf16.mxu0 0
    %1364 = vmatpush1.bf16.msra.mxu0 0
    %1365 = vmatprep.subr.bf16.mxu0 0
    %1366 = vmatpush1.bf16.msra.mxu0 0
    %1367 = vmatprep.subr.bf16.mxu0 0
    %1368 = vmatpush1.bf16.msra.mxu0 0
    %1369 = vmatprep.subr.bf16.mxu0 0
    %1370 = vmatpush1.bf16.msra.mxu0 0
    %1371 = vmatprep.subr.bf16.mxu0 0
    %1372 = vmatpush1.bf16.msra.mxu0 0
    %1373 = vmatprep.mubr.bf16.mxu0 0
    %1374 = vmatmul.mubr.bf16.gmra.mrb[0].mxu0 %v1260
    %v1375 = vpop.f32.mrb[0].mxu0
    %v1376 = vadd.f32 0.0, %v1375
    %v1377 = vpop.f32.mrb[0].mxu0
    %v1378 = vadd.f32 0.0, %v1377
    %v1379 = vpop.f32.mrb[0].mxu0
    %v1380 = vpop.f32.mrb[0].mxu0
    %1381 = vdwg.mxu0
    %v1398 = vunpack.c.l.b16 %v1069
    %v1399 = vunpack.c.h.b16 %v1069
    %v1400 = vunpack.c.l.b16 %v1070
    %v1401 = vunpack.c.h.b16 %v1070
    %v1402 = vunpack.c.l.b16 %v1071
    %v1403 = vunpack.c.h.b16 %v1071
    %v1404 = vunpack.c.l.b16 %v1072
    %v1405 = vunpack.c.h.b16 %v1072
    %v1406 = vunpack.c.l.b16 %v1073
    %v1407 = vunpack.c.h.b16 %v1073
    %v1408 = vunpack.c.l.b16 %v1074
    %v1409 = vunpack.c.h.b16 %v1074
    %v1410 = vunpack.c.l.b16 %v1075
    %v1411 = vunpack.c.h.b16 %v1075
    %v1412 = vunpack.c.l.b16 %v1076
    %v1413 = vunpack.c.h.b16 %v1076
    %v1414 = vunpack.c.l.b16 %v1077
    %v1415 = vunpack.c.h.b16 %v1077
    %v1416 = vunpack.c.l.b16 %v1078
    %v1417 = vunpack.c.h.b16 %v1078
    %v1418 = vunpack.c.l.b16 %v1079
    %v1419 = vunpack.c.h.b16 %v1079
    %v1420 = vunpack.c.l.b16 %v1080
    %v1421 = vunpack.c.h.b16 %v1080
    %v1422 = vunpack.c.l.b16 %v1081
    %v1423 = vunpack.c.h.b16 %v1081
    %v1424 = vunpack.c.l.b16 %v1082
    %v1425 = vunpack.c.h.b16 %v1082
    %v1426 = vunpack.c.l.b16 %v1083
    %v1427 = vunpack.c.h.b16 %v1083
    %v1428 = vunpack.c.l.b16 %v1084
    %v1429 = vunpack.c.h.b16 %v1084
    %v1430 = vpack.c.b16 %v1400, %v1398
    %v1431 = vpack.c.b16 %v1401, %v1399
    %v1432 = vpack.c.b16 %v1404, %v1402
    %v1433 = vpack.c.b16 %v1405, %v1403
    %v1434 = vpack.c.b16 %v1408, %v1406
    %v1435 = vpack.c.b16 %v1409, %v1407
    %v1436 = vpack.c.b16 %v1412, %v1410
    %v1437 = vpack.c.b16 %v1413, %v1411
    %v1438 = vpack.c.b16 %v1416, %v1414
    %v1439 = vpack.c.b16 %v1417, %v1415
    %v1440 = vpack.c.b16 %v1420, %v1418
    %v1441 = vpack.c.b16 %v1421, %v1419
    %v1442 = vpack.c.b16 %v1424, %v1422
    %v1443 = vpack.c.b16 %v1425, %v1423
    %v1444 = vpack.c.b16 %v1428, %v1426
    %v1445 = vpack.c.b16 %v1429, %v1427
    %1462 = vmatprep.subr.bf16.mxu0 %v1431
    %1463 = vmatpush1.bf16.msra.mxu0 %v1430
    %1464 = vmatprep.subr.bf16.mxu0 %v1433
    %1465 = vmatpush1.bf16.msra.mxu0 %v1432
    %1466 = vmatprep.subr.bf16.mxu0 %v1435
    %1467 = vmatpush1.bf16.msra.mxu0 %v1434
    %1468 = vmatprep.subr.bf16.mxu0 %v1437
    %1469 = vmatpush1.bf16.msra.mxu0 %v1436
    %1470 = vmatprep.subr.bf16.mxu0 %v1439
    %1471 = vmatpush1.bf16.msra.mxu0 %v1438
    %1472 = vmatprep.subr.bf16.mxu0 %v1441
    %1473 = vmatpush1.bf16.msra.mxu0 %v1440
    %1474 = vmatprep.subr.bf16.mxu0 %v1443
    %1475 = vmatpush1.bf16.msra.mxu0 %v1442
    %1476 = vmatprep.subr.bf16.mxu0 %v1445
    %1477 = vmatpush1.bf16.msra.mxu0 %v1444
    %1478 = vmatprep.subr.bf16.mxu0 0
    %1479 = vmatpush1.bf16.msra.mxu0 0
    %1480 = vmatprep.subr.bf16.mxu0 0
    %1481 = vmatpush1.bf16.msra.mxu0 0
    %1482 = vmatprep.subr.bf16.mxu0 0
    %1483 = vmatpush1.bf16.msra.mxu0 0
    %1484 = vmatprep.subr.bf16.mxu0 0
    %1485 = vmatpush1.bf16.msra.mxu0 0
    %1486 = vmatprep.subr.bf16.mxu0 0
    %1487 = vmatpush1.bf16.msra.mxu0 0
    %1488 = vmatprep.subr.bf16.mxu0 0
    %1489 = vmatpush1.bf16.msra.mxu0 0
    %1490 = vmatprep.subr.bf16.mxu0 0
    %1491 = vmatpush1.bf16.msra.mxu0 0
    %1492 = vmatprep.subr.bf16.mxu0 0
    %1493 = vmatpush1.bf16.msra.mxu0 0
    %1494 = vmatprep.mubr.bf16.mxu0 0
    %1495 = vmatmul.mubr.bf16.gmra.mrb[0].mxu0 %v1085
    %v1496 = vpop.f32.mrb[0].mxu0
    %v1497 = vadd.f32 %v1376, %v1496
    %v1498 = vpop.f32.mrb[0].mxu0
    %v1499 = vadd.f32 %v1378, %v1498
    %v1500 = vpop.f32.mrb[0].mxu0
    %v1501 = vpop.f32.mrb[0].mxu0
    %1502 = vdwg.mxu0
    %v1503 = vmul.f32 %v1170, 0.5
    %1504 = vmatprep.subr.mxu0 0.0
    %1505 = vmatpush1.xpose.msra.mxu0 %v851
    %1506 = vmatprep.subr.mxu0 0.0
    %1507 = vmatpush1.xpose.msra.mxu0 0.0
    %1508 = vmatprep.subr.mxu0 0.0
    %1509 = vmatpush1.xpose.msra.mxu0 0.0
    %1510 = vmatprep.subr.mxu0 0.0
    %1511 = vmatpush1.xpose.msra.mxu0 0.0
    %1512 = vmatprep.subr.mxu0 0.0
    %1513 = vmatpush1.xpose.msra.mxu0 0.0
    %1514 = vmatprep.subr.mxu0 0.0
    %1515 = vmatpush1.xpose.msra.mxu0 0.0
    %1516 = vmatprep.subr.mxu0 0.0
    %1517 = vmatpush1.xpose.msra.mxu0 0.0
    %1518 = vmatprep.subr.mxu0 0.0
    %1519 = vmatpush1.xpose.msra.mxu0 0.0
    %1520 = vmatprep.subr.mxu0 0.0
    %1521 = vmatpush1.xpose.msra.mxu0 0.0
    %1522 = vmatprep.subr.mxu0 0.0
    %1523 = vmatpush1.xpose.msra.mxu0 0.0
    %1524 = vmatprep.subr.mxu0 0.0
    %1525 = vmatpush1.xpose.msra.mxu0 0.0
    %1526 = vmatprep.subr.mxu0 0.0
    %1527 = vmatpush1.xpose.msra.mxu0 0.0
    %1528 = vmatprep.subr.mxu0 0.0
    %1529 = vmatpush1.xpose.msra.mxu0 0.0
    %1530 = vmatprep.subr.mxu0 0.0
    %1531 = vmatpush1.xpose.msra.mxu0 0.0
    %1532 = vmatprep.subr.mxu0 0.0
    %1533 = vmatpush1.xpose.msra.mxu0 0.0
    %1534 = vmatprep.subr.mxu0 0.0
    %1535 = vmatpush1.xpose.msra.mxu0 0.0
    %1536 = vmatprep.subr.mxu0 0.0
    %1537 = vmatpush1.xpose.msra.mxu0 0.0
    %1538 = vmatprep.subr.mxu0 0.0
    %1539 = vmatpush1.xpose.msra.mxu0 0.0
    %1540 = vmatprep.subr.mxu0 0.0
    %1541 = vmatpush1.xpose.msra.mxu0 0.0
    %1542 = vmatprep.subr.mxu0 0.0
    %1543 = vmatpush1.xpose.msra.mxu0 0.0
    %1544 = vmatprep.subr.mxu0 0.0
    %1545 = vmatpush1.xpose.msra.mxu0 0.0
    %1546 = vmatprep.subr.mxu0 0.0
    %1547 = vmatpush1.xpose.msra.mxu0 0.0
    %1548 = vmatprep.subr.mxu0 0.0
    %1549 = vmatpush1.xpose.msra.mxu0 0.0
    %1550 = vmatprep.subr.mxu0 0.0
    %1551 = vmatpush1.xpose.msra.mxu0 0.0
    %1552 = vmatprep.subr.mxu0 0.0
    %1553 = vmatpush1.xpose.msra.mxu0 0.0
    %1554 = vmatprep.subr.mxu0 0.0
    %1555 = vmatpush1.xpose.msra.mxu0 0.0
    %1556 = vmatprep.subr.mxu0 0.0
    %1557 = vmatpush1.xpose.msra.mxu0 0.0
    %1558 = vmatprep.subr.mxu0 0.0
    %1559 = vmatpush1.xpose.msra.mxu0 0.0
    %1560 = vmatprep.subr.mxu0 0.0
    %1561 = vmatpush1.xpose.msra.mxu0 0.0
    %1562 = vmatprep.subr.mxu0 0.0
    %1563 = vmatpush1.xpose.msra.mxu0 0.0
    %1564 = vmatprep.subr.mxu0 0.0
    %1565 = vmatpush1.xpose.msra.mxu0 0.0
    %1566 = vmatprep.subr.mxu0 0.0
    %1567 = vmatpush1.xpose.msra.mxu0 0.0
    %1568 = vmatprep.mubr.f32.mxu0 0.0
    %1569 = vmatmul.mubr.f32.gmra.mrb[0].mxu0 %v808
    %v1570 = vpop.f32.mrb[0].mxu0
    %v1571 = vadd.f32 0.0, %v1570
    %v1572 = vpop.f32.mrb[0].mxu0
    %1573 = vdwg.mxu0
    %v1574 = vmul.f32 %v1571, 0.088388346
    %v1575 = vlaneseq
    %v1576 = vshrl.u32 %v1575, 7
    %v1577 = vsub.s32 1, %v1576
    %v1578 = vrot.slane %v900, %v1577
    %v1579 = vadd.f32 %v1574, %v1578
    %v1580 = vsel %vm905, %v1579, -1e+09
    %v1581 = vsel %vm983, %v1580, -inf
    %1582 = vmax.xlane.f32.xlu0 %v1581
    %v1583 = vpop.xlane.xlu0 %1582
    %v1584 = vsub.f32 %v1580, %v1583
    %v1585 = vmul.f32 %v1584, 1.442695
    %v1586 = vpow.pop %v1585
    %v1587 = vsel %vm983, %v1586, 0.0
    %1588 = vadd.xlane.f32.xlu0 %v1587
    %v1589 = vpop.xlane.xlu0 %1588
    %v1590 = vrcp.pop %v1589
    %v1591 = vmul.f32 %v1586, %v1590
    %v1592 = vadd.f32 %v1591, 0.0
    %v1594 = vsel %vm983, %v1591, 0
    %1596 = vmatprep.subr.mxu0 0.0
    %1597 = vmatpush1.msra.mxu0 %v894
    %1598 = vmatprep.subr.mxu0 0.0
    %1599 = vmatpush1.msra.mxu0 0.0
    %1600 = vmatprep.subr.mxu0 0.0
    %1601 = vmatpush1.msra.mxu0 0.0
    %1602 = vmatprep.subr.mxu0 0.0
    %1603 = vmatpush1.msra.mxu0 0.0
    %1604 = vmatprep.subr.mxu0 0.0
    %1605 = vmatpush1.msra.mxu0 0.0
    %1606 = vmatprep.subr.mxu0 0.0
    %1607 = vmatpush1.msra.mxu0 0.0
    %1608 = vmatprep.subr.mxu0 0.0
    %1609 = vmatpush1.msra.mxu0 0.0
    %1610 = vmatprep.subr.mxu0 0.0
    %1611 = vmatpush1.msra.mxu0 0.0
    %1612 = vmatprep.subr.mxu0 0.0
    %1613 = vmatpush1.msra.mxu0 0.0
    %1614 = vmatprep.subr.mxu0 0.0
    %1615 = vmatpush1.msra.mxu0 0.0
    %1616 = vmatprep.subr.mxu0 0.0
    %1617 = vmatpush1.msra.mxu0 0.0
    %1618 = vmatprep.subr.mxu0 0.0
    %1619 = vmatpush1.msra.mxu0 0.0
    %1620 = vmatprep.subr.mxu0 0.0
    %1621 = vmatpush1.msra.mxu0 0.0
    %1622 = vmatprep.subr.mxu0 0.0
    %1623 = vmatpush1.msra.mxu0 0.0
    %1624 = vmatprep.subr.mxu0 0.0
    %1625 = vmatpush1.msra.mxu0 0.0
    %1626 = vmatprep.subr.mxu0 0.0
    %1627 = vmatpush1.msra.mxu0 0.0
    %1628 = vmatprep.subr.mxu0 0.0
    %1629 = vmatpush1.msra.mxu0 0.0
    %1630 = vmatprep.subr.mxu0 0.0
    %1631 = vmatpush1.msra.mxu0 0.0
    %1632 = vmatprep.subr.mxu0 0.0
    %1633 = vmatpush1.msra.mxu0 0.0
    %1634 = vmatprep.subr.mxu0 0.0
    %1635 = vmatpush1.msra.mxu0 0.0
    %1636 = vmatprep.subr.mxu0 0.0
    %1637 = vmatpush1.msra.mxu0 0.0
    %1638 = vmatprep.subr.mxu0 0.0
    %1639 = vmatpush1.msra.mxu0 0.0
    %1640 = vmatprep.subr.mxu0 0.0
    %1641 = vmatpush1.msra.mxu0 0.0
    %1642 = vmatprep.subr.mxu0 0.0
    %1643 = vmatpush1.msra.mxu0 0.0
    %1644 = vmatprep.subr.mxu0 0.0
    %1645 = vmatpush1.msra.mxu0 0.0
    %1646 = vmatprep.subr.mxu0 0.0
    %1647 = vmatpush1.msra.mxu0 0.0
    %1648 = vmatprep.subr.mxu0 0.0
    %1649 = vmatpush1.msra.mxu0 0.0
    %1650 = vmatprep.subr.mxu0 0.0
    %1651 = vmatpush1.msra.mxu0 0.0
    %1652 = vmatprep.subr.mxu0 0.0
    %1653 = vmatpush1.msra.mxu0 0.0
    %1654 = vmatprep.subr.mxu0 0.0
    %1655 = vmatpush1.msra.mxu0 0.0
    %1656 = vmatprep.subr.mxu0 0.0
    %1657 = vmatpush1.msra.mxu0 0.0
    %1658 = vmatprep.subr.mxu0 0.0
    %1659 = vmatpush1.msra.mxu0 0.0
    %1660 = vmatprep.mubr.f32.mxu0 0.0
    %1661 = vmatmul.mubr.f32.gmra.mrb[0].mxu0 %v1594
    %v1662 = vpop.f32.mrb[0].mxu0
    %v1663 = vadd.f32 0.0, %v1662
    %v1664 = vpop.f32.mrb[0].mxu0
    %1665 = vdwg.mxu0
    %v1666 = vpack.c.bf16 %v1663, %v1663
    %1667 = vmatprep.subr.mxu0 0.0
    %1668 = vmatpush1.xpose.msra.mxu0 %v853
    %1669 = vmatprep.subr.mxu0 0.0
    %1670 = vmatpush1.xpose.msra.mxu0 0.0
    %1671 = vmatprep.subr.mxu0 0.0
    %1672 = vmatpush1.xpose.msra.mxu0 0.0
    %1673 = vmatprep.subr.mxu0 0.0
    %1674 = vmatpush1.xpose.msra.mxu0 0.0
    %1675 = vmatprep.subr.mxu0 0.0
    %1676 = vmatpush1.xpose.msra.mxu0 0.0
    %1677 = vmatprep.subr.mxu0 0.0
    %1678 = vmatpush1.xpose.msra.mxu0 0.0
    %1679 = vmatprep.subr.mxu0 0.0
    %1680 = vmatpush1.xpose.msra.mxu0 0.0
    %1681 = vmatprep.subr.mxu0 0.0
    %1682 = vmatpush1.xpose.msra.mxu0 0.0
    %1683 = vmatprep.subr.mxu0 0.0
    %1684 = vmatpush1.xpose.msra.mxu0 0.0
    %1685 = vmatprep.subr.mxu0 0.0
    %1686 = vmatpush1.xpose.msra.mxu0 0.0
    %1687 = vmatprep.subr.mxu0 0.0
    %1688 = vmatpush1.xpose.msra.mxu0 0.0
    %1689 = vmatprep.subr.mxu0 0.0
    %1690 = vmatpush1.xpose.msra.mxu0 0.0
    %1691 = vmatprep.subr.mxu0 0.0
    %1692 = vmatpush1.xpose.msra.mxu0 0.0
    %1693 = vmatprep.subr.mxu0 0.0
    %1694 = vmatpush1.xpose.msra.mxu0 0.0
    %1695 = vmatprep.subr.mxu0 0.0
    %1696 = vmatpush1.xpose.msra.mxu0 0.0
    %1697 = vmatprep.subr.mxu0 0.0
    %1698 = vmatpush1.xpose.msra.mxu0 0.0
    %1699 = vmatprep.subr.mxu0 0.0
    %1700 = vmatpush1.xpose.msra.mxu0 0.0
    %1701 = vmatprep.subr.mxu0 0.0
    %1702 = vmatpush1.xpose.msra.mxu0 0.0
    %1703 = vmatprep.subr.mxu0 0.0
    %1704 = vmatpush1.xpose.msra.mxu0 0.0
    %1705 = vmatprep.subr.mxu0 0.0
    %1706 = vmatpush1.xpose.msra.mxu0 0.0
    %1707 = vmatprep.subr.mxu0 0.0
    %1708 = vmatpush1.xpose.msra.mxu0 0.0
    %1709 = vmatprep.subr.mxu0 0.0
    %1710 = vmatpush1.xpose.msra.mxu0 0.0
    %1711 = vmatprep.subr.mxu0 0.0
    %1712 = vmatpush1.xpose.msra.mxu0 0.0
    %1713 = vmatprep.subr.mxu0 0.0
    %1714 = vmatpush1.xpose.msra.mxu0 0.0
    %1715 = vmatprep.subr.mxu0 0.0
    %1716 = vmatpush1.xpose.msra.mxu0 0.0
    %1717 = vmatprep.subr.mxu0 0.0
    %1718 = vmatpush1.xpose.msra.mxu0 0.0
    %1719 = vmatprep.subr.mxu0 0.0
    %1720 = vmatpush1.xpose.msra.mxu0 0.0
    %1721 = vmatprep.subr.mxu0 0.0
    %1722 = vmatpush1.xpose.msra.mxu0 0.0
    %1723 = vmatprep.subr.mxu0 0.0
    %1724 = vmatpush1.xpose.msra.mxu0 0.0
    %1725 = vmatprep.subr.mxu0 0.0
    %1726 = vmatpush1.xpose.msra.mxu0 0.0
    %1727 = vmatprep.subr.mxu0 0.0
    %1728 = vmatpush1.xpose.msra.mxu0 0.0
    %1729 = vmatprep.subr.mxu0 0.0
    %1730 = vmatpush1.xpose.msra.mxu0 0.0
    %1731 = vmatprep.mubr.f32.mxu0 0.0
    %1732 = vmatmul.mubr.f32.gmra.mrb[0].mxu0 %v810
    %v1733 = vpop.f32.mrb[0].mxu0
    %v1734 = vadd.f32 0.0, %v1733
    %v1735 = vpop.f32.mrb[0].mxu0
    %1736 = vdwg.mxu0
    %v1737 = vmul.f32 %v1734, 0.088388346
    %v1738 = vadd.f32 %v1737, %v1578
    %v1739 = vsel %vm905, %v1738, -1e+09
    %v1740 = vsel %vm983, %v1739, -inf
    %1741 = vmax.xlane.f32.xlu0 %v1740
    %v1742 = vpop.xlane.xlu0 %1741
    %v1743 = vsub.f32 %v1739, %v1742
    %v1744 = vmul.f32 %v1743, 1.442695
    %v1745 = vpow.pop %v1744
    %v1746 = vsel %vm983, %v1745, 0.0
    %1747 = vadd.xlane.f32.xlu0 %v1746
    %v1748 = vpop.xlane.xlu0 %1747
    %v1749 = vrcp.pop %v1748
    %v1750 = vmul.f32 %v1745, %v1749
    %v1751 = vadd.f32 %v1592, %v1750
    %v1753 = vsel %vm983, %v1750, 0
    %1755 = vmatprep.subr.mxu0 0.0
    %1756 = vmatpush1.msra.mxu0 %v896
    %1757 = vmatprep.subr.mxu0 0.0
    %1758 = vmatpush1.msra.mxu0 0.0
    %1759 = vmatprep.subr.mxu0 0.0
    %1760 = vmatpush1.msra.mxu0 0.0
    %1761 = vmatprep.subr.mxu0 0.0
    %1762 = vmatpush1.msra.mxu0 0.0
    %1763 = vmatprep.subr.mxu0 0.0
    %1764 = vmatpush1.msra.mxu0 0.0
    %1765 = vmatprep.subr.mxu0 0.0
    %1766 = vmatpush1.msra.mxu0 0.0
    %1767 = vmatprep.subr.mxu0 0.0
    %1768 = vmatpush1.msra.mxu0 0.0
    %1769 = vmatprep.subr.mxu0 0.0
    %1770 = vmatpush1.msra.mxu0 0.0
    %1771 = vmatprep.subr.mxu0 0.0
    %1772 = vmatpush1.msra.mxu0 0.0
    %1773 = vmatprep.subr.mxu0 0.0
    %1774 = vmatpush1.msra.mxu0 0.0
    %1775 = vmatprep.subr.mxu0 0.0
    %1776 = vmatpush1.msra.mxu0 0.0
    %1777 = vmatprep.subr.mxu0 0.0
    %1778 = vmatpush1.msra.mxu0 0.0
    %1779 = vmatprep.subr.mxu0 0.0
    %1780 = vmatpush1.msra.mxu0 0.0
    %1781 = vmatprep.subr.mxu0 0.0
    %1782 = vmatpush1.msra.mxu0 0.0
    %1783 = vmatprep.subr.mxu0 0.0
    %1784 = vmatpush1.msra.mxu0 0.0
    %1785 = vmatprep.subr.mxu0 0.0
    %1786 = vmatpush1.msra.mxu0 0.0
    %1787 = vmatprep.subr.mxu0 0.0
    %1788 = vmatpush1.msra.mxu0 0.0
    %1789 = vmatprep.subr.mxu0 0.0
    %1790 = vmatpush1.msra.mxu0 0.0
    %1791 = vmatprep.subr.mxu0 0.0
    %1792 = vmatpush1.msra.mxu0 0.0
    %1793 = vmatprep.subr.mxu0 0.0
    %1794 = vmatpush1.msra.mxu0 0.0
    %1795 = vmatprep.subr.mxu0 0.0
    %1796 = vmatpush1.msra.mxu0 0.0
    %1797 = vmatprep.subr.mxu0 0.0
    %1798 = vmatpush1.msra.mxu0 0.0
    %1799 = vmatprep.subr.mxu0 0.0
    %1800 = vmatpush1.msra.mxu0 0.0
    %1801 = vmatprep.subr.mxu0 0.0
    %1802 = vmatpush1.msra.mxu0 0.0
    %1803 = vmatprep.subr.mxu0 0.0
    %1804 = vmatpush1.msra.mxu0 0.0
    %1805 = vmatprep.subr.mxu0 0.0
    %1806 = vmatpush1.msra.mxu0 0.0
    %1807 = vmatprep.subr.mxu0 0.0
    %1808 = vmatpush1.msra.mxu0 0.0
    %1809 = vmatprep.subr.mxu0 0.0
    %1810 = vmatpush1.msra.mxu0 0.0
    %1811 = vmatprep.subr.mxu0 0.0
    %1812 = vmatpush1.msra.mxu0 0.0
    %1813 = vmatprep.subr.mxu0 0.0
    %1814 = vmatpush1.msra.mxu0 0.0
    %1815 = vmatprep.subr.mxu0 0.0
    %1816 = vmatpush1.msra.mxu0 0.0
    %1817 = vmatprep.subr.mxu0 0.0
    %1818 = vmatpush1.msra.mxu0 0.0
    %1819 = vmatprep.mubr.f32.mxu0 0.0
    %1820 = vmatmul.mubr.f32.gmra.mrb[0].mxu0 %v1753
    %v1821 = vpop.f32.mrb[0].mxu0
    %v1822 = vadd.f32 0.0, %v1821
    %v1823 = vpop.f32.mrb[0].mxu0
    %1824 = vdwg.mxu0
    %v1825 = vpack.c.bf16 %v1822, %v1822
    %1826 = vmatprep.subr.bf16.mxu0 %v1310
    %1827 = vmatpush1.bf16.msra.mxu0 %v1309
    %1828 = vmatprep.subr.bf16.mxu0 %v1312
    %1829 = vmatpush1.bf16.msra.mxu0 %v1311
    %1830 = vmatprep.subr.bf16.mxu0 %v1314
    %1831 = vmatpush1.bf16.msra.mxu0 %v1313
    %1832 = vmatprep.subr.bf16.mxu0 %v1316
    %1833 = vmatpush1.bf16.msra.mxu0 %v1315
    %1834 = vmatprep.subr.bf16.mxu0 %v1318
    %1835 = vmatpush1.bf16.msra.mxu0 %v1317
    %1836 = vmatprep.subr.bf16.mxu0 %v1320
    %1837 = vmatpush1.bf16.msra.mxu0 %v1319
    %1838 = vmatprep.subr.bf16.mxu0 %v1322
    %1839 = vmatpush1.bf16.msra.mxu0 %v1321
    %1840 = vmatprep.subr.bf16.mxu0 %v1324
    %1841 = vmatpush1.bf16.msra.mxu0 %v1323
    %1842 = vmatprep.subr.bf16.mxu0 0
    %1843 = vmatpush1.bf16.msra.mxu0 0
    %1844 = vmatprep.subr.bf16.mxu0 0
    %1845 = vmatpush1.bf16.msra.mxu0 0
    %1846 = vmatprep.subr.bf16.mxu0 0
    %1847 = vmatpush1.bf16.msra.mxu0 0
    %1848 = vmatprep.subr.bf16.mxu0 0
    %1849 = vmatpush1.bf16.msra.mxu0 0
    %1850 = vmatprep.subr.bf16.mxu0 0
    %1851 = vmatpush1.bf16.msra.mxu0 0
    %1852 = vmatprep.subr.bf16.mxu0 0
    %1853 = vmatpush1.bf16.msra.mxu0 0
    %1854 = vmatprep.subr.bf16.mxu0 0
    %1855 = vmatpush1.bf16.msra.mxu0 0
    %1856 = vmatprep.subr.bf16.mxu0 0
    %1857 = vmatpush1.bf16.msra.mxu0 0
    %1858 = vmatprep.mubr.bf16.mxu0 0
    %1859 = vmatmul.mubr.bf16.gmra.mrb[0].mxu0 %v1825
    %v1860 = vpop.f32.mrb[0].mxu0
    %v1861 = vadd.f32 0.0, %v1860
    %v1862 = vpop.f32.mrb[0].mxu0
    %v1863 = vadd.f32 0.0, %v1862
    %v1864 = vpop.f32.mrb[0].mxu0
    %v1865 = vpop.f32.mrb[0].mxu0
    %1866 = vdwg.mxu0
    %1867 = vmatprep.subr.bf16.mxu0 %v1431
    %1868 = vmatpush1.bf16.msra.mxu0 %v1430
    %1869 = vmatprep.subr.bf16.mxu0 %v1433
    %1870 = vmatpush1.bf16.msra.mxu0 %v1432
    %1871 = vmatprep.subr.bf16.mxu0 %v1435
    %1872 = vmatpush1.bf16.msra.mxu0 %v1434
    %1873 = vmatprep.subr.bf16.mxu0 %v1437
    %1874 = vmatpush1.bf16.msra.mxu0 %v1436
    %1875 = vmatprep.subr.bf16.mxu0 %v1439
    %1876 = vmatpush1.bf16.msra.mxu0 %v1438
    %1877 = vmatprep.subr.bf16.mxu0 %v1441
    %1878 = vmatpush1.bf16.msra.mxu0 %v1440
    %1879 = vmatprep.subr.bf16.mxu0 %v1443
    %1880 = vmatpush1.bf16.msra.mxu0 %v1442
    %1881 = vmatprep.subr.bf16.mxu0 %v1445
    %1882 = vmatpush1.bf16.msra.mxu0 %v1444
    %1883 = vmatprep.subr.bf16.mxu0 0
    %1884 = vmatpush1.bf16.msra.mxu0 0
    %1885 = vmatprep.subr.bf16.mxu0 0
    %1886 = vmatpush1.bf16.msra.mxu0 0
    %1887 = vmatprep.subr.bf16.mxu0 0
    %1888 = vmatpush1.bf16.msra.mxu0 0
    %1889 = vmatprep.subr.bf16.mxu0 0
    %1890 = vmatpush1.bf16.msra.mxu0 0
    %1891 = vmatprep.subr.bf16.mxu0 0
    %1892 = vmatpush1.bf16.msra.mxu0 0
    %1893 = vmatprep.subr.bf16.mxu0 0
    %1894 = vmatpush1.bf16.msra.mxu0 0
    %1895 = vmatprep.subr.bf16.mxu0 0
    %1896 = vmatpush1.bf16.msra.mxu0 0
    %1897 = vmatprep.subr.bf16.mxu0 0
    %1898 = vmatpush1.bf16.msra.mxu0 0
    %1899 = vmatprep.mubr.bf16.mxu0 0
    %1900 = vmatmul.mubr.bf16.gmra.mrb[0].mxu0 %v1666
    %v1901 = vpop.f32.mrb[0].mxu0
    %v1902 = vadd.f32 %v1861, %v1901
    %v1903 = vpop.f32.mrb[0].mxu0
    %v1904 = vadd.f32 %v1863, %v1903
    %v1905 = vpop.f32.mrb[0].mxu0
    %v1906 = vpop.f32.mrb[0].mxu0
    %1907 = vdwg.mxu0
    %v1908 = vmul.f32 %v1751, 0.5
    %v1910 = vrot.slane %v1908, 7
    %vm1912 = vcmask 1040384
    %v1913 = vsel %vm1912, %v1503, %v1910
    %vm1914 = vcmask 58368
    %1915 = vst.msk [vmem:[#allocation12] sm:$0x3] %vm1914, %v1913
    %v1916 = vadd.f32 %v96, %v1497
    %v1917 = vadd.f32 %v97, %v1499
    %v1918 = vadd.f32 %v98, %v1902
    %v1919 = vadd.f32 %v99, %v1904
    %v1920 = vlaneseq
    %v1921 = vshrl.u32 %v1920, 7
    %v1922 = vsub.s32 6, %v1921
    %v1923 = vrot.slane %v100, %v1922
    %v1924 = vlaneseq
    %v1925 = vshrl.u32 %v1924, 7
    %v1926 = vsub.s32 6, %v1925
    %v1927 = vrot.slane %v101, %v1926
    %v1928 = vadd.f32 %v1916, %v1923
    %v1929 = vadd.f32 %v1917, %v1927
    %v1930 = vadd.f32 %v1918, %v1923
    %v1931 = vadd.f32 %v1919, %v1927
    %v1932 = vadd.f32 %v1928, %v1929
    %1933 = vadd.xlane.f32.xlu0 %v1932
    %v1934 = vpop.xlane.xlu0 %1933
    %v1935 = vadd.f32 %v1930, %v1931
    %1936 = vadd.xlane.f32.xlu0 %v1935
    %v1937 = vpop.xlane.xlu0 %1936
    %v1938 = vmul.f32 %v1934, %v116
    %v1939 = vmul.f32 %v1937, %v116
    %v1940 = vsub.f32 %v1928, %v1938
    %v1941 = vsub.f32 %v1929, %v1938
    %v1942 = vsub.f32 %v1930, %v1939
    %v1943 = vsub.f32 %v1931, %v1939
    %v1944 = vmul.f32 %v1940, %v1940
    %v1945 = vmul.f32 %v1941, %v1941
    %v1946 = vmul.f32 %v1942, %v1942
    %v1947 = vmul.f32 %v1943, %v1943
    %v1948 = vadd.f32 %v1944, %v1945
    %1949 = vadd.xlane.f32.xlu0 %v1948
    %v1950 = vpop.xlane.xlu0 %1949
    %v1951 = vadd.f32 %v1946, %v1947
    %1952 = vadd.xlane.f32.xlu0 %v1951
    %v1953 = vpop.xlane.xlu0 %1952
    %v1954 = vmul.f32 %v1950, %v116
    %v1955 = vmul.f32 %v1953, %v116
    %v1956 = vadd.f32 %v1954, 1e-05
    %v1957 = vadd.f32 %v1955, 1e-05
    %v1958 = vrsqrt.pop %v1956
    %v1959 = vrsqrt.pop %v1957
    %v1960 = vmul.f32 %v1940, %v1958
    %v1961 = vmul.f32 %v1941, %v1958
    %v1962 = vmul.f32 %v1942, %v1959
    %v1963 = vmul.f32 %v1943, %v1959
    %v1964 = vlaneseq
    %v1965 = vshrl.u32 %v1964, 7
    %v1966 = vsub.s32 2, %v1965
    %v1967 = vrot.slane %v100, %v1966
    %v1968 = vlaneseq
    %v1969 = vshrl.u32 %v1968, 7
    %v1970 = vsub.s32 2, %v1969
    %v1971 = vrot.slane %v101, %v1970
    %v1972 = vmul.f32 %v1960, %v1967
    %v1973 = vmul.f32 %v1961, %v1971
    %v1974 = vmul.f32 %v1962, %v1967
    %v1975 = vmul.f32 %v1963, %v1971
    %v1976 = vlaneseq
    %v1977 = vshrl.u32 %v1976, 7
    %v1978 = vsub.s32 3, %v1977
    %v1979 = vrot.slane %v100, %v1978
    %v1980 = vlaneseq
    %v1981 = vshrl.u32 %v1980, 7
    %v1982 = vsub.s32 3, %v1981
    %v1983 = vrot.slane %v101, %v1982
    %v1984 = vadd.f32 %v1972, %v1979
    %v1985 = vadd.f32 %v1973, %v1983
    %v1986 = vadd.f32 %v1974, %v1979
    %v1987 = vadd.f32 %v1975, %v1983
    %v1988 = vpack.c.bf16 %v1986, %v1984
    %v1989 = vpack.c.bf16 %v1987, %v1985
    %v1990 = vld [vmem:[#allocation8] sm:$0xff]
    %v1991 = vld [vmem:[#allocation8 + $0x8] sm:$0xff]
    %v1992 = vld [vmem:[#allocation8 + $0x10] sm:$0xff]
    %v1993 = vld [vmem:[#allocation8 + $0x18] sm:$0xff]
    %v1994 = vld [vmem:[#allocation8 + $0x20] sm:$0xff]
    %v1995 = vld [vmem:[#allocation8 + $0x28] sm:$0xff]
    %v1996 = vld [vmem:[#allocation8 + $0x30] sm:$0xff]
    %v1997 = vld [vmem:[#allocation8 + $0x38] sm:$0xff]
    %v1998 = vld [vmem:[#allocation8 + $0x40] sm:$0xff]
    %v1999 = vld [vmem:[#allocation8 + $0x48] sm:$0xff]
    %v2000 = vld [vmem:[#allocation8 + $0x50] sm:$0xff]
    %v2001 = vld [vmem:[#allocation8 + $0x58] sm:$0xff]
    %v2002 = vld [vmem:[#allocation8 + $0x60] sm:$0xff]
    %v2003 = vld [vmem:[#allocation8 + $0x68] sm:$0xff]
    %v2004 = vld [vmem:[#allocation8 + $0x70] sm:$0xff]
    %v2005 = vld [vmem:[#allocation8 + $0x78] sm:$0xff]
    %v2006 = vld [vmem:[#allocation8 + $0x80] sm:$0xff]
    %v2007 = vld [vmem:[#allocation8 + $0x88] sm:$0xff]
    %v2008 = vld [vmem:[#allocation8 + $0x90] sm:$0xff]
    %v2009 = vld [vmem:[#allocation8 + $0x98] sm:$0xff]
    %v2010 = vld [vmem:[#allocation8 + $0xa0] sm:$0xff]
    %v2011 = vld [vmem:[#allocation8 + $0xa8] sm:$0xff]
    %v2012 = vld [vmem:[#allocation8 + $0xb0] sm:$0xff]
    %v2013 = vld [vmem:[#allocation8 + $0xb8] sm:$0xff]
    %v2014 = vld [vmem:[#allocation8 + $0xc0] sm:$0xff]
    %v2015 = vld [vmem:[#allocation8 + $0xc8] sm:$0xff]
    %v2016 = vld [vmem:[#allocation8 + $0xd0] sm:$0xff]
    %v2017 = vld [vmem:[#allocation8 + $0xd8] sm:$0xff]
    %v2018 = vld [vmem:[#allocation8 + $0xe0] sm:$0xff]
    %v2019 = vld [vmem:[#allocation8 + $0xe8] sm:$0xff]
    %v2020 = vld [vmem:[#allocation8 + $0xf0] sm:$0xff]
    %v2021 = vld [vmem:[#allocation8 + $0xf8] sm:$0xff]
    %v2022 = vld [vmem:[#allocation8 + $0x100] sm:$0xff]
    %v2023 = vld [vmem:[#allocation8 + $0x108] sm:$0xff]
    %v2024 = vld [vmem:[#allocation8 + $0x110] sm:$0xff]
    %v2025 = vld [vmem:[#allocation8 + $0x118] sm:$0xff]
    %v2026 = vld [vmem:[#allocation8 + $0x120] sm:$0xff]
    %v2027 = vld [vmem:[#allocation8 + $0x128] sm:$0xff]
    %v2028 = vld [vmem:[#allocation8 + $0x130] sm:$0xff]
    %v2029 = vld [vmem:[#allocation8 + $0x138] sm:$0xff]
    %v2030 = vld [vmem:[#allocation8 + $0x140] sm:$0xff]
    %v2031 = vld [vmem:[#allocation8 + $0x148] sm:$0xff]
    %v2032 = vld [vmem:[#allocation8 + $0x150] sm:$0xff]
    %v2033 = vld [vmem:[#allocation8 + $0x158] sm:$0xff]
    %v2034 = vld [vmem:[#allocation8 + $0x160] sm:$0xff]
    %v2035 = vld [vmem:[#allocation8 + $0x168] sm:$0xff]
    %v2036 = vld [vmem:[#allocation8 + $0x170] sm:$0xff]
    %v2037 = vld [vmem:[#allocation8 + $0x178] sm:$0xff]
    %v2038 = vld [vmem:[#allocation8 + $0x180] sm:$0xff]
    %v2039 = vld [vmem:[#allocation8 + $0x188] sm:$0xff]
    %v2040 = vld [vmem:[#allocation8 + $0x190] sm:$0xff]
    %v2041 = vld [vmem:[#allocation8 + $0x198] sm:$0xff]
    %v2042 = vld [vmem:[#allocation8 + $0x1a0] sm:$0xff]
    %v2043 = vld [vmem:[#allocation8 + $0x1a8] sm:$0xff]
    %v2044 = vld [vmem:[#allocation8 + $0x1b0] sm:$0xff]
    %v2045 = vld [vmem:[#allocation8 + $0x1b8] sm:$0xff]
    %v2046 = vld [vmem:[#allocation8 + $0x1c0] sm:$0xff]
    %v2047 = vld [vmem:[#allocation8 + $0x1c8] sm:$0xff]
    %v2048 = vld [vmem:[#allocation8 + $0x1d0] sm:$0xff]
    %v2049 = vld [vmem:[#allocation8 + $0x1d8] sm:$0xff]
    %v2050 = vld [vmem:[#allocation8 + $0x1e0] sm:$0xff]
    %v2051 = vld [vmem:[#allocation8 + $0x1e8] sm:$0xff]
    %v2052 = vld [vmem:[#allocation8 + $0x1f0] sm:$0xff]
    %v2053 = vld [vmem:[#allocation8 + $0x1f8] sm:$0xff]
    %v2054 = vld [vmem:[#allocation8 + $0x200] sm:$0xff]
    %v2055 = vld [vmem:[#allocation8 + $0x208] sm:$0xff]
    %v2056 = vld [vmem:[#allocation8 + $0x210] sm:$0xff]
    %v2057 = vld [vmem:[#allocation8 + $0x218] sm:$0xff]
    %v2058 = vld [vmem:[#allocation8 + $0x220] sm:$0xff]
    %v2059 = vld [vmem:[#allocation8 + $0x228] sm:$0xff]
    %v2060 = vld [vmem:[#allocation8 + $0x230] sm:$0xff]
    %v2061 = vld [vmem:[#allocation8 + $0x238] sm:$0xff]
    %v2062 = vld [vmem:[#allocation8 + $0x240] sm:$0xff]
    %v2063 = vld [vmem:[#allocation8 + $0x248] sm:$0xff]
    %v2064 = vld [vmem:[#allocation8 + $0x250] sm:$0xff]
    %v2065 = vld [vmem:[#allocation8 + $0x258] sm:$0xff]
    %v2066 = vld [vmem:[#allocation8 + $0x260] sm:$0xff]
    %v2067 = vld [vmem:[#allocation8 + $0x268] sm:$0xff]
    %v2068 = vld [vmem:[#allocation8 + $0x270] sm:$0xff]
    %v2069 = vld [vmem:[#allocation8 + $0x278] sm:$0xff]
    %v2070 = vld [vmem:[#allocation8 + $0x280] sm:$0xff]
    %v2071 = vld [vmem:[#allocation8 + $0x288] sm:$0xff]
    %v2072 = vld [vmem:[#allocation8 + $0x290] sm:$0xff]
    %v2073 = vld [vmem:[#allocation8 + $0x298] sm:$0xff]
    %v2074 = vld [vmem:[#allocation8 + $0x2a0] sm:$0xff]
    %v2075 = vld [vmem:[#allocation8 + $0x2a8] sm:$0xff]
    %v2076 = vld [vmem:[#allocation8 + $0x2b0] sm:$0xff]
    %v2077 = vld [vmem:[#allocation8 + $0x2b8] sm:$0xff]
    %v2078 = vld [vmem:[#allocation8 + $0x2c0] sm:$0xff]
    %v2079 = vld [vmem:[#allocation8 + $0x2c8] sm:$0xff]
    %v2080 = vld [vmem:[#allocation8 + $0x2d0] sm:$0xff]
    %v2081 = vld [vmem:[#allocation8 + $0x2d8] sm:$0xff]
    %v2082 = vld [vmem:[#allocation8 + $0x2e0] sm:$0xff]
    %v2083 = vld [vmem:[#allocation8 + $0x2e8] sm:$0xff]
    %v2084 = vld [vmem:[#allocation8 + $0x2f0] sm:$0xff]
    %v2085 = vld [vmem:[#allocation8 + $0x2f8] sm:$0xff]
    %v2086 = vld [vmem:[#allocation8 + $0x300] sm:$0xff]
    %v2087 = vld [vmem:[#allocation8 + $0x308] sm:$0xff]
    %v2088 = vld [vmem:[#allocation8 + $0x310] sm:$0xff]
    %v2089 = vld [vmem:[#allocation8 + $0x318] sm:$0xff]
    %v2090 = vld [vmem:[#allocation8 + $0x320] sm:$0xff]
    %v2091 = vld [vmem:[#allocation8 + $0x328] sm:$0xff]
    %v2092 = vld [vmem:[#allocation8 + $0x330] sm:$0xff]
    %v2093 = vld [vmem:[#allocation8 + $0x338] sm:$0xff]
    %v2094 = vld [vmem:[#allocation8 + $0x340] sm:$0xff]
    %v2095 = vld [vmem:[#allocation8 + $0x348] sm:$0xff]
    %v2096 = vld [vmem:[#allocation8 + $0x350] sm:$0xff]
    %v2097 = vld [vmem:[#allocation8 + $0x358] sm:$0xff]
    %v2098 = vld [vmem:[#allocation8 + $0x360] sm:$0xff]
    %v2099 = vld [vmem:[#allocation8 + $0x368] sm:$0xff]
    %v2100 = vld [vmem:[#allocation8 + $0x370] sm:$0xff]
    %v2101 = vld [vmem:[#allocation8 + $0x378] sm:$0xff]
    %v2102 = vld [vmem:[#allocation8 + $0x380] sm:$0xff]
    %v2103 = vld [vmem:[#allocation8 + $0x388] sm:$0xff]
    %v2104 = vld [vmem:[#allocation8 + $0x390] sm:$0xff]
    %v2105 = vld [vmem:[#allocation8 + $0x398] sm:$0xff]
    %v2106 = vld [vmem:[#allocation8 + $0x3a0] sm:$0xff]
    %v2107 = vld [vmem:[#allocation8 + $0x3a8] sm:$0xff]
    %v2108 = vld [vmem:[#allocation8 + $0x3b0] sm:$0xff]
    %v2109 = vld [vmem:[#allocation8 + $0x3b8] sm:$0xff]
    %v2110 = vld [vmem:[#allocation8 + $0x3c0] sm:$0xff]
    %v2111 = vld [vmem:[#allocation8 + $0x3c8] sm:$0xff]
    %v2112 = vld [vmem:[#allocation8 + $0x3d0] sm:$0xff]
    %v2113 = vld [vmem:[#allocation8 + $0x3d8] sm:$0xff]
    %v2114 = vld [vmem:[#allocation8 + $0x3e0] sm:$0xff]
    %v2115 = vld [vmem:[#allocation8 + $0x3e8] sm:$0xff]
    %v2116 = vld [vmem:[#allocation8 + $0x3f0] sm:$0xff]
    %v2117 = vld [vmem:[#allocation8 + $0x3f8] sm:$0xff]
    %v2118 = vlaneseq
    %v2119 = vshrl.u32 %v2118, 7
    %v2120 = vsub.s32 1, %v2119
    %v2121 = vrot.slane %v102, %v2120
    %v2122 = vlaneseq
    %v2123 = vshrl.u32 %v2122, 7
    %v2124 = vsub.s32 1, %v2123
    %v2125 = vrot.slane %v103, %v2124
    %v2126 = vlaneseq
    %v2127 = vshrl.u32 %v2126, 7
    %v2128 = vsub.s32 1, %v2127
    %v2129 = vrot.slane %v104, %v2128
    %v2130 = vlaneseq
    %v2131 = vshrl.u32 %v2130, 7
    %v2132 = vsub.s32 1, %v2131
    %v2133 = vrot.slane %v105, %v2132
    %v2134 = vlaneseq
    %v2135 = vshrl.u32 %v2134, 7
    %v2136 = vsub.s32 1, %v2135
    %v2137 = vrot.slane %v106, %v2136
    %v2138 = vlaneseq
    %v2139 = vshrl.u32 %v2138, 7
    %v2140 = vsub.s32 1, %v2139
    %v2141 = vrot.slane %v107, %v2140
    %v2142 = vlaneseq
    %v2143 = vshrl.u32 %v2142, 7
    %v2144 = vsub.s32 1, %v2143
    %v2145 = vrot.slane %v108, %v2144
    %v2146 = vlaneseq
    %v2147 = vshrl.u32 %v2146, 7
    %v2148 = vsub.s32 1, %v2147
    %v2149 = vrot.slane %v109, %v2148
    %v2278 = vunpack.c.l.b16 %v1990
    %v2279 = vunpack.c.h.b16 %v1990
    %v2280 = vunpack.c.l.b16 %v1991
    %v2281 = vunpack.c.h.b16 %v1991
    %v2282 = vunpack.c.l.b16 %v1992
    %v2283 = vunpack.c.h.b16 %v1992
    %v2284 = vunpack.c.l.b16 %v1993
    %v2285 = vunpack.c.h.b16 %v1993
    %v2286 = vunpack.c.l.b16 %v1994
    %v2287 = vunpack.c.h.b16 %v1994
    %v2288 = vunpack.c.l.b16 %v1995
    %v2289 = vunpack.c.h.b16 %v1995
    %v2290 = vunpack.c.l.b16 %v1996
    %v2291 = vunpack.c.h.b16 %v1996
    %v2292 = vunpack.c.l.b16 %v1997
    %v2293 = vunpack.c.h.b16 %v1997
    %v2294 = vunpack.c.l.b16 %v1998
    %v2295 = vunpack.c.h.b16 %v1998
    %v2296 = vunpack.c.l.b16 %v1999
    %v2297 = vunpack.c.h.b16 %v1999
    %v2298 = vunpack.c.l.b16 %v2000
    %v2299 = vunpack.c.h.b16 %v2000
    %v2300 = vunpack.c.l.b16 %v2001
    %v2301 = vunpack.c.h.b16 %v2001
    %v2302 = vunpack.c.l.b16 %v2002
    %v2303 = vunpack.c.h.b16 %v2002
    %v2304 = vunpack.c.l.b16 %v2003
    %v2305 = vunpack.c.h.b16 %v2003
    %v2306 = vunpack.c.l.b16 %v2004
    %v2307 = vunpack.c.h.b16 %v2004
    %v2308 = vunpack.c.l.b16 %v2005
    %v2309 = vunpack.c.h.b16 %v2005
    %v2310 = vunpack.c.l.b16 %v2006
    %v2311 = vunpack.c.h.b16 %v2006
    %v2312 = vunpack.c.l.b16 %v2007
    %v2313 = vunpack.c.h.b16 %v2007
    %v2314 = vunpack.c.l.b16 %v2008
    %v2315 = vunpack.c.h.b16 %v2008
    %v2316 = vunpack.c.l.b16 %v2009
    %v2317 = vunpack.c.h.b16 %v2009
    %v2318 = vunpack.c.l.b16 %v2010
    %v2319 = vunpack.c.h.b16 %v2010
    %v2320 = vunpack.c.l.b16 %v2011
    %v2321 = vunpack.c.h.b16 %v2011
    %v2322 = vunpack.c.l.b16 %v2012
    %v2323 = vunpack.c.h.b16 %v2012
    %v2324 = vunpack.c.l.b16 %v2013
    %v2325 = vunpack.c.h.b16 %v2013
    %v2326 = vunpack.c.l.b16 %v2014
    %v2327 = vunpack.c.h.b16 %v2014
    %v2328 = vunpack.c.l.b16 %v2015
    %v2329 = vunpack.c.h.b16 %v2015
    %v2330 = vunpack.c.l.b16 %v2016
    %v2331 = vunpack.c.h.b16 %v2016
    %v2332 = vunpack.c.l.b16 %v2017
    %v2333 = vunpack.c.h.b16 %v2017
    %v2334 = vunpack.c.l.b16 %v2018
    %v2335 = vunpack.c.h.b16 %v2018
    %v2336 = vunpack.c.l.b16 %v2019
    %v2337 = vunpack.c.h.b16 %v2019
    %v2338 = vunpack.c.l.b16 %v2020
    %v2339 = vunpack.c.h.b16 %v2020
    %v2340 = vunpack.c.l.b16 %v2021
    %v2341 = vunpack.c.h.b16 %v2021
    %v2342 = vunpack.c.l.b16 %v2022
    %v2343 = vunpack.c.h.b16 %v2022
    %v2344 = vunpack.c.l.b16 %v2023
    %v2345 = vunpack.c.h.b16 %v2023
    %v2346 = vunpack.c.l.b16 %v2024
    %v2347 = vunpack.c.h.b16 %v2024
    %v2348 = vunpack.c.l.b16 %v2025
    %v2349 = vunpack.c.h.b16 %v2025
    %v2350 = vunpack.c.l.b16 %v2026
    %v2351 = vunpack.c.h.b16 %v2026
    %v2352 = vunpack.c.l.b16 %v2027
    %v2353 = vunpack.c.h.b16 %v2027
    %v2354 = vunpack.c.l.b16 %v2028
    %v2355 = vunpack.c.h.b16 %v2028
    %v2356 = vunpack.c.l.b16 %v2029
    %v2357 = vunpack.c.h.b16 %v2029
    %v2358 = vunpack.c.l.b16 %v2030
    %v2359 = vunpack.c.h.b16 %v2030
    %v2360 = vunpack.c.l.b16 %v2031
    %v2361 = vunpack.c.h.b16 %v2031
    %v2362 = vunpack.c.l.b16 %v2032
    %v2363 = vunpack.c.h.b16 %v2032
    %v2364 = vunpack.c.l.b16 %v2033
    %v2365 = vunpack.c.h.b16 %v2033
    %v2366 = vunpack.c.l.b16 %v2034
    %v2367 = vunpack.c.h.b16 %v2034
    %v2368 = vunpack.c.l.b16 %v2035
    %v2369 = vunpack.c.h.b16 %v2035
    %v2370 = vunpack.c.l.b16 %v2036
    %v2371 = vunpack.c.h.b16 %v2036
    %v2372 = vunpack.c.l.b16 %v2037
    %v2373 = vunpack.c.h.b16 %v2037
    %v2374 = vunpack.c.l.b16 %v2038
    %v2375 = vunpack.c.h.b16 %v2038
    %v2376 = vunpack.c.l.b16 %v2039
    %v2377 = vunpack.c.h.b16 %v2039
    %v2378 = vunpack.c.l.b16 %v2040
    %v2379 = vunpack.c.h.b16 %v2040
    %v2380 = vunpack.c.l.b16 %v2041
    %v2381 = vunpack.c.h.b16 %v2041
    %v2382 = vunpack.c.l.b16 %v2042
    %v2383 = vunpack.c.h.b16 %v2042
    %v2384 = vunpack.c.l.b16 %v2043
    %v2385 = vunpack.c.h.b16 %v2043
    %v2386 = vunpack.c.l.b16 %v2044
    %v2387 = vunpack.c.h.b16 %v2044
    %v2388 = vunpack.c.l.b16 %v2045
    %v2389 = vunpack.c.h.b16 %v2045
    %v2390 = vunpack.c.l.b16 %v2046
    %v2391 = vunpack.c.h.b16 %v2046
    %v2392 = vunpack.c.l.b16 %v2047
    %v2393 = vunpack.c.h.b16 %v2047
    %v2394 = vunpack.c.l.b16 %v2048
    %v2395 = vunpack.c.h.b16 %v2048
    %v2396 = vunpack.c.l.b16 %v2049
    %v2397 = vunpack.c.h.b16 %v2049
    %v2398 = vunpack.c.l.b16 %v2050
    %v2399 = vunpack.c.h.b16 %v2050
    %v2400 = vunpack.c.l.b16 %v2051
    %v2401 = vunpack.c.h.b16 %v2051
    %v2402 = vunpack.c.l.b16 %v2052
    %v2403 = vunpack.c.h.b16 %v2052
    %v2404 = vunpack.c.l.b16 %v2053
    %v2405 = vunpack.c.h.b16 %v2053
    %v2406 = vunpack.c.l.b16 %v2054
    %v2407 = vunpack.c.h.b16 %v2054
    %v2408 = vunpack.c.l.b16 %v2055
    %v2409 = vunpack.c.h.b16 %v2055
    %v2410 = vunpack.c.l.b16 %v2056
    %v2411 = vunpack.c.h.b16 %v2056
    %v2412 = vunpack.c.l.b16 %v2057
    %v2413 = vunpack.c.h.b16 %v2057
    %v2414 = vunpack.c.l.b16 %v2058
    %v2415 = vunpack.c.h.b16 %v2058
    %v2416 = vunpack.c.l.b16 %v2059
    %v2417 = vunpack.c.h.b16 %v2059
    %v2418 = vunpack.c.l.b16 %v2060
    %v2419 = vunpack.c.h.b16 %v2060
    %v2420 = vunpack.c.l.b16 %v2061
    %v2421 = vunpack.c.h.b16 %v2061
    %v2422 = vunpack.c.l.b16 %v2062
    %v2423 = vunpack.c.h.b16 %v2062
    %v2424 = vunpack.c.l.b16 %v2063
    %v2425 = vunpack.c.h.b16 %v2063
    %v2426 = vunpack.c.l.b16 %v2064
    %v2427 = vunpack.c.h.b16 %v2064
    %v2428 = vunpack.c.l.b16 %v2065
    %v2429 = vunpack.c.h.b16 %v2065
    %v2430 = vunpack.c.l.b16 %v2066
    %v2431 = vunpack.c.h.b16 %v2066
    %v2432 = vunpack.c.l.b16 %v2067
    %v2433 = vunpack.c.h.b16 %v2067
    %v2434 = vunpack.c.l.b16 %v2068
    %v2435 = vunpack.c.h.b16 %v2068
    %v2436 = vunpack.c.l.b16 %v2069
    %v2437 = vunpack.c.h.b16 %v2069
    %v2438 = vunpack.c.l.b16 %v2070
    %v2439 = vunpack.c.h.b16 %v2070
    %v2440 = vunpack.c.l.b16 %v2071
    %v2441 = vunpack.c.h.b16 %v2071
    %v2442 = vunpack.c.l.b16 %v2072
    %v2443 = vunpack.c.h.b16 %v2072
    %v2444 = vunpack.c.l.b16 %v2073
    %v2445 = vunpack.c.h.b16 %v2073
    %v2446 = vunpack.c.l.b16 %v2074
    %v2447 = vunpack.c.h.b16 %v2074
    %v2448 = vunpack.c.l.b16 %v2075
    %v2449 = vunpack.c.h.b16 %v2075
    %v2450 = vunpack.c.l.b16 %v2076
    %v2451 = vunpack.c.h.b16 %v2076
    %v2452 = vunpack.c.l.b16 %v2077
    %v2453 = vunpack.c.h.b16 %v2077
    %v2454 = vunpack.c.l.b16 %v2078
    %v2455 = vunpack.c.h.b16 %v2078
    %v2456 = vunpack.c.l.b16 %v2079
    %v2457 = vunpack.c.h.b16 %v2079
    %v2458 = vunpack.c.l.b16 %v2080
    %v2459 = vunpack.c.h.b16 %v2080
    %v2460 = vunpack.c.l.b16 %v2081
    %v2461 = vunpack.c.h.b16 %v2081
    %v2462 = vunpack.c.l.b16 %v2082
    %v2463 = vunpack.c.h.b16 %v2082
    %v2464 = vunpack.c.l.b16 %v2083
    %v2465 = vunpack.c.h.b16 %v2083
    %v2466 = vunpack.c.l.b16 %v2084
    %v2467 = vunpack.c.h.b16 %v2084
    %v2468 = vunpack.c.l.b16 %v2085
    %v2469 = vunpack.c.h.b16 %v2085
    %v2470 = vunpack.c.l.b16 %v2086
    %v2471 = vunpack.c.h.b16 %v2086
    %v2472 = vunpack.c.l.b16 %v2087
    %v2473 = vunpack.c.h.b16 %v2087
    %v2474 = vunpack.c.l.b16 %v2088
    %v2475 = vunpack.c.h.b16 %v2088
    %v2476 = vunpack.c.l.b16 %v2089
    %v2477 = vunpack.c.h.b16 %v2089
    %v2478 = vunpack.c.l.b16 %v2090
    %v2479 = vunpack.c.h.b16 %v2090
    %v2480 = vunpack.c.l.b16 %v2091
    %v2481 = vunpack.c.h.b16 %v2091
    %v2482 = vunpack.c.l.b16 %v2092
    %v2483 = vunpack.c.h.b16 %v2092
    %v2484 = vunpack.c.l.b16 %v2093
    %v2485 = vunpack.c.h.b16 %v2093
    %v2486 = vunpack.c.l.b16 %v2094
    %v2487 = vunpack.c.h.b16 %v2094
    %v2488 = vunpack.c.l.b16 %v2095
    %v2489 = vunpack.c.h.b16 %v2095
    %v2490 = vunpack.c.l.b16 %v2096
    %v2491 = vunpack.c.h.b16 %v2096
    %v2492 = vunpack.c.l.b16 %v2097
    %v2493 = vunpack.c.h.b16 %v2097
    %v2494 = vunpack.c.l.b16 %v2098
    %v2495 = vunpack.c.h.b16 %v2098
    %v2496 = vunpack.c.l.b16 %v2099
    %v2497 = vunpack.c.h.b16 %v2099
    %v2498 = vunpack.c.l.b16 %v2100
    %v2499 = vunpack.c.h.b16 %v2100
    %v2500 = vunpack.c.l.b16 %v2101
    %v2501 = vunpack.c.h.b16 %v2101
    %v2502 = vunpack.c.l.b16 %v2102
    %v2503 = vunpack.c.h.b16 %v2102
    %v2504 = vunpack.c.l.b16 %v2103
    %v2505 = vunpack.c.h.b16 %v2103
    %v2506 = vunpack.c.l.b16 %v2104
    %v2507 = vunpack.c.h.b16 %v2104
    %v2508 = vunpack.c.l.b16 %v2105
    %v2509 = vunpack.c.h.b16 %v2105
    %v2510 = vunpack.c.l.b16 %v2106
    %v2511 = vunpack.c.h.b16 %v2106
    %v2512 = vunpack.c.l.b16 %v2107
    %v2513 = vunpack.c.h.b16 %v2107
    %v2514 = vunpack.c.l.b16 %v2108
    %v2515 = vunpack.c.h.b16 %v2108
    %v2516 = vunpack.c.l.b16 %v2109
    %v2517 = vunpack.c.h.b16 %v2109
    %v2518 = vunpack.c.l.b16 %v2110
    %v2519 = vunpack.c.h.b16 %v2110
    %v2520 = vunpack.c.l.b16 %v2111
    %v2521 = vunpack.c.h.b16 %v2111
    %v2522 = vunpack.c.l.b16 %v2112
    %v2523 = vunpack.c.h.b16 %v2112
    %v2524 = vunpack.c.l.b16 %v2113
    %v2525 = vunpack.c.h.b16 %v2113
    %v2526 = vunpack.c.l.b16 %v2114
    %v2527 = vunpack.c.h.b16 %v2114
    %v2528 = vunpack.c.l.b16 %v2115
    %v2529 = vunpack.c.h.b16 %v2115
    %v2530 = vunpack.c.l.b16 %v2116
    %v2531 = vunpack.c.h.b16 %v2116
    %v2532 = vunpack.c.l.b16 %v2117
    %v2533 = vunpack.c.h.b16 %v2117
    %v2534 = vpack.c.b16 %v2286, %v2278
    %v2535 = vpack.c.b16 %v2287, %v2279
    %v2536 = vpack.c.b16 %v2288, %v2280
    %v2537 = vpack.c.b16 %v2289, %v2281
    %v2538 = vpack.c.b16 %v2290, %v2282
    %v2539 = vpack.c.b16 %v2291, %v2283
    %v2540 = vpack.c.b16 %v2292, %v2284
    %v2541 = vpack.c.b16 %v2293, %v2285
    %v2542 = vpack.c.b16 %v2302, %v2294
    %v2543 = vpack.c.b16 %v2303, %v2295
    %v2544 = vpack.c.b16 %v2304, %v2296
    %v2545 = vpack.c.b16 %v2305, %v2297
    %v2546 = vpack.c.b16 %v2306, %v2298
    %v2547 = vpack.c.b16 %v2307, %v2299
    %v2548 = vpack.c.b16 %v2308, %v2300
    %v2549 = vpack.c.b16 %v2309, %v2301
    %v2550 = vpack.c.b16 %v2318, %v2310
    %v2551 = vpack.c.b16 %v2319, %v2311
    %v2552 = vpack.c.b16 %v2320, %v2312
    %v2553 = vpack.c.b16 %v2321, %v2313
    %v2554 = vpack.c.b16 %v2322, %v2314
    %v2555 = vpack.c.b16 %v2323, %v2315
    %v2556 = vpack.c.b16 %v2324, %v2316
    %v2557 = vpack.c.b16 %v2325, %v2317
    %v2558 = vpack.c.b16 %v2334, %v2326
    %v2559 = vpack.c.b16 %v2335, %v2327
    %v2560 = vpack.c.b16 %v2336, %v2328
    %v2561 = vpack.c.b16 %v2337, %v2329
    %v2562 = vpack.c.b16 %v2338, %v2330
    %v2563 = vpack.c.b16 %v2339, %v2331
    %v2564 = vpack.c.b16 %v2340, %v2332
    %v2565 = vpack.c.b16 %v2341, %v2333
    %v2566 = vpack.c.b16 %v2350, %v2342
    %v2567 = vpack.c.b16 %v2351, %v2343
    %v2568 = vpack.c.b16 %v2352, %v2344
    %v2569 = vpack.c.b16 %v2353, %v2345
    %v2570 = vpack.c.b16 %v2354, %v2346
    %v2571 = vpack.c.b16 %v2355, %v2347
    %v2572 = vpack.c.b16 %v2356, %v2348
    %v2573 = vpack.c.b16 %v2357, %v2349
    %v2574 = vpack.c.b16 %v2366, %v2358
    %v2575 = vpack.c.b16 %v2367, %v2359
    %v2576 = vpack.c.b16 %v2368, %v2360
    %v2577 = vpack.c.b16 %v2369, %v2361
    %v2578 = vpack.c.b16 %v2370, %v2362
    %v2579 = vpack.c.b16 %v2371, %v2363
    %v2580 = vpack.c.b16 %v2372, %v2364
    %v2581 = vpack.c.b16 %v2373, %v2365
    %v2582 = vpack.c.b16 %v2382, %v2374
    %v2583 = vpack.c.b16 %v2383, %v2375
    %v2584 = vpack.c.b16 %v2384, %v2376
    %v2585 = vpack.c.b16 %v2385, %v2377
    %v2586 = vpack.c.b16 %v2386, %v2378
    %v2587 = vpack.c.b16 %v2387, %v2379
    %v2588 = vpack.c.b16 %v2388, %v2380
    %v2589 = vpack.c.b16 %v2389, %v2381
    %v2590 = vpack.c.b16 %v2398, %v2390
    %v2591 = vpack.c.b16 %v2399, %v2391
    %v2592 = vpack.c.b16 %v2400, %v2392
    %v2593 = vpack.c.b16 %v2401, %v2393
    %v2594 = vpack.c.b16 %v2402, %v2394
    %v2595 = vpack.c.b16 %v2403, %v2395
    %v2596 = vpack.c.b16 %v2404, %v2396
    %v2597 = vpack.c.b16 %v2405, %v2397
    %v2598 = vpack.c.b16 %v2414, %v2406
    %v2599 = vpack.c.b16 %v2415, %v2407
    %v2600 = vpack.c.b16 %v2416, %v2408
    %v2601 = vpack.c.b16 %v2417, %v2409
    %v2602 = vpack.c.b16 %v2418, %v2410
    %v2603 = vpack.c.b16 %v2419, %v2411
    %v2604 = vpack.c.b16 %v2420, %v2412
    %v2605 = vpack.c.b16 %v2421, %v2413
    %v2606 = vpack.c.b16 %v2430, %v2422
    %v2607 = vpack.c.b16 %v2431, %v2423
    %v2608 = vpack.c.b16 %v2432, %v2424
    %v2609 = vpack.c.b16 %v2433, %v2425
    %v2610 = vpack.c.b16 %v2434, %v2426
    %v2611 = vpack.c.b16 %v2435, %v2427
    %v2612 = vpack.c.b16 %v2436, %v2428
    %v2613 = vpack.c.b16 %v2437, %v2429
    %v2614 = vpack.c.b16 %v2446, %v2438
    %v2615 = vpack.c.b16 %v2447, %v2439
    %v2616 = vpack.c.b16 %v2448, %v2440
    %v2617 = vpack.c.b16 %v2449, %v2441
    %v2618 = vpack.c.b16 %v2450, %v2442
    %v2619 = vpack.c.b16 %v2451, %v2443
    %v2620 = vpack.c.b16 %v2452, %v2444
    %v2621 = vpack.c.b16 %v2453, %v2445
    %v2622 = vpack.c.b16 %v2462, %v2454
    %v2623 = vpack.c.b16 %v2463, %v2455
    %v2624 = vpack.c.b16 %v2464, %v2456
    %v2625 = vpack.c.b16 %v2465, %v2457
    %v2626 = vpack.c.b16 %v2466, %v2458
    %v2627 = vpack.c.b16 %v2467, %v2459
    %v2628 = vpack.c.b16 %v2468, %v2460
    %v2629 = vpack.c.b16 %v2469, %v2461
    %v2630 = vpack.c.b16 %v2478, %v2470
    %v2631 = vpack.c.b16 %v2479, %v2471
    %v2632 = vpack.c.b16 %v2480, %v2472
    %v2633 = vpack.c.b16 %v2481, %v2473
    %v2634 = vpack.c.b16 %v2482, %v2474
    %v2635 = vpack.c.b16 %v2483, %v2475
    %v2636 = vpack.c.b16 %v2484, %v2476
    %v2637 = vpack.c.b16 %v2485, %v2477
    %v2638 = vpack.c.b16 %v2494, %v2486
    %v2639 = vpack.c.b16 %v2495, %v2487
    %v2640 = vpack.c.b16 %v2496, %v2488
    %v2641 = vpack.c.b16 %v2497, %v2489
    %v2642 = vpack.c.b16 %v2498, %v2490
    %v2643 = vpack.c.b16 %v2499, %v2491
    %v2644 = vpack.c.b16 %v2500, %v2492
    %v2645 = vpack.c.b16 %v2501, %v2493
    %v2646 = vpack.c.b16 %v2510, %v2502
    %v2647 = vpack.c.b16 %v2511, %v2503
    %v2648 = vpack.c.b16 %v2512, %v2504
    %v2649 = vpack.c.b16 %v2513, %v2505
    %v2650 = vpack.c.b16 %v2514, %v2506
    %v2651 = vpack.c.b16 %v2515, %v2507
    %v2652 = vpack.c.b16 %v2516, %v2508
    %v2653 = vpack.c.b16 %v2517, %v2509
    %v2654 = vpack.c.b16 %v2526, %v2518
    %v2655 = vpack.c.b16 %v2527, %v2519
    %v2656 = vpack.c.b16 %v2528, %v2520
    %v2657 = vpack.c.b16 %v2529, %v2521
    %v2658 = vpack.c.b16 %v2530, %v2522
    %v2659 = vpack.c.b16 %v2531, %v2523
    %v2660 = vpack.c.b16 %v2532, %v2524
    %v2661 = vpack.c.b16 %v2533, %v2525
    %2790 = vmatprep.subr.bf16.mxu0 %v2535
    %2791 = vmatpush1.bf16.msra.mxu0 %v2534
    %2792 = vmatprep.subr.bf16.mxu0 %v2543
    %2793 = vmatpush1.bf16.msra.mxu0 %v2542
    %2794 = vmatprep.subr.bf16.mxu0 %v2551
    %2795 = vmatpush1.bf16.msra.mxu0 %v2550
    %2796 = vmatprep.subr.bf16.mxu0 %v2559
    %2797 = vmatpush1.bf16.msra.mxu0 %v2558
    %2798 = vmatprep.subr.bf16.mxu0 %v2567
    %2799 = vmatpush1.bf16.msra.mxu0 %v2566
    %2800 = vmatprep.subr.bf16.mxu0 %v2575
    %2801 = vmatpush1.bf16.msra.mxu0 %v2574
    %2802 = vmatprep.subr.bf16.mxu0 %v2583
    %2803 = vmatpush1.bf16.msra.mxu0 %v2582
    %2804 = vmatprep.subr.bf16.mxu0 %v2591
    %2805 = vmatpush1.bf16.msra.mxu0 %v2590
    %2806 = vmatprep.subr.bf16.mxu0 %v2599
    %2807 = vmatpush1.bf16.msra.mxu0 %v2598
    %2808 = vmatprep.subr.bf16.mxu0 %v2607
    %2809 = vmatpush1.bf16.msra.mxu0 %v2606
    %2810 = vmatprep.subr.bf16.mxu0 %v2615
    %2811 = vmatpush1.bf16.msra.mxu0 %v2614
    %2812 = vmatprep.subr.bf16.mxu0 %v2623
    %2813 = vmatpush1.bf16.msra.mxu0 %v2622
    %2814 = vmatprep.subr.bf16.mxu0 %v2631
    %2815 = vmatpush1.bf16.msra.mxu0 %v2630
    %2816 = vmatprep.subr.bf16.mxu0 %v2639
    %2817 = vmatpush1.bf16.msra.mxu0 %v2638
    %2818 = vmatprep.subr.bf16.mxu0 %v2647
    %2819 = vmatpush1.bf16.msra.mxu0 %v2646
    %2820 = vmatprep.subr.bf16.mxu0 %v2655
    %2821 = vmatpush1.bf16.msra.mxu0 %v2654
    %2822 = vmatprep.mubr.bf16.mxu0 %v1989
    %2823 = vmatmul.mubr.bf16.gmra.mrb[0].mxu0 %v1988
    %v2824 = vpop.f32.mrb[0].mxu0
    %v2825 = vadd.f32 %v2121, %v2824
    %v2826 = vpop.f32.mrb[0].mxu0
    %v2827 = vadd.f32 %v2125, %v2826
    %v2828 = vpop.f32.mrb[0].mxu0
    %v2829 = vadd.f32 %v2121, %v2828
    %v2830 = vpop.f32.mrb[0].mxu0
    %v2831 = vadd.f32 %v2125, %v2830
    %2832 = vdwg.mxu0
    %2833 = vmatprep.subr.bf16.mxu0 %v2537
    %2834 = vmatpush1.bf16.msra.mxu0 %v2536
    %2835 = vmatprep.subr.bf16.mxu0 %v2545
    %2836 = vmatpush1.bf16.msra.mxu0 %v2544
    %2837 = vmatprep.subr.bf16.mxu0 %v2553
    %2838 = vmatpush1.bf16.msra.mxu0 %v2552
    %2839 = vmatprep.subr.bf16.mxu0 %v2561
    %2840 = vmatpush1.bf16.msra.mxu0 %v2560
    %2841 = vmatprep.subr.bf16.mxu0 %v2569
    %2842 = vmatpush1.bf16.msra.mxu0 %v2568
    %2843 = vmatprep.subr.bf16.mxu0 %v2577
    %2844 = vmatpush1.bf16.msra.mxu0 %v2576
    %2845 = vmatprep.subr.bf16.mxu0 %v2585
    %2846 = vmatpush1.bf16.msra.mxu0 %v2584
    %2847 = vmatprep.subr.bf16.mxu0 %v2593
    %2848 = vmatpush1.bf16.msra.mxu0 %v2592
    %2849 = vmatprep.subr.bf16.mxu0 %v2601
    %2850 = vmatpush1.bf16.msra.mxu0 %v2600
    %2851 = vmatprep.subr.bf16.mxu0 %v2609
    %2852 = vmatpush1.bf16.msra.mxu0 %v2608
    %2853 = vmatprep.subr.bf16.mxu0 %v2617
    %2854 = vmatpush1.bf16.msra.mxu0 %v2616
    %2855 = vmatprep.subr.bf16.mxu0 %v2625
    %2856 = vmatpush1.bf16.msra.mxu0 %v2624
    %2857 = vmatprep.subr.bf16.mxu0 %v2633
    %2858 = vmatpush1.bf16.msra.mxu0 %v2632
    %2859 = vmatprep.subr.bf16.mxu0 %v2641
    %2860 = vmatpush1.bf16.msra.mxu0 %v2640
    %2861 = vmatprep.subr.bf16.mxu0 %v2649
    %2862 = vmatpush1.bf16.msra.mxu0 %v2648
    %2863 = vmatprep.subr.bf16.mxu0 %v2657
    %2864 = vmatpush1.bf16.msra.mxu0 %v2656
    %2865 = vmatprep.mubr.bf16.mxu0 %v1989
    %2866 = vmatmul.mubr.bf16.gmra.mrb[0].mxu0 %v1988
    %v2867 = vpop.f32.mrb[0].mxu0
    %v2868 = vadd.f32 %v2129, %v2867
    %v2869 = vpop.f32.mrb[0].mxu0
    %v2870 = vadd.f32 %v2133, %v2869
    %v2871 = vpop.f32.mrb[0].mxu0
    %v2872 = vadd.f32 %v2129, %v2871
    %v2873 = vpop.f32.mrb[0].mxu0
    %v2874 = vadd.f32 %v2133, %v2873
    %2875 = vdwg.mxu0
    %2876 = vmatprep.subr.bf16.mxu0 %v2539
    %2877 = vmatpush1.bf16.msra.mxu0 %v2538
    %2878 = vmatprep.subr.bf16.mxu0 %v2547
    %2879 = vmatpush1.bf16.msra.mxu0 %v2546
    %2880 = vmatprep.subr.bf16.mxu0 %v2555
    %2881 = vmatpush1.bf16.msra.mxu0 %v2554
    %2882 = vmatprep.subr.bf16.mxu0 %v2563
    %2883 = vmatpush1.bf16.msra.mxu0 %v2562
    %2884 = vmatprep.subr.bf16.mxu0 %v2571
    %2885 = vmatpush1.bf16.msra.mxu0 %v2570
    %2886 = vmatprep.subr.bf16.mxu0 %v2579
    %2887 = vmatpush1.bf16.msra.mxu0 %v2578
    %2888 = vmatprep.subr.bf16.mxu0 %v2587
    %2889 = vmatpush1.bf16.msra.mxu0 %v2586
    %2890 = vmatprep.subr.bf16.mxu0 %v2595
    %2891 = vmatpush1.bf16.msra.mxu0 %v2594
    %2892 = vmatprep.subr.bf16.mxu0 %v2603
    %2893 = vmatpush1.bf16.msra.mxu0 %v2602
    %2894 = vmatprep.subr.bf16.mxu0 %v2611
    %2895 = vmatpush1.bf16.msra.mxu0 %v2610
    %2896 = vmatprep.subr.bf16.mxu0 %v2619
    %2897 = vmatpush1.bf16.msra.mxu0 %v2618
    %2898 = vmatprep.subr.bf16.mxu0 %v2627
    %2899 = vmatpush1.bf16.msra.mxu0 %v2626
    %2900 = vmatprep.subr.bf16.mxu0 %v2635
    %2901 = vmatpush1.bf16.msra.mxu0 %v2634
    %2902 = vmatprep.subr.bf16.mxu0 %v2643
    %2903 = vmatpush1.bf16.msra.mxu0 %v2642
    %2904 = vmatprep.subr.bf16.mxu0 %v2651
    %2905 = vmatpush1.bf16.msra.mxu0 %v2650
    %2906 = vmatprep.subr.bf16.mxu0 %v2659
    %2907 = vmatpush1.bf16.msra.mxu0 %v2658
    %2908 = vmatprep.mubr.bf16.mxu0 %v1989
    %2909 = vmatmul.mubr.bf16.gmra.mrb[0].mxu0 %v1988
    %v2910 = vpop.f32.mrb[0].mxu0
    %v2911 = vadd.f32 %v2137, %v2910
    %v2912 = vpop.f32.mrb[0].mxu0
    %v2913 = vadd.f32 %v2141, %v2912
    %v2914 = vpop.f32.mrb[0].mxu0
    %v2915 = vadd.f32 %v2137, %v2914
    %v2916 = vpop.f32.mrb[0].mxu0
    %v2917 = vadd.f32 %v2141, %v2916
    %2918 = vdwg.mxu0
    %2919 = vmatprep.subr.bf16.mxu0 %v2541
    %2920 = vmatpush1.bf16.msra.mxu0 %v2540
    %2921 = vmatprep.subr.bf16.mxu0 %v2549
    %2922 = vmatpush1.bf16.msra.mxu0 %v2548
    %2923 = vmatprep.subr.bf16.mxu0 %v2557
    %2924 = vmatpush1.bf16.msra.mxu0 %v2556
    %2925 = vmatprep.subr.bf16.mxu0 %v2565
    %2926 = vmatpush1.bf16.msra.mxu0 %v2564
    %2927 = vmatprep.subr.bf16.mxu0 %v2573
    %2928 = vmatpush1.bf16.msra.mxu0 %v2572
    %2929 = vmatprep.subr.bf16.mxu0 %v2581
    %2930 = vmatpush1.bf16.msra.mxu0 %v2580
    %2931 = vmatprep.subr.bf16.mxu0 %v2589
    %2932 = vmatpush1.bf16.msra.mxu0 %v2588
    %2933 = vmatprep.subr.bf16.mxu0 %v2597
    %2934 = vmatpush1.bf16.msra.mxu0 %v2596
    %2935 = vmatprep.subr.bf16.mxu0 %v2605
    %2936 = vmatpush1.bf16.msra.mxu0 %v2604
    %2937 = vmatprep.subr.bf16.mxu0 %v2613
    %2938 = vmatpush1.bf16.msra.mxu0 %v2612
    %2939 = vmatprep.subr.bf16.mxu0 %v2621
    %2940 = vmatpush1.bf16.msra.mxu0 %v2620
    %2941 = vmatprep.subr.bf16.mxu0 %v2629
    %2942 = vmatpush1.bf16.msra.mxu0 %v2628
    %2943 = vmatprep.subr.bf16.mxu0 %v2637
    %2944 = vmatpush1.bf16.msra.mxu0 %v2636
    %2945 = vmatprep.subr.bf16.mxu0 %v2645
    %2946 = vmatpush1.bf16.msra.mxu0 %v2644
    %2947 = vmatprep.subr.bf16.mxu0 %v2653
    %2948 = vmatpush1.bf16.msra.mxu0 %v2652
    %2949 = vmatprep.subr.bf16.mxu0 %v2661
    %2950 = vmatpush1.bf16.msra.mxu0 %v2660
    %2951 = vmatprep.mubr.bf16.mxu0 %v1989
    %2952 = vmatmul.mubr.bf16.gmra.mrb[0].mxu0 %v1988
    %v2953 = vpop.f32.mrb[0].mxu0
    %v2954 = vadd.f32 %v2145, %v2953
    %v2955 = vpop.f32.mrb[0].mxu0
    %v2956 = vadd.f32 %v2149, %v2955
    %v2957 = vpop.f32.mrb[0].mxu0
    %v2958 = vadd.f32 %v2145, %v2957
    %v2959 = vpop.f32.mrb[0].mxu0
    %v2960 = vadd.f32 %v2149, %v2959
    %2961 = vdwg.mxu0
    %v2962 = vmul.f32 %v2825, %v2825
    %v2963 = vmul.f32 %v2827, %v2827
    %v2964 = vmul.f32 %v2868, %v2868
    %v2965 = vmul.f32 %v2870, %v2870
    %v2966 = vmul.f32 %v2911, %v2911
    %v2967 = vmul.f32 %v2913, %v2913
    %v2968 = vmul.f32 %v2954, %v2954
    %v2969 = vmul.f32 %v2956, %v2956
    %v2970 = vmul.f32 %v2829, %v2829
    %v2971 = vmul.f32 %v2831, %v2831
    %v2972 = vmul.f32 %v2872, %v2872
    %v2973 = vmul.f32 %v2874, %v2874
    %v2974 = vmul.f32 %v2915, %v2915
    %v2975 = vmul.f32 %v2917, %v2917
    %v2976 = vmul.f32 %v2958, %v2958
    %v2977 = vmul.f32 %v2960, %v2960
    %v2978 = vmul.f32 %v2825, %v2962
    %v2979 = vmul.f32 %v2827, %v2963
    %v2980 = vmul.f32 %v2868, %v2964
    %v2981 = vmul.f32 %v2870, %v2965
    %v2982 = vmul.f32 %v2911, %v2966
    %v2983 = vmul.f32 %v2913, %v2967
    %v2984 = vmul.f32 %v2954, %v2968
    %v2985 = vmul.f32 %v2956, %v2969
    %v2986 = vmul.f32 %v2829, %v2970
    %v2987 = vmul.f32 %v2831, %v2971
    %v2988 = vmul.f32 %v2872, %v2972
    %v2989 = vmul.f32 %v2874, %v2973
    %v2990 = vmul.f32 %v2915, %v2974
    %v2991 = vmul.f32 %v2917, %v2975
    %v2992 = vmul.f32 %v2958, %v2976
    %v2993 = vmul.f32 %v2960, %v2977
    %v2994 = vmul.f32 %v2978, 0.044715
    %v2995 = vmul.f32 %v2979, 0.044715
    %v2996 = vmul.f32 %v2980, 0.044715
    %v2997 = vmul.f32 %v2981, 0.044715
    %v2998 = vmul.f32 %v2982, 0.044715
    %v2999 = vmul.f32 %v2983, 0.044715
    %v3000 = vmul.f32 %v2984, 0.044715
    %v3001 = vmul.f32 %v2985, 0.044715
    %v3002 = vmul.f32 %v2986, 0.044715
    %v3003 = vmul.f32 %v2987, 0.044715
    %v3004 = vmul.f32 %v2988, 0.044715
    %v3005 = vmul.f32 %v2989, 0.044715
    %v3006 = vmul.f32 %v2990, 0.044715
    %v3007 = vmul.f32 %v2991, 0.044715
    %v3008 = vmul.f32 %v2992, 0.044715
    %v3009 = vmul.f32 %v2993, 0.044715
    %v3010 = vadd.f32 %v2825, %v2994
    %v3011 = vadd.f32 %v2827, %v2995
    %v3012 = vadd.f32 %v2868, %v2996
    %v3013 = vadd.f32 %v2870, %v2997
    %v3014 = vadd.f32 %v2911, %v2998
    %v3015 = vadd.f32 %v2913, %v2999
    %v3016 = vadd.f32 %v2954, %v3000
    %v3017 = vadd.f32 %v2956, %v3001
    %v3018 = vadd.f32 %v2829, %v3002
    %v3019 = vadd.f32 %v2831, %v3003
    %v3020 = vadd.f32 %v2872, %v3004
    %v3021 = vadd.f32 %v2874, %v3005
    %v3022 = vadd.f32 %v2915, %v3006
    %v3023 = vadd.f32 %v2917, %v3007
    %v3024 = vadd.f32 %v2958, %v3008
    %v3025 = vadd.f32 %v2960, %v3009
    %v3026 = vmul.f32 %v3010, 0.7978846
    %v3027 = vmul.f32 %v3011, 0.7978846
    %v3028 = vmul.f32 %v3012, 0.7978846
    %v3029 = vmul.f32 %v3013, 0.7978846
    %v3030 = vmul.f32 %v3014, 0.7978846
    %v3031 = vmul.f32 %v3015, 0.7978846
    %v3032 = vmul.f32 %v3016, 0.7978846
    %v3033 = vmul.f32 %v3017, 0.7978846
    %v3034 = vmul.f32 %v3018, 0.7978846
    %v3035 = vmul.f32 %v3019, 0.7978846
    %v3036 = vmul.f32 %v3020, 0.7978846
    %v3037 = vmul.f32 %v3021, 0.7978846
    %v3038 = vmul.f32 %v3022, 0.7978846
    %v3039 = vmul.f32 %v3023, 0.7978846
    %v3040 = vmul.f32 %v3024, 0.7978846
    %v3041 = vmul.f32 %v3025, 0.7978846
    %v3042 = vtanh.pop %v3026
    %v3043 = vtanh.pop %v3027
    %v3044 = vtanh.pop %v3028
    %v3045 = vtanh.pop %v3029
    %v3046 = vtanh.pop %v3030
    %v3047 = vtanh.pop %v3031
    %v3048 = vtanh.pop %v3032
    %v3049 = vtanh.pop %v3033
    %v3050 = vtanh.pop %v3034
    %v3051 = vtanh.pop %v3035
    %v3052 = vtanh.pop %v3036
    %v3053 = vtanh.pop %v3037
    %v3054 = vtanh.pop %v3038
    %v3055 = vtanh.pop %v3039
    %v3056 = vtanh.pop %v3040
    %v3057 = vtanh.pop %v3041
    %v3058 = vadd.f32 %v3042, 1.0
    %v3059 = vadd.f32 %v3043, 1.0
    %v3060 = vadd.f32 %v3044, 1.0
    %v3061 = vadd.f32 %v3045, 1.0
    %v3062 = vadd.f32 %v3046, 1.0
    %v3063 = vadd.f32 %v3047, 1.0
    %v3064 = vadd.f32 %v3048, 1.0
    %v3065 = vadd.f32 %v3049, 1.0
    %v3066 = vadd.f32 %v3050, 1.0
    %v3067 = vadd.f32 %v3051, 1.0
    %v3068 = vadd.f32 %v3052, 1.0
    %v3069 = vadd.f32 %v3053, 1.0
    %v3070 = vadd.f32 %v3054, 1.0
    %v3071 = vadd.f32 %v3055, 1.0
    %v3072 = vadd.f32 %v3056, 1.0
    %v3073 = vadd.f32 %v3057, 1.0
    %v3074 = vmul.f32 %v3058, 0.5
    %v3075 = vmul.f32 %v3059, 0.5
    %v3076 = vmul.f32 %v3060, 0.5
    %v3077 = vmul.f32 %v3061, 0.5
    %v3078 = vmul.f32 %v3062, 0.5
    %v3079 = vmul.f32 %v3063, 0.5
    %v3080 = vmul.f32 %v3064, 0.5
    %v3081 = vmul.f32 %v3065, 0.5
    %v3082 = vmul.f32 %v3066, 0.5
    %v3083 = vmul.f32 %v3067, 0.5
    %v3084 = vmul.f32 %v3068, 0.5
    %v3085 = vmul.f32 %v3069, 0.5
    %v3086 = vmul.f32 %v3070, 0.5
    %v3087 = vmul.f32 %v3071, 0.5
    %v3088 = vmul.f32 %v3072, 0.5
    %v3089 = vmul.f32 %v3073, 0.5
    %v3090 = vmul.f32 %v2825, %v3074
    %v3091 = vmul.f32 %v2827, %v3075
    %v3092 = vmul.f32 %v2868, %v3076
    %v3093 = vmul.f32 %v2870, %v3077
    %v3094 = vmul.f32 %v2911, %v3078
    %v3095 = vmul.f32 %v2913, %v3079
    %v3096 = vmul.f32 %v2954, %v3080
    %v3097 = vmul.f32 %v2956, %v3081
    %v3098 = vmul.f32 %v2829, %v3082
    %v3099 = vmul.f32 %v2831, %v3083
    %v3100 = vmul.f32 %v2872, %v3084
    %v3101 = vmul.f32 %v2874, %v3085
    %v3102 = vmul.f32 %v2915, %v3086
    %v3103 = vmul.f32 %v2917, %v3087
    %v3104 = vmul.f32 %v2958, %v3088
    %v3105 = vmul.f32 %v2960, %v3089
    %v3106 = vpack.c.bf16 %v3098, %v3090
    %v3107 = vpack.c.bf16 %v3099, %v3091
    %v3108 = vpack.c.bf16 %v3100, %v3092
    %v3109 = vpack.c.bf16 %v3101, %v3093
    %v3110 = vpack.c.bf16 %v3102, %v3094
    %v3111 = vpack.c.bf16 %v3103, %v3095
    %v3112 = vpack.c.bf16 %v3104, %v3096
    %v3113 = vpack.c.bf16 %v3105, %v3097
    %v3114 = vld [vmem:[#allocation10] sm:$0xff]
    %v3115 = vld [vmem:[#allocation10 + $0x8] sm:$0xff]
    %v3116 = vld [vmem:[#allocation10 + $0x10] sm:$0xff]
    %v3117 = vld [vmem:[#allocation10 + $0x18] sm:$0xff]
    %v3118 = vld [vmem:[#allocation10 + $0x20] sm:$0xff]
    %v3119 = vld [vmem:[#allocation10 + $0x28] sm:$0xff]
    %v3120 = vld [vmem:[#allocation10 + $0x30] sm:$0xff]
    %v3121 = vld [vmem:[#allocation10 + $0x38] sm:$0xff]
    %v3122 = vld [vmem:[#allocation10 + $0x40] sm:$0xff]
    %v3123 = vld [vmem:[#allocation10 + $0x48] sm:$0xff]
    %v3124 = vld [vmem:[#allocation10 + $0x50] sm:$0xff]
    %v3125 = vld [vmem:[#allocation10 + $0x58] sm:$0xff]
    %v3126 = vld [vmem:[#allocation10 + $0x60] sm:$0xff]
    %v3127 = vld [vmem:[#allocation10 + $0x68] sm:$0xff]
    %v3128 = vld [vmem:[#allocation10 + $0x70] sm:$0xff]
    %v3129 = vld [vmem:[#allocation10 + $0x78] sm:$0xff]
    %v3130 = vld [vmem:[#allocation10 + $0x80] sm:$0xff]
    %v3131 = vld [vmem:[#allocation10 + $0x88] sm:$0xff]
    %v3132 = vld [vmem:[#allocation10 + $0x90] sm:$0xff]
    %v3133 = vld [vmem:[#allocation10 + $0x98] sm:$0xff]
    %v3134 = vld [vmem:[#allocation10 + $0xa0] sm:$0xff]
    %v3135 = vld [vmem:[#allocation10 + $0xa8] sm:$0xff]
    %v3136 = vld [vmem:[#allocation10 + $0xb0] sm:$0xff]
    %v3137 = vld [vmem:[#allocation10 + $0xb8] sm:$0xff]
    %v3138 = vld [vmem:[#allocation10 + $0xc0] sm:$0xff]
    %v3139 = vld [vmem:[#allocation10 + $0xc8] sm:$0xff]
    %v3140 = vld [vmem:[#allocation10 + $0xd0] sm:$0xff]
    %v3141 = vld [vmem:[#allocation10 + $0xd8] sm:$0xff]
    %v3142 = vld [vmem:[#allocation10 + $0xe0] sm:$0xff]
    %v3143 = vld [vmem:[#allocation10 + $0xe8] sm:$0xff]
    %v3144 = vld [vmem:[#allocation10 + $0xf0] sm:$0xff]
    %v3145 = vld [vmem:[#allocation10 + $0xf8] sm:$0xff]
    %v3146 = vld [vmem:[#allocation10 + $0x100] sm:$0xff]
    %v3147 = vld [vmem:[#allocation10 + $0x108] sm:$0xff]
    %v3148 = vld [vmem:[#allocation10 + $0x110] sm:$0xff]
    %v3149 = vld [vmem:[#allocation10 + $0x118] sm:$0xff]
    %v3150 = vld [vmem:[#allocation10 + $0x120] sm:$0xff]
    %v3151 = vld [vmem:[#allocation10 + $0x128] sm:$0xff]
    %v3152 = vld [vmem:[#allocation10 + $0x130] sm:$0xff]
    %v3153 = vld [vmem:[#allocation10 + $0x138] sm:$0xff]
    %v3154 = vld [vmem:[#allocation10 + $0x140] sm:$0xff]
    %v3155 = vld [vmem:[#allocation10 + $0x148] sm:$0xff]
    %v3156 = vld [vmem:[#allocation10 + $0x150] sm:$0xff]
    %v3157 = vld [vmem:[#allocation10 + $0x158] sm:$0xff]
    %v3158 = vld [vmem:[#allocation10 + $0x160] sm:$0xff]
    %v3159 = vld [vmem:[#allocation10 + $0x168] sm:$0xff]
    %v3160 = vld [vmem:[#allocation10 + $0x170] sm:$0xff]
    %v3161 = vld [vmem:[#allocation10 + $0x178] sm:$0xff]
    %v3162 = vld [vmem:[#allocation10 + $0x180] sm:$0xff]
    %v3163 = vld [vmem:[#allocation10 + $0x188] sm:$0xff]
    %v3164 = vld [vmem:[#allocation10 + $0x190] sm:$0xff]
    %v3165 = vld [vmem:[#allocation10 + $0x198] sm:$0xff]
    %v3166 = vld [vmem:[#allocation10 + $0x1a0] sm:$0xff]
    %v3167 = vld [vmem:[#allocation10 + $0x1a8] sm:$0xff]
    %v3168 = vld [vmem:[#allocation10 + $0x1b0] sm:$0xff]
    %v3169 = vld [vmem:[#allocation10 + $0x1b8] sm:$0xff]
    %v3170 = vld [vmem:[#allocation10 + $0x1c0] sm:$0xff]
    %v3171 = vld [vmem:[#allocation10 + $0x1c8] sm:$0xff]
    %v3172 = vld [vmem:[#allocation10 + $0x1d0] sm:$0xff]
    %v3173 = vld [vmem:[#allocation10 + $0x1d8] sm:$0xff]
    %v3174 = vld [vmem:[#allocation10 + $0x1e0] sm:$0xff]
    %v3175 = vld [vmem:[#allocation10 + $0x1e8] sm:$0xff]
    %v3176 = vld [vmem:[#allocation10 + $0x1f0] sm:$0xff]
    %v3177 = vld [vmem:[#allocation10 + $0x1f8] sm:$0xff]
    %v3178 = vld [vmem:[#allocation10 + $0x200] sm:$0xff]
    %v3179 = vld [vmem:[#allocation10 + $0x208] sm:$0xff]
    %v3180 = vld [vmem:[#allocation10 + $0x210] sm:$0xff]
    %v3181 = vld [vmem:[#allocation10 + $0x218] sm:$0xff]
    %v3182 = vld [vmem:[#allocation10 + $0x220] sm:$0xff]
    %v3183 = vld [vmem:[#allocation10 + $0x228] sm:$0xff]
    %v3184 = vld [vmem:[#allocation10 + $0x230] sm:$0xff]
    %v3185 = vld [vmem:[#allocation10 + $0x238] sm:$0xff]
    %v3186 = vld [vmem:[#allocation10 + $0x240] sm:$0xff]
    %v3187 = vld [vmem:[#allocation10 + $0x248] sm:$0xff]
    %v3188 = vld [vmem:[#allocation10 + $0x250] sm:$0xff]
    %v3189 = vld [vmem:[#allocation10 + $0x258] sm:$0xff]
    %v3190 = vld [vmem:[#allocation10 + $0x260] sm:$0xff]
    %v3191 = vld [vmem:[#allocation10 + $0x268] sm:$0xff]
    %v3192 = vld [vmem:[#allocation10 + $0x270] sm:$0xff]
    %v3193 = vld [vmem:[#allocation10 + $0x278] sm:$0xff]
    %v3194 = vld [vmem:[#allocation10 + $0x280] sm:$0xff]
    %v3195 = vld [vmem:[#allocation10 + $0x288] sm:$0xff]
    %v3196 = vld [vmem:[#allocation10 + $0x290] sm:$0xff]
    %v3197 = vld [vmem:[#allocation10 + $0x298] sm:$0xff]
    %v3198 = vld [vmem:[#allocation10 + $0x2a0] sm:$0xff]
    %v3199 = vld [vmem:[#allocation10 + $0x2a8] sm:$0xff]
    %v3200 = vld [vmem:[#allocation10 + $0x2b0] sm:$0xff]
    %v3201 = vld [vmem:[#allocation10 + $0x2b8] sm:$0xff]
    %v3202 = vld [vmem:[#allocation10 + $0x2c0] sm:$0xff]
    %v3203 = vld [vmem:[#allocation10 + $0x2c8] sm:$0xff]
    %v3204 = vld [vmem:[#allocation10 + $0x2d0] sm:$0xff]
    %v3205 = vld [vmem:[#allocation10 + $0x2d8] sm:$0xff]
    %v3206 = vld [vmem:[#allocation10 + $0x2e0] sm:$0xff]
    %v3207 = vld [vmem:[#allocation10 + $0x2e8] sm:$0xff]
    %v3208 = vld [vmem:[#allocation10 + $0x2f0] sm:$0xff]
    %v3209 = vld [vmem:[#allocation10 + $0x2f8] sm:$0xff]
    %v3210 = vld [vmem:[#allocation10 + $0x300] sm:$0xff]
    %v3211 = vld [vmem:[#allocation10 + $0x308] sm:$0xff]
    %v3212 = vld [vmem:[#allocation10 + $0x310] sm:$0xff]
    %v3213 = vld [vmem:[#allocation10 + $0x318] sm:$0xff]
    %v3214 = vld [vmem:[#allocation10 + $0x320] sm:$0xff]
    %v3215 = vld [vmem:[#allocation10 + $0x328] sm:$0xff]
    %v3216 = vld [vmem:[#allocation10 + $0x330] sm:$0xff]
    %v3217 = vld [vmem:[#allocation10 + $0x338] sm:$0xff]
    %v3218 = vld [vmem:[#allocation10 + $0x340] sm:$0xff]
    %v3219 = vld [vmem:[#allocation10 + $0x348] sm:$0xff]
    %v3220 = vld [vmem:[#allocation10 + $0x350] sm:$0xff]
    %v3221 = vld [vmem:[#allocation10 + $0x358] sm:$0xff]
    %v3222 = vld [vmem:[#allocation10 + $0x360] sm:$0xff]
    %v3223 = vld [vmem:[#allocation10 + $0x368] sm:$0xff]
    %v3224 = vld [vmem:[#allocation10 + $0x370] sm:$0xff]
    %v3225 = vld [vmem:[#allocation10 + $0x378] sm:$0xff]
    %v3226 = vld [vmem:[#allocation10 + $0x380] sm:$0xff]
    %v3227 = vld [vmem:[#allocation10 + $0x388] sm:$0xff]
    %v3228 = vld [vmem:[#allocation10 + $0x390] sm:$0xff]
    %v3229 = vld [vmem:[#allocation10 + $0x398] sm:$0xff]
    %v3230 = vld [vmem:[#allocation10 + $0x3a0] sm:$0xff]
    %v3231 = vld [vmem:[#allocation10 + $0x3a8] sm:$0xff]
    %v3232 = vld [vmem:[#allocation10 + $0x3b0] sm:$0xff]
    %v3233 = vld [vmem:[#allocation10 + $0x3b8] sm:$0xff]
    %v3234 = vld [vmem:[#allocation10 + $0x3c0] sm:$0xff]
    %v3235 = vld [vmem:[#allocation10 + $0x3c8] sm:$0xff]
    %v3236 = vld [vmem:[#allocation10 + $0x3d0] sm:$0xff]
    %v3237 = vld [vmem:[#allocation10 + $0x3d8] sm:$0xff]
    %v3238 = vld [vmem:[#allocation10 + $0x3e0] sm:$0xff]
    %v3239 = vld [vmem:[#allocation10 + $0x3e8] sm:$0xff]
    %v3240 = vld [vmem:[#allocation10 + $0x3f0] sm:$0xff]
    %v3241 = vld [vmem:[#allocation10 + $0x3f8] sm:$0xff]
    %v3242 = vlaneseq
    %v3243 = vshrl.u32 %v3242, 7
    %v3244 = vsub.s32 7, %v3243
    %v3245 = vrot.slane %v100, %v3244
    %v3246 = vlaneseq
    %v3247 = vshrl.u32 %v3246, 7
    %v3248 = vsub.s32 7, %v3247
    %v3249 = vrot.slane %v101, %v3248
    %v3378 = vunpack.c.l.b16 %v3114
    %v3379 = vunpack.c.h.b16 %v3114
    %v3380 = vunpack.c.l.b16 %v3115
    %v3381 = vunpack.c.h.b16 %v3115
    %v3382 = vunpack.c.l.b16 %v3116
    %v3383 = vunpack.c.h.b16 %v3116
    %v3384 = vunpack.c.l.b16 %v3117
    %v3385 = vunpack.c.h.b16 %v3117
    %v3386 = vunpack.c.l.b16 %v3118
    %v3387 = vunpack.c.h.b16 %v3118
    %v3388 = vunpack.c.l.b16 %v3119
    %v3389 = vunpack.c.h.b16 %v3119
    %v3390 = vunpack.c.l.b16 %v3120
    %v3391 = vunpack.c.h.b16 %v3120
    %v3392 = vunpack.c.l.b16 %v3121
    %v3393 = vunpack.c.h.b16 %v3121
    %v3394 = vunpack.c.l.b16 %v3122
    %v3395 = vunpack.c.h.b16 %v3122
    %v3396 = vunpack.c.l.b16 %v3123
    %v3397 = vunpack.c.h.b16 %v3123
    %v3398 = vunpack.c.l.b16 %v3124
    %v3399 = vunpack.c.h.b16 %v3124
    %v3400 = vunpack.c.l.b16 %v3125
    %v3401 = vunpack.c.h.b16 %v3125
    %v3402 = vunpack.c.l.b16 %v3126
    %v3403 = vunpack.c.h.b16 %v3126
    %v3404 = vunpack.c.l.b16 %v3127
    %v3405 = vunpack.c.h.b16 %v3127
    %v3406 = vunpack.c.l.b16 %v3128
    %v3407 = vunpack.c.h.b16 %v3128
    %v3408 = vunpack.c.l.b16 %v3129
    %v3409 = vunpack.c.h.b16 %v3129
    %v3410 = vunpack.c.l.b16 %v3130
    %v3411 = vunpack.c.h.b16 %v3130
    %v3412 = vunpack.c.l.b16 %v3131
    %v3413 = vunpack.c.h.b16 %v3131
    %v3414 = vunpack.c.l.b16 %v3132
    %v3415 = vunpack.c.h.b16 %v3132
    %v3416 = vunpack.c.l.b16 %v3133
    %v3417 = vunpack.c.h.b16 %v3133
    %v3418 = vunpack.c.l.b16 %v3134
    %v3419 = vunpack.c.h.b16 %v3134
    %v3420 = vunpack.c.l.b16 %v3135
    %v3421 = vunpack.c.h.b16 %v3135
    %v3422 = vunpack.c.l.b16 %v3136
    %v3423 = vunpack.c.h.b16 %v3136
    %v3424 = vunpack.c.l.b16 %v3137
    %v3425 = vunpack.c.h.b16 %v3137
    %v3426 = vunpack.c.l.b16 %v3138
    %v3427 = vunpack.c.h.b16 %v3138
    %v3428 = vunpack.c.l.b16 %v3139
    %v3429 = vunpack.c.h.b16 %v3139
    %v3430 = vunpack.c.l.b16 %v3140
    %v3431 = vunpack.c.h.b16 %v3140
    %v3432 = vunpack.c.l.b16 %v3141
    %v3433 = vunpack.c.h.b16 %v3141
    %v3434 = vunpack.c.l.b16 %v3142
    %v3435 = vunpack.c.h.b16 %v3142
    %v3436 = vunpack.c.l.b16 %v3143
    %v3437 = vunpack.c.h.b16 %v3143
    %v3438 = vunpack.c.l.b16 %v3144
    %v3439 = vunpack.c.h.b16 %v3144
    %v3440 = vunpack.c.l.b16 %v3145
    %v3441 = vunpack.c.h.b16 %v3145
    %v3442 = vunpack.c.l.b16 %v3146
    %v3443 = vunpack.c.h.b16 %v3146
    %v3444 = vunpack.c.l.b16 %v3147
    %v3445 = vunpack.c.h.b16 %v3147
    %v3446 = vunpack.c.l.b16 %v3148
    %v3447 = vunpack.c.h.b16 %v3148
    %v3448 = vunpack.c.l.b16 %v3149
    %v3449 = vunpack.c.h.b16 %v3149
    %v3450 = vunpack.c.l.b16 %v3150
    %v3451 = vunpack.c.h.b16 %v3150
    %v3452 = vunpack.c.l.b16 %v3151
    %v3453 = vunpack.c.h.b16 %v3151
    %v3454 = vunpack.c.l.b16 %v3152
    %v3455 = vunpack.c.h.b16 %v3152
    %v3456 = vunpack.c.l.b16 %v3153
    %v3457 = vunpack.c.h.b16 %v3153
    %v3458 = vunpack.c.l.b16 %v3154
    %v3459 = vunpack.c.h.b16 %v3154
    %v3460 = vunpack.c.l.b16 %v3155
    %v3461 = vunpack.c.h.b16 %v3155
    %v3462 = vunpack.c.l.b16 %v3156
    %v3463 = vunpack.c.h.b16 %v3156
    %v3464 = vunpack.c.l.b16 %v3157
    %v3465 = vunpack.c.h.b16 %v3157
    %v3466 = vunpack.c.l.b16 %v3158
    %v3467 = vunpack.c.h.b16 %v3158
    %v3468 = vunpack.c.l.b16 %v3159
    %v3469 = vunpack.c.h.b16 %v3159
    %v3470 = vunpack.c.l.b16 %v3160
    %v3471 = vunpack.c.h.b16 %v3160
    %v3472 = vunpack.c.l.b16 %v3161
    %v3473 = vunpack.c.h.b16 %v3161
    %v3474 = vunpack.c.l.b16 %v3162
    %v3475 = vunpack.c.h.b16 %v3162
    %v3476 = vunpack.c.l.b16 %v3163
    %v3477 = vunpack.c.h.b16 %v3163
    %v3478 = vunpack.c.l.b16 %v3164
    %v3479 = vunpack.c.h.b16 %v3164
    %v3480 = vunpack.c.l.b16 %v3165
    %v3481 = vunpack.c.h.b16 %v3165
    %v3482 = vunpack.c.l.b16 %v3166
    %v3483 = vunpack.c.h.b16 %v3166
    %v3484 = vunpack.c.l.b16 %v3167
    %v3485 = vunpack.c.h.b16 %v3167
    %v3486 = vunpack.c.l.b16 %v3168
    %v3487 = vunpack.c.h.b16 %v3168
    %v3488 = vunpack.c.l.b16 %v3169
    %v3489 = vunpack.c.h.b16 %v3169
    %v3490 = vunpack.c.l.b16 %v3170
    %v3491 = vunpack.c.h.b16 %v3170
    %v3492 = vunpack.c.l.b16 %v3171
    %v3493 = vunpack.c.h.b16 %v3171
    %v3494 = vunpack.c.l.b16 %v3172
    %v3495 = vunpack.c.h.b16 %v3172
    %v3496 = vunpack.c.l.b16 %v3173
    %v3497 = vunpack.c.h.b16 %v3173
    %v3498 = vunpack.c.l.b16 %v3174
    %v3499 = vunpack.c.h.b16 %v3174
    %v3500 = vunpack.c.l.b16 %v3175
    %v3501 = vunpack.c.h.b16 %v3175
    %v3502 = vunpack.c.l.b16 %v3176
    %v3503 = vunpack.c.h.b16 %v3176
    %v3504 = vunpack.c.l.b16 %v3177
    %v3505 = vunpack.c.h.b16 %v3177
    %v3506 = vunpack.c.l.b16 %v3178
    %v3507 = vunpack.c.h.b16 %v3178
    %v3508 = vunpack.c.l.b16 %v3179
    %v3509 = vunpack.c.h.b16 %v3179
    %v3510 = vunpack.c.l.b16 %v3180
    %v3511 = vunpack.c.h.b16 %v3180
    %v3512 = vunpack.c.l.b16 %v3181
    %v3513 = vunpack.c.h.b16 %v3181
    %v3514 = vunpack.c.l.b16 %v3182
    %v3515 = vunpack.c.h.b16 %v3182
    %v3516 = vunpack.c.l.b16 %v3183
    %v3517 = vunpack.c.h.b16 %v3183
    %v3518 = vunpack.c.l.b16 %v3184
    %v3519 = vunpack.c.h.b16 %v3184
    %v3520 = vunpack.c.l.b16 %v3185
    %v3521 = vunpack.c.h.b16 %v3185
    %v3522 = vunpack.c.l.b16 %v3186
    %v3523 = vunpack.c.h.b16 %v3186
    %v3524 = vunpack.c.l.b16 %v3187
    %v3525 = vunpack.c.h.b16 %v3187
    %v3526 = vunpack.c.l.b16 %v3188
    %v3527 = vunpack.c.h.b16 %v3188
    %v3528 = vunpack.c.l.b16 %v3189
    %v3529 = vunpack.c.h.b16 %v3189
    %v3530 = vunpack.c.l.b16 %v3190
    %v3531 = vunpack.c.h.b16 %v3190
    %v3532 = vunpack.c.l.b16 %v3191
    %v3533 = vunpack.c.h.b16 %v3191
    %v3534 = vunpack.c.l.b16 %v3192
    %v3535 = vunpack.c.h.b16 %v3192
    %v3536 = vunpack.c.l.b16 %v3193
    %v3537 = vunpack.c.h.b16 %v3193
    %v3538 = vunpack.c.l.b16 %v3194
    %v3539 = vunpack.c.h.b16 %v3194
    %v3540 = vunpack.c.l.b16 %v3195
    %v3541 = vunpack.c.h.b16 %v3195
    %v3542 = vunpack.c.l.b16 %v3196
    %v3543 = vunpack.c.h.b16 %v3196
    %v3544 = vunpack.c.l.b16 %v3197
    %v3545 = vunpack.c.h.b16 %v3197
    %v3546 = vunpack.c.l.b16 %v3198
    %v3547 = vunpack.c.h.b16 %v3198
    %v3548 = vunpack.c.l.b16 %v3199
    %v3549 = vunpack.c.h.b16 %v3199
    %v3550 = vunpack.c.l.b16 %v3200
    %v3551 = vunpack.c.h.b16 %v3200
    %v3552 = vunpack.c.l.b16 %v3201
    %v3553 = vunpack.c.h.b16 %v3201
    %v3554 = vunpack.c.l.b16 %v3202
    %v3555 = vunpack.c.h.b16 %v3202
    %v3556 = vunpack.c.l.b16 %v3203
    %v3557 = vunpack.c.h.b16 %v3203
    %v3558 = vunpack.c.l.b16 %v3204
    %v3559 = vunpack.c.h.b16 %v3204
    %v3560 = vunpack.c.l.b16 %v3205
    %v3561 = vunpack.c.h.b16 %v3205
    %v3562 = vunpack.c.l.b16 %v3206
    %v3563 = vunpack.c.h.b16 %v3206
    %v3564 = vunpack.c.l.b16 %v3207
    %v3565 = vunpack.c.h.b16 %v3207
    %v3566 = vunpack.c.l.b16 %v3208
    %v3567 = vunpack.c.h.b16 %v3208
    %v3568 = vunpack.c.l.b16 %v3209
    %v3569 = vunpack.c.h.b16 %v3209
    %v3570 = vunpack.c.l.b16 %v3210
    %v3571 = vunpack.c.h.b16 %v3210
    %v3572 = vunpack.c.l.b16 %v3211
    %v3573 = vunpack.c.h.b16 %v3211
    %v3574 = vunpack.c.l.b16 %v3212
    %v3575 = vunpack.c.h.b16 %v3212
    %v3576 = vunpack.c.l.b16 %v3213
    %v3577 = vunpack.c.h.b16 %v3213
    %v3578 = vunpack.c.l.b16 %v3214
    %v3579 = vunpack.c.h.b16 %v3214
    %v3580 = vunpack.c.l.b16 %v3215
    %v3581 = vunpack.c.h.b16 %v3215
    %v3582 = vunpack.c.l.b16 %v3216
    %v3583 = vunpack.c.h.b16 %v3216
    %v3584 = vunpack.c.l.b16 %v3217
    %v3585 = vunpack.c.h.b16 %v3217
    %v3586 = vunpack.c.l.b16 %v3218
    %v3587 = vunpack.c.h.b16 %v3218
    %v3588 = vunpack.c.l.b16 %v3219
    %v3589 = vunpack.c.h.b16 %v3219
    %v3590 = vunpack.c.l.b16 %v3220
    %v3591 = vunpack.c.h.b16 %v3220
    %v3592 = vunpack.c.l.b16 %v3221
    %v3593 = vunpack.c.h.b16 %v3221
    %v3594 = vunpack.c.l.b16 %v3222
    %v3595 = vunpack.c.h.b16 %v3222
    %v3596 = vunpack.c.l.b16 %v3223
    %v3597 = vunpack.c.h.b16 %v3223
    %v3598 = vunpack.c.l.b16 %v3224
    %v3599 = vunpack.c.h.b16 %v3224
    %v3600 = vunpack.c.l.b16 %v3225
    %v3601 = vunpack.c.h.b16 %v3225
    %v3602 = vunpack.c.l.b16 %v3226
    %v3603 = vunpack.c.h.b16 %v3226
    %v3604 = vunpack.c.l.b16 %v3227
    %v3605 = vunpack.c.h.b16 %v3227
    %v3606 = vunpack.c.l.b16 %v3228
    %v3607 = vunpack.c.h.b16 %v3228
    %v3608 = vunpack.c.l.b16 %v3229
    %v3609 = vunpack.c.h.b16 %v3229
    %v3610 = vunpack.c.l.b16 %v3230
    %v3611 = vunpack.c.h.b16 %v3230
    %v3612 = vunpack.c.l.b16 %v3231
    %v3613 = vunpack.c.h.b16 %v3231
    %v3614 = vunpack.c.l.b16 %v3232
    %v3615 = vunpack.c.h.b16 %v3232
    %v3616 = vunpack.c.l.b16 %v3233
    %v3617 = vunpack.c.h.b16 %v3233
    %v3618 = vunpack.c.l.b16 %v3234
    %v3619 = vunpack.c.h.b16 %v3234
    %v3620 = vunpack.c.l.b16 %v3235
    %v3621 = vunpack.c.h.b16 %v3235
    %v3622 = vunpack.c.l.b16 %v3236
    %v3623 = vunpack.c.h.b16 %v3236
    %v3624 = vunpack.c.l.b16 %v3237
    %v3625 = vunpack.c.h.b16 %v3237
    %v3626 = vunpack.c.l.b16 %v3238
    %v3627 = vunpack.c.h.b16 %v3238
    %v3628 = vunpack.c.l.b16 %v3239
    %v3629 = vunpack.c.h.b16 %v3239
    %v3630 = vunpack.c.l.b16 %v3240
    %v3631 = vunpack.c.h.b16 %v3240
    %v3632 = vunpack.c.l.b16 %v3241
    %v3633 = vunpack.c.h.b16 %v3241
    %v3634 = vpack.c.b16 %v3380, %v3378
    %v3635 = vpack.c.b16 %v3381, %v3379
    %v3636 = vpack.c.b16 %v3384, %v3382
    %v3637 = vpack.c.b16 %v3385, %v3383
    %v3638 = vpack.c.b16 %v3388, %v3386
    %v3639 = vpack.c.b16 %v3389, %v3387
    %v3640 = vpack.c.b16 %v3392, %v3390
    %v3641 = vpack.c.b16 %v3393, %v3391
    %v3642 = vpack.c.b16 %v3396, %v3394
    %v3643 = vpack.c.b16 %v3397, %v3395
    %v3644 = vpack.c.b16 %v3400, %v3398
    %v3645 = vpack.c.b16 %v3401, %v3399
    %v3646 = vpack.c.b16 %v3404, %v3402
    %v3647 = vpack.c.b16 %v3405, %v3403
    %v3648 = vpack.c.b16 %v3408, %v3406
    %v3649 = vpack.c.b16 %v3409, %v3407
    %v3650 = vpack.c.b16 %v3412, %v3410
    %v3651 = vpack.c.b16 %v3413, %v3411
    %v3652 = vpack.c.b16 %v3416, %v3414
    %v3653 = vpack.c.b16 %v3417, %v3415
    %v3654 = vpack.c.b16 %v3420, %v3418
    %v3655 = vpack.c.b16 %v3421, %v3419
    %v3656 = vpack.c.b16 %v3424, %v3422
    %v3657 = vpack.c.b16 %v3425, %v3423
    %v3658 = vpack.c.b16 %v3428, %v3426
    %v3659 = vpack.c.b16 %v3429, %v3427
    %v3660 = vpack.c.b16 %v3432, %v3430
    %v3661 = vpack.c.b16 %v3433, %v3431
    %v3662 = vpack.c.b16 %v3436, %v3434
    %v3663 = vpack.c.b16 %v3437, %v3435
    %v3664 = vpack.c.b16 %v3440, %v3438
    %v3665 = vpack.c.b16 %v3441, %v3439
    %v3666 = vpack.c.b16 %v3444, %v3442
    %v3667 = vpack.c.b16 %v3445, %v3443
    %v3668 = vpack.c.b16 %v3448, %v3446
    %v3669 = vpack.c.b16 %v3449, %v3447
    %v3670 = vpack.c.b16 %v3452, %v3450
    %v3671 = vpack.c.b16 %v3453, %v3451
    %v3672 = vpack.c.b16 %v3456, %v3454
    %v3673 = vpack.c.b16 %v3457, %v3455
    %v3674 = vpack.c.b16 %v3460, %v3458
    %v3675 = vpack.c.b16 %v3461, %v3459
    %v3676 = vpack.c.b16 %v3464, %v3462
    %v3677 = vpack.c.b16 %v3465, %v3463
    %v3678 = vpack.c.b16 %v3468, %v3466
    %v3679 = vpack.c.b16 %v3469, %v3467
    %v3680 = vpack.c.b16 %v3472, %v3470
    %v3681 = vpack.c.b16 %v3473, %v3471
    %v3682 = vpack.c.b16 %v3476, %v3474
    %v3683 = vpack.c.b16 %v3477, %v3475
    %v3684 = vpack.c.b16 %v3480, %v3478
    %v3685 = vpack.c.b16 %v3481, %v3479
    %v3686 = vpack.c.b16 %v3484, %v3482
    %v3687 = vpack.c.b16 %v3485, %v3483
    %v3688 = vpack.c.b16 %v3488, %v3486
    %v3689 = vpack.c.b16 %v3489, %v3487
    %v3690 = vpack.c.b16 %v3492, %v3490
    %v3691 = vpack.c.b16 %v3493, %v3491
    %v3692 = vpack.c.b16 %v3496, %v3494
    %v3693 = vpack.c.b16 %v3497, %v3495
    %v3694 = vpack.c.b16 %v3500, %v3498
    %v3695 = vpack.c.b16 %v3501, %v3499
    %v3696 = vpack.c.b16 %v3504, %v3502
    %v3697 = vpack.c.b16 %v3505, %v3503
    %v3698 = vpack.c.b16 %v3508, %v3506
    %v3699 = vpack.c.b16 %v3509, %v3507
    %v3700 = vpack.c.b16 %v3512, %v3510
    %v3701 = vpack.c.b16 %v3513, %v3511
    %v3702 = vpack.c.b16 %v3516, %v3514
    %v3703 = vpack.c.b16 %v3517, %v3515
    %v3704 = vpack.c.b16 %v3520, %v3518
    %v3705 = vpack.c.b16 %v3521, %v3519
    %v3706 = vpack.c.b16 %v3524, %v3522
    %v3707 = vpack.c.b16 %v3525, %v3523
    %v3708 = vpack.c.b16 %v3528, %v3526
    %v3709 = vpack.c.b16 %v3529, %v3527
    %v3710 = vpack.c.b16 %v3532, %v3530
    %v3711 = vpack.c.b16 %v3533, %v3531
    %v3712 = vpack.c.b16 %v3536, %v3534
    %v3713 = vpack.c.b16 %v3537, %v3535
    %v3714 = vpack.c.b16 %v3540, %v3538
    %v3715 = vpack.c.b16 %v3541, %v3539
    %v3716 = vpack.c.b16 %v3544, %v3542
    %v3717 = vpack.c.b16 %v3545, %v3543
    %v3718 = vpack.c.b16 %v3548, %v3546
    %v3719 = vpack.c.b16 %v3549, %v3547
    %v3720 = vpack.c.b16 %v3552, %v3550
    %v3721 = vpack.c.b16 %v3553, %v3551
    %v3722 = vpack.c.b16 %v3556, %v3554
    %v3723 = vpack.c.b16 %v3557, %v3555
    %v3724 = vpack.c.b16 %v3560, %v3558
    %v3725 = vpack.c.b16 %v3561, %v3559
    %v3726 = vpack.c.b16 %v3564, %v3562
    %v3727 = vpack.c.b16 %v3565, %v3563
    %v3728 = vpack.c.b16 %v3568, %v3566
    %v3729 = vpack.c.b16 %v3569, %v3567
    %v3730 = vpack.c.b16 %v3572, %v3570
    %v3731 = vpack.c.b16 %v3573, %v3571
    %v3732 = vpack.c.b16 %v3576, %v3574
    %v3733 = vpack.c.b16 %v3577, %v3575
    %v3734 = vpack.c.b16 %v3580, %v3578
    %v3735 = vpack.c.b16 %v3581, %v3579
    %v3736 = vpack.c.b16 %v3584, %v3582
    %v3737 = vpack.c.b16 %v3585, %v3583
    %v3738 = vpack.c.b16 %v3588, %v3586
    %v3739 = vpack.c.b16 %v3589, %v3587
    %v3740 = vpack.c.b16 %v3592, %v3590
    %v3741 = vpack.c.b16 %v3593, %v3591
    %v3742 = vpack.c.b16 %v3596, %v3594
    %v3743 = vpack.c.b16 %v3597, %v3595
    %v3744 = vpack.c.b16 %v3600, %v3598
    %v3745 = vpack.c.b16 %v3601, %v3599
    %v3746 = vpack.c.b16 %v3604, %v3602
    %v3747 = vpack.c.b16 %v3605, %v3603
    %v3748 = vpack.c.b16 %v3608, %v3606
    %v3749 = vpack.c.b16 %v3609, %v3607
    %v3750 = vpack.c.b16 %v3612, %v3610
    %v3751 = vpack.c.b16 %v3613, %v3611
    %v3752 = vpack.c.b16 %v3616, %v3614
    %v3753 = vpack.c.b16 %v3617, %v3615
    %v3754 = vpack.c.b16 %v3620, %v3618
    %v3755 = vpack.c.b16 %v3621, %v3619
    %v3756 = vpack.c.b16 %v3624, %v3622
    %v3757 = vpack.c.b16 %v3625, %v3623
    %v3758 = vpack.c.b16 %v3628, %v3626
    %v3759 = vpack.c.b16 %v3629, %v3627
    %v3760 = vpack.c.b16 %v3632, %v3630
    %v3761 = vpack.c.b16 %v3633, %v3631
    %3890 = vmatprep.subr.bf16.mxu0 %v3635
    %3891 = vmatpush1.bf16.msra.mxu0 %v3634
    %3892 = vmatprep.subr.bf16.mxu0 %v3637
    %3893 = vmatpush1.bf16.msra.mxu0 %v3636
    %3894 = vmatprep.subr.bf16.mxu0 %v3639
    %3895 = vmatpush1.bf16.msra.mxu0 %v3638
    %3896 = vmatprep.subr.bf16.mxu0 %v3641
    %3897 = vmatpush1.bf16.msra.mxu0 %v3640
    %3898 = vmatprep.subr.bf16.mxu0 %v3643
    %3899 = vmatpush1.bf16.msra.mxu0 %v3642
    %3900 = vmatprep.subr.bf16.mxu0 %v3645
    %3901 = vmatpush1.bf16.msra.mxu0 %v3644
    %3902 = vmatprep.subr.bf16.mxu0 %v3647
    %3903 = vmatpush1.bf16.msra.mxu0 %v3646
    %3904 = vmatprep.subr.bf16.mxu0 %v3649
    %3905 = vmatpush1.bf16.msra.mxu0 %v3648
    %3906 = vmatprep.subr.bf16.mxu0 %v3651
    %3907 = vmatpush1.bf16.msra.mxu0 %v3650
    %3908 = vmatprep.subr.bf16.mxu0 %v3653
    %3909 = vmatpush1.bf16.msra.mxu0 %v3652
    %3910 = vmatprep.subr.bf16.mxu0 %v3655
    %3911 = vmatpush1.bf16.msra.mxu0 %v3654
    %3912 = vmatprep.subr.bf16.mxu0 %v3657
    %3913 = vmatpush1.bf16.msra.mxu0 %v3656
    %3914 = vmatprep.subr.bf16.mxu0 %v3659
    %3915 = vmatpush1.bf16.msra.mxu0 %v3658
    %3916 = vmatprep.subr.bf16.mxu0 %v3661
    %3917 = vmatpush1.bf16.msra.mxu0 %v3660
    %3918 = vmatprep.subr.bf16.mxu0 %v3663
    %3919 = vmatpush1.bf16.msra.mxu0 %v3662
    %3920 = vmatprep.subr.bf16.mxu0 %v3665
    %3921 = vmatpush1.bf16.msra.mxu0 %v3664
    %3922 = vmatprep.mubr.bf16.mxu0 %v3107
    %3923 = vmatmul.mubr.bf16.gmra.mrb[0].mxu0 %v3106
    %v3924 = vpop.f32.mrb[0].mxu0
    %v3925 = vadd.f32 %v3245, %v3924
    %v3926 = vpop.f32.mrb[0].mxu0
    %v3927 = vadd.f32 %v3249, %v3926
    %v3928 = vpop.f32.mrb[0].mxu0
    %v3929 = vadd.f32 %v3245, %v3928
    %v3930 = vpop.f32.mrb[0].mxu0
    %v3931 = vadd.f32 %v3249, %v3930
    %3932 = vdwg.mxu0
    %3933 = vmatprep.subr.bf16.mxu0 %v3667
    %3934 = vmatpush1.bf16.msra.mxu0 %v3666
    %3935 = vmatprep.subr.bf16.mxu0 %v3669
    %3936 = vmatpush1.bf16.msra.mxu0 %v3668
    %3937 = vmatprep.subr.bf16.mxu0 %v3671
    %3938 = vmatpush1.bf16.msra.mxu0 %v3670
    %3939 = vmatprep.subr.bf16.mxu0 %v3673
    %3940 = vmatpush1.bf16.msra.mxu0 %v3672
    %3941 = vmatprep.subr.bf16.mxu0 %v3675
    %3942 = vmatpush1.bf16.msra.mxu0 %v3674
    %3943 = vmatprep.subr.bf16.mxu0 %v3677
    %3944 = vmatpush1.bf16.msra.mxu0 %v3676
    %3945 = vmatprep.subr.bf16.mxu0 %v3679
    %3946 = vmatpush1.bf16.msra.mxu0 %v3678
    %3947 = vmatprep.subr.bf16.mxu0 %v3681
    %3948 = vmatpush1.bf16.msra.mxu0 %v3680
    %3949 = vmatprep.subr.bf16.mxu0 %v3683
    %3950 = vmatpush1.bf16.msra.mxu0 %v3682
    %3951 = vmatprep.subr.bf16.mxu0 %v3685
    %3952 = vmatpush1.bf16.msra.mxu0 %v3684
    %3953 = vmatprep.subr.bf16.mxu0 %v3687
    %3954 = vmatpush1.bf16.msra.mxu0 %v3686
    %3955 = vmatprep.subr.bf16.mxu0 %v3689
    %3956 = vmatpush1.bf16.msra.mxu0 %v3688
    %3957 = vmatprep.subr.bf16.mxu0 %v3691
    %3958 = vmatpush1.bf16.msra.mxu0 %v3690
    %3959 = vmatprep.subr.bf16.mxu0 %v3693
    %3960 = vmatpush1.bf16.msra.mxu0 %v3692
    %3961 = vmatprep.subr.bf16.mxu0 %v3695
    %3962 = vmatpush1.bf16.msra.mxu0 %v3694
    %3963 = vmatprep.subr.bf16.mxu0 %v3697
    %3964 = vmatpush1.bf16.msra.mxu0 %v3696
    %3965 = vmatprep.mubr.bf16.mxu0 %v3109
    %3966 = vmatmul.mubr.bf16.gmra.mrb[0].mxu0 %v3108
    %v3967 = vpop.f32.mrb[0].mxu0
    %v3968 = vadd.f32 %v3925, %v3967
    %v3969 = vpop.f32.mrb[0].mxu0
    %v3970 = vadd.f32 %v3927, %v3969
    %v3971 = vpop.f32.mrb[0].mxu0
    %v3972 = vadd.f32 %v3929, %v3971
    %v3973 = vpop.f32.mrb[0].mxu0
    %v3974 = vadd.f32 %v3931, %v3973
    %3975 = vdwg.mxu0
    %3976 = vmatprep.subr.bf16.mxu0 %v3699
    %3977 = vmatpush1.bf16.msra.mxu0 %v3698
    %3978 = vmatprep.subr.bf16.mxu0 %v3701
    %3979 = vmatpush1.bf16.msra.mxu0 %v3700
    %3980 = vmatprep.subr.bf16.mxu0 %v3703
    %3981 = vmatpush1.bf16.msra.mxu0 %v3702
    %3982 = vmatprep.subr.bf16.mxu0 %v3705
    %3983 = vmatpush1.bf16.msra.mxu0 %v3704
    %3984 = vmatprep.subr.bf16.mxu0 %v3707
    %3985 = vmatpush1.bf16.msra.mxu0 %v3706
    %3986 = vmatprep.subr.bf16.mxu0 %v3709
    %3987 = vmatpush1.bf16.msra.mxu0 %v3708
    %3988 = vmatprep.subr.bf16.mxu0 %v3711
    %3989 = vmatpush1.bf16.msra.mxu0 %v3710
    %3990 = vmatprep.subr.bf16.mxu0 %v3713
    %3991 = vmatpush1.bf16.msra.mxu0 %v3712
    %3992 = vmatprep.subr.bf16.mxu0 %v3715
    %3993 = vmatpush1.bf16.msra.mxu0 %v3714
    %3994 = vmatprep.subr.bf16.mxu0 %v3717
    %3995 = vmatpush1.bf16.msra.mxu0 %v3716
    %3996 = vmatprep.subr.bf16.mxu0 %v3719
    %3997 = vmatpush1.bf16.msra.mxu0 %v3718
    %3998 = vmatprep.subr.bf16.mxu0 %v3721
    %3999 = vmatpush1.bf16.msra.mxu0 %v3720
    %4000 = vmatprep.subr.bf16.mxu0 %v3723
    %4001 = vmatpush1.bf16.msra.mxu0 %v3722
    %4002 = vmatprep.subr.bf16.mxu0 %v3725
    %4003 = vmatpush1.bf16.msra.mxu0 %v3724
    %4004 = vmatprep.subr.bf16.mxu0 %v3727
    %4005 = vmatpush1.bf16.msra.mxu0 %v3726
    %4006 = vmatprep.subr.bf16.mxu0 %v3729
    %4007 = vmatpush1.bf16.msra.mxu0 %v3728
    %4008 = vmatprep.mubr.bf16.mxu0 %v3111
    %4009 = vmatmul.mubr.bf16.gmra.mrb[0].mxu0 %v3110
    %v4010 = vpop.f32.mrb[0].mxu0
    %v4011 = vadd.f32 %v3968, %v4010
    %v4012 = vpop.f32.mrb[0].mxu0
    %v4013 = vadd.f32 %v3970, %v4012
    %v4014 = vpop.f32.mrb[0].mxu0
    %v4015 = vadd.f32 %v3972, %v4014
    %v4016 = vpop.f32.mrb[0].mxu0
    %v4017 = vadd.f32 %v3974, %v4016
    %4018 = vdwg.mxu0
    %4019 = vmatprep.subr.bf16.mxu0 %v3731
    %4020 = vmatpush1.bf16.msra.mxu0 %v3730
    %4021 = vmatprep.subr.bf16.mxu0 %v3733
    %4022 = vmatpush1.bf16.msra.mxu0 %v3732
    %4023 = vmatprep.subr.bf16.mxu0 %v3735
    %4024 = vmatpush1.bf16.msra.mxu0 %v3734
    %4025 = vmatprep.subr.bf16.mxu0 %v3737
    %4026 = vmatpush1.bf16.msra.mxu0 %v3736
    %4027 = vmatprep.subr.bf16.mxu0 %v3739
    %4028 = vmatpush1.bf16.msra.mxu0 %v3738
    %4029 = vmatprep.subr.bf16.mxu0 %v3741
    %4030 = vmatpush1.bf16.msra.mxu0 %v3740
    %4031 = vmatprep.subr.bf16.mxu0 %v3743
    %4032 = vmatpush1.bf16.msra.mxu0 %v3742
    %4033 = vmatprep.subr.bf16.mxu0 %v3745
    %4034 = vmatpush1.bf16.msra.mxu0 %v3744
    %4035 = vmatprep.subr.bf16.mxu0 %v3747
    %4036 = vmatpush1.bf16.msra.mxu0 %v3746
    %4037 = vmatprep.subr.bf16.mxu0 %v3749
    %4038 = vmatpush1.bf16.msra.mxu0 %v3748
    %4039 = vmatprep.subr.bf16.mxu0 %v3751
    %4040 = vmatpush1.bf16.msra.mxu0 %v3750
    %4041 = vmatprep.subr.bf16.mxu0 %v3753
    %4042 = vmatpush1.bf16.msra.mxu0 %v3752
    %4043 = vmatprep.subr.bf16.mxu0 %v3755
    %4044 = vmatpush1.bf16.msra.mxu0 %v3754
    %4045 = vmatprep.subr.bf16.mxu0 %v3757
    %4046 = vmatpush1.bf16.msra.mxu0 %v3756
    %4047 = vmatprep.subr.bf16.mxu0 %v3759
    %4048 = vmatpush1.bf16.msra.mxu0 %v3758
    %4049 = vmatprep.subr.bf16.mxu0 %v3761
    %4050 = vmatpush1.bf16.msra.mxu0 %v3760
    %4051 = vmatprep.mubr.bf16.mxu0 %v3113
    %4052 = vmatmul.mubr.bf16.gmra.mrb[0].mxu0 %v3112
    %v4053 = vpop.f32.mrb[0].mxu0
    %v4054 = vadd.f32 %v4011, %v4053
    %v4055 = vpop.f32.mrb[0].mxu0
    %v4056 = vadd.f32 %v4013, %v4055
    %v4057 = vpop.f32.mrb[0].mxu0
    %v4058 = vadd.f32 %v4015, %v4057
    %v4059 = vpop.f32.mrb[0].mxu0
    %v4060 = vadd.f32 %v4017, %v4059
    %4061 = vdwg.mxu0
    %v4062 = vadd.f32 %v1928, %v4054
    %v4063 = vadd.f32 %v1929, %v4056
    %v4064 = vadd.f32 %v1930, %v4058
    %v4065 = vadd.f32 %v1931, %v4060
    %v4066 = vadd.f32 %v4062, %v4063
    %4067 = vadd.xlane.f32.xlu0 %v4066
    %v4068 = vpop.xlane.xlu0 %4067
    %v4069 = vadd.f32 %v4064, %v4065
    %4070 = vadd.xlane.f32.xlu0 %v4069
    %v4071 = vpop.xlane.xlu0 %4070
    %v4072 = vmul.f32 %v4068, %v116
    %v4073 = vmul.f32 %v4071, %v116
    %v4074 = vsub.f32 %v4062, %v4072
    %v4075 = vsub.f32 %v4063, %v4072
    %v4076 = vsub.f32 %v4064, %v4073
    %v4077 = vsub.f32 %v4065, %v4073
    %v4078 = vmul.f32 %v4074, %v4074
    %v4079 = vmul.f32 %v4075, %v4075
    %v4080 = vmul.f32 %v4076, %v4076
    %v4081 = vmul.f32 %v4077, %v4077
    %v4082 = vadd.f32 %v4078, %v4079
    %4083 = vadd.xlane.f32.xlu0 %v4082
    %v4084 = vpop.xlane.xlu0 %4083
    %v4085 = vadd.f32 %v4080, %v4081
    %4086 = vadd.xlane.f32.xlu0 %v4085
    %v4087 = vpop.xlane.xlu0 %4086
    %v4088 = vmul.f32 %v4084, %v116
    %v4089 = vmul.f32 %v4087, %v116
    %v4090 = vadd.f32 %v4088, 1e-05
    %v4091 = vadd.f32 %v4089, 1e-05
    %v4092 = vrsqrt.pop %v4090
    %v4093 = vrsqrt.pop %v4091
    %v4094 = vmul.f32 %v4074, %v4092
    %v4095 = vmul.f32 %v4075, %v4092
    %v4096 = vmul.f32 %v4076, %v4093
    %v4097 = vmul.f32 %v4077, %v4093
    %v4098 = vlaneseq
    %v4099 = vshrl.u32 %v4098, 7
    %v4100 = vsub.s32 4, %v4099
    %v4101 = vrot.slane %v100, %v4100
    %v4102 = vlaneseq
    %v4103 = vshrl.u32 %v4102, 7
    %v4104 = vsub.s32 4, %v4103
    %v4105 = vrot.slane %v101, %v4104
    %v4106 = vmul.f32 %v4094, %v4101
    %v4107 = vmul.f32 %v4095, %v4105
    %v4108 = vmul.f32 %v4096, %v4101
    %v4109 = vmul.f32 %v4097, %v4105
    %v4110 = vlaneseq
    %v4111 = vshrl.u32 %v4110, 7
    %v4112 = vsub.s32 5, %v4111
    %v4113 = vrot.slane %v100, %v4112
    %v4114 = vlaneseq
    %v4115 = vshrl.u32 %v4114, 7
    %v4116 = vsub.s32 5, %v4115
    %v4117 = vrot.slane %v101, %v4116
    %v4118 = vadd.f32 %v4106, %v4113
    %v4119 = vadd.f32 %v4107, %v4117
    %v4120 = vadd.f32 %v4108, %v4113
    %v4121 = vadd.f32 %v4109, %v4117
    %4122 = vst [vmem:[#allocation11] sm:$0xff] %v4118
    %4123 = vst [vmem:[#allocation11 + $0x8] sm:$0xff] %v4119
    %4124 = vst [vmem:[#allocation11 + $0x10] sm:$0xff] %v4120
    %4125 = vst [vmem:[#allocation11 + $0x18] sm:$0xff] %v4121
    // Predicated region
    $region46: #{tpu_custom_call.1} parent=1 // pred_check
      _
    $region47: #{tpu_custom_call.1} parent=1 // pred_check_branch
      %4127 = sbr.rel (0) target = $region49
    $region48: #{tpu_custom_call.1} parent=1 // pred_region
      %s4129 = ssub.s32 512, 512
      %4130 = vsyncadd [#allocation4], %s4129
      %s4131 = sshll.u32 [#allocation11], 4
      %s4132 = int_to_ptr.vmem [resolvable:$true] %s4131
      %4137 = dma.vmem_to_hbm [thread:$0]  %s4132, 512, %s6, [#allocation4], 256, 256, 16
    $region49: #{tpu_custom_call.1} parent=1 // pred_fallthru
      _
    // Predicated region
    $region50: #{tpu_custom_call.1} parent=1 // pred_check
      _
    $region51: #{tpu_custom_call.1} parent=1 // pred_check_branch
      %4139 = sbr.rel (0) target = $region53
    $region52: #{tpu_custom_call.1} parent=1 // pred_region
      %s4141 = ssub.s32 32, 32
      %4142 = vsyncadd [#allocation13], %s4141
      %s4144 = sshll.u32 [#allocation12], 4
      %s4145 = int_to_ptr.vmem [resolvable:$true] %s4144
      %4147 = dma.vmem_to_hbm [thread:$0]  %s4145, 32, %s7, [#allocation13]
    $region53: #{tpu_custom_call.1} parent=1 // pred_fallthru
      _
    // Predicated region
    $region54: #{tpu_custom_call.1} parent=1 // pred_check
      _
    $region55: #{tpu_custom_call.1} parent=1 // pred_check_branch
      %4149 = sbr.rel (0) target = $region57
    $region56: #{tpu_custom_call.1} parent=1 // pred_region
      %4150 = dma.done [#allocation4], 512
    $region57: #{tpu_custom_call.1} parent=1 // pred_fallthru
      _
    // Predicated region
    $region58: #{tpu_custom_call.1} parent=1 // pred_check
      _
    $region59: #{tpu_custom_call.1} parent=1 // pred_check_branch
      %4152 = sbr.rel (0) target = $region61
    $region60: #{tpu_custom_call.1} parent=1 // pred_region
      %4153 = dma.done [#allocation13], 32
    $region61: #{tpu_custom_call.1} parent=1 // pred_fallthru
      _
    %4154 = vsyncpa [#allocation3], 1
    %4155 = vsyncpa [#allocation6], 1
    %4156 = vsyncpa [#allocation9], 1
    %4157 = vsyncpa [#allocation4], 1
    %4158 = vsyncpa [#allocation13], 1

</llo_original>
